<compile_context>
chip_gen: v5e
topology: v5e:2x2
jax: 0.10.0
libtpu: 0.0.40
codegen_flags: <defaults>
</compile_context>

<pallas_src>
import functools
import math

import jax
import jax.numpy as jnp
from jax import lax
from jax.experimental import pallas as pl
from jax.experimental.pallas import tpu as pltpu

RMS_EPS = 1.1920928955078125e-07  # torch.finfo(torch.float32).eps


def _rmsnorm_f32(x, w, eps):
    # x, w are f32; rsqrt lowers to the EUP.
    return x * lax.rsqrt(jnp.mean(x * x, axis=-1, keepdims=True) + eps) * w


def attn_block_kernel(
    x_ref,      # (1, S, H)   full sequence of x (compute dtype)
    wq_ref,     # (H, H)      fused (qkv ∘ in_proj) q weight, (in,out); scale folded
    bq_ref,     # (1, H)      f32, scale folded
    wk_ref,     # (H, H)
    bk_ref,     # (1, H)
    wv_ref,     # (H, H)
    bv_ref,     # (1, H)
    wout_ref,   # (H, H)      mha out_proj weight, (in, out)
    bout_ref,   # (1, H)      f32
    ln1_ref,    # (1, H)      f32
    ln2_ref,    # (1, H)      f32
    w1_ref,     # (H, Dff)    ff[0] weight, (in, out)
    b1_ref,     # (1, Dff)    f32
    w2_ref,     # (Dff, H)    ff[2] weight, (in, out)
    b2_ref,     # (1, H)      f32
    o_ref,      # (1, TQ, H)
    k_scr,      # (S, H) cdt  per-batch K cache
    v_scr,      # (S, H) cdt  per-batch V cache
    a_scr,      # (TQ, H) cdt concatenated per-head attention outputs
    *,
    nhead,
    eps,
    softmax_dtype,
):
    cdt = x_ref.dtype                         # MXU input dtype (f32 or bf16)
    i = pl.program_id(1)
    TQ = o_ref.shape[1]
    S, H = k_scr.shape
    d = H // nhead

    # ---- K/V projection: once per batch, cached in VMEM scratch (compute dtype).
    # Two separate dots; cast to compute dtype immediately (no f32 (S,2H) tensor).
    @pl.when(i == 0)
    def _():
        xs = x_ref[0]                                                       # (S, H)
        k = jnp.dot(xs, wk_ref[...], preferred_element_type=jnp.float32) + bk_ref[0]
        k_scr[...] = k.astype(k_scr.dtype)
        v = jnp.dot(xs, wv_ref[...], preferred_element_type=jnp.float32) + bv_ref[0]
        v_scr[...] = v.astype(v_scr.dtype)

    # ---- query rows of this step, sliced from the resident full-sequence block.
    start = pl.multiple_of(i * TQ, TQ)
    xq = x_ref[0, pl.ds(start, TQ), :]                                      # (TQ, H)
    qp = jnp.dot(xq, wq_ref[...], preferred_element_type=jnp.float32) + bq_ref[0]

    # ---- attention per head; head outputs land in a (TQ, H) scratch so out_proj is
    # a single (TQ,H)x(H,H) MXU matmul after the loop.  Head slices are lane-aligned
    # when head_dim % 128 == 0 (the common case); smaller d uses masked accesses.
    for h in range(nhead):
        sl = slice(h * d, (h + 1) * d)
        qh = qp[:, sl].astype(cdt)                                          # (TQ, d)
        kh = k_scr[:, sl]                                                   # (S, d)
        vh = v_scr[:, sl]                                                   # (S, d)
        # contract last dims directly (no .T -> no K relayout)
        s = lax.dot_general(qh, kh, (((1,), (1,)), ((), ())),
                            preferred_element_type=jnp.float32)             # (TQ, S)
        s = s - jnp.max(s, axis=-1, keepdims=True)
        p = jnp.exp(s.astype(softmax_dtype))        # bf16 exp when compute dtype is bf16
        l = jnp.sum(p.astype(jnp.float32), axis=-1, keepdims=True)
        oh = jnp.dot(p.astype(cdt), vh, preferred_element_type=jnp.float32)  # (TQ, d)
        oh = oh * pl.reciprocal(l, approx=True)     # normalize the small PV result
        a_scr[:, sl] = oh.astype(a_scr.dtype)

    attn = jnp.dot(a_scr[...], wout_ref[...],
                   preferred_element_type=jnp.float32) + bout_ref[0]        # (TQ, H)
    # dropout is identity in inference mode

    # ---- residual + RMSNorm 1 (f32 elementwise)
    h1 = _rmsnorm_f32(xq.astype(jnp.float32) + attn, ln1_ref[0], eps)

    # ---- feed-forward: Linear -> SiLU -> Linear
    f = jnp.dot(h1.astype(cdt), w1_ref[...], preferred_element_type=jnp.float32) + b1_ref[0]
    f = f * jax.nn.sigmoid(f)                      # SiLU in f32 (sigmoid -> EUP)
    ff = jnp.dot(f.astype(cdt), w2_ref[...], preferred_element_type=jnp.float32) + b2_ref[0]

    # ---- residual + RMSNorm 2
    h2 = _rmsnorm_f32(h1 + ff, ln2_ref[0], eps)
    o_ref[0] = h2.astype(o_ref.dtype)


def _fold_qkv_inproj(wqkv, bqkv, win, bin_, nhead):
    """Fold self.qkv and the MHA in_proj into three (H, H) projections (f32 host-side);
    the 1/sqrt(head_dim) attention scale is folded into the q projection."""
    H = wqkv.shape[1]
    d = H // nhead
    scale = 1.0 / math.sqrt(d)
    wqkv = wqkv.astype(jnp.float32)
    bqkv = bqkv.astype(jnp.float32)
    win = win.astype(jnp.float32)
    bin_ = bin_.astype(jnp.float32)
    out = []
    for i in range(3):
        Wi = wqkv[i * H:(i + 1) * H, :]      # (H, H) as (out, in)
        bi = bqkv[i * H:(i + 1) * H]
        Wp = win[i * H:(i + 1) * H, :]       # (H, H) as (out, in)
        bp = bin_[i * H:(i + 1) * H]
        # ((x @ Wi.T + bi) @ Wp.T + bp) == x @ (Wp @ Wi).T + (Wp @ bi + bp)
        Wf = (Wp @ Wi).T                     # (H, H) as (in, out)
        bf = Wp @ bi + bp
        if i == 0:                           # fold the attention scale into q
            Wf = Wf * scale
            bf = bf * scale
        out.append((Wf, bf))
    return out


def attn_block(x, params, nhead, mask=None, is_causal=False, eps=RMS_EPS,
               block_q=None, compute_dtype=None, softmax_dtype=None):
    # mask / is_causal are unused by the reference PyTorch forward.
    del mask, is_causal
    (wqkv, bqkv, win, bin_, wout, bout, ln1, ln2, w1, b1, w2, b2) = params
    B, S, H = x.shape
    assert H % nhead == 0, "hidden_size must be divisible by nhead"
    Dff = w1.shape[0]
    cdt = jnp.dtype(compute_dtype) if compute_dtype is not None else jnp.dtype(x.dtype)
    if softmax_dtype is None:
        # bf16 exp halves EUP time on v6e/v7x; pass jnp.float32 explicitly on v5e.
        softmax_dtype = jnp.float32 if cdt == jnp.dtype(jnp.float32) else cdt
    softmax_dtype = jnp.dtype(softmax_dtype)

    (wq, bq), (wk, bk), (wv, bv) = _fold_qkv_inproj(wqkv, bqkv, win, bin_, nhead)

    if block_q is None:
        block_q = S
        for cand in (512, 256, 128):
            if S % cand == 0:
                block_q = min(S, cand)
                break
    assert S % block_q == 0, "S must be divisible by block_q"
    nq = S // block_q

    f32 = jnp.float32
    x_c = x.astype(cdt)
    const_args = (
        wq.astype(cdt), bq.reshape(1, -1).astype(f32),
        wk.astype(cdt), bk.reshape(1, -1).astype(f32),
        wv.astype(cdt), bv.reshape(1, -1).astype(f32),
        wout.T.astype(cdt), bout.reshape(1, -1).astype(f32),
        ln1.reshape(1, -1).astype(f32), ln2.reshape(1, -1).astype(f32),
        w1.T.astype(cdt), b1.reshape(1, -1).astype(f32),
        w2.T.astype(cdt), b2.reshape(1, -1).astype(f32),
    )

    kernel = functools.partial(attn_block_kernel, nhead=nhead, eps=eps,
                               softmax_dtype=softmax_dtype)

    def build(weight_buffers):
        pm = pl.Buffered(weight_buffers) if weight_buffers is not None else None

        def const_spec(shape):
            imap = lambda b, i: (0,) * len(shape)
            if pm is None:
                return pl.BlockSpec(shape, imap)
            return pl.BlockSpec(shape, imap, pipeline_mode=pm)

        in_specs = [pl.BlockSpec((1, S, H), lambda b, i: (b, 0, 0))]
        in_specs += [const_spec(a.shape) for a in const_args]

        # VMEM budget from the actual dominant terms, clamped to this generation's
        # physical capacity (128 MiB v5e/v6e, 64 MiB per-core v7x).
        nbuf = 2 if weight_buffers is None else weight_buffers
        ci = jnp.dtype(cdt).itemsize
        need = (nbuf * sum(int(a.size) * a.dtype.itemsize for a in const_args)
                + 2 * S * H * ci                                # double-buffered x
                + 2 * block_q * H * jnp.dtype(x.dtype).itemsize  # double-buffered out
                + (2 * S * H + block_q * H) * ci                 # K/V/attn scratch
                + block_q * S * (4 + softmax_dtype.itemsize)     # f32 scores + probs
                + 4 * S * H                                      # f32 KV proj temp
                + 4 * block_q * (Dff + 8 * H)                    # ff + misc f32 acts
                + (4 << 20))
        try:
            cap = int(pltpu.get_tpu_info().vmem_capacity_bytes)
        except Exception:
            cap = 64 << 20   # smallest per-core VMEM across v5e/v6e/v7x
        vmem_limit = int(max(32 << 20, min(cap - (2 << 20), need)))

        return pl.pallas_call(
            kernel,
            out_shape=jax.ShapeDtypeStruct((B, S, H), x.dtype),
            grid=(B, nq),
            in_specs=in_specs,
            out_specs=pl.BlockSpec((1, block_q, H), lambda b, i: (b, i, 0)),
            scratch_shapes=[
                pltpu.VMEM((S, H), cdt),        # K cache (recomputed at i == 0)
                pltpu.VMEM((S, H), cdt),        # V cache
                pltpu.VMEM((block_q, H), cdt),  # per-head outputs -> single out_proj
            ],
            compiler_params=pltpu.CompilerParams(
                # query-block axis must be "arbitrary": K/V scratch is reused across it.
                dimension_semantics=("parallel", "arbitrary"),
                vmem_limit_bytes=vmem_limit,
            ),
        )

    try:
        return build(weight_buffers=1)(x_c, *const_args)
    except Exception:
        # Fallback if this Pallas build rejects single-buffered grid-invariant
        # inputs (pl.Buffered(1)); identical semantics, default double-buffering.
        return build(weight_buffers=None)(x_c, *const_args)


def attn_block_ref(x, params, nhead, eps=RMS_EPS):
    # Pure-JAX reference with PyTorch (out, in) weight layout, for validation.
    (wqkv, bqkv, win, bin_, wout, bout, ln1, ln2, w1, b1, w2, b2) = params
    B, S, H = x.shape
    d = H // nhead
    qkv = x @ wqkv.T + bqkv
    q, k, v = jnp.split(qkv, 3, axis=-1)
    qp = q @ win[:H].T + bin_[:H]
    kp = k @ win[H:2 * H].T + bin_[H:2 * H]
    vp = v @ win[2 * H:].T + bin_[2 * H:]

    def heads(t):
        return t.reshape(B, S, nhead, d).transpose(0, 2, 1, 3)

    qh, kh, vh = heads(qp), heads(kp), heads(vp)
    s = jnp.einsum("bhqd,bhkd->bhqk", qh, kh) / math.sqrt(d)
    p = jax.nn.softmax(s, axis=-1)
    a = jnp.einsum("bhqk,bhkd->bhqd", p, vh).transpose(0, 2, 1, 3).reshape(B, S, H)
    a = a @ wout.T + bout

    def rms(t, w):
        return t * lax.rsqrt(jnp.mean(t * t, -1, keepdims=True) + eps) * w

    h1 = rms(x + a, ln1)
    f = jax.nn.silu(h1 @ w1.T + b1)
    return rms(h1 + f @ w2.T + b2, ln2)


def _make_params(key, H, DFF):
    keys = jax.random.split(key, 12)

    def init(k, shape, scale=0.05):
        return jax.random.normal(k, shape, jnp.float32) * scale

    return (
        init(keys[0], (3 * H, H)),    # qkv weight  (out, in)
        init(keys[1], (3 * H,)),      # qkv bias
        init(keys[2], (3 * H, H)),    # mha in_proj_weight
        init(keys[3], (3 * H,)),      # mha in_proj_bias
        init(keys[4], (H, H)),        # mha out_proj weight
        init(keys[5], (H,)),          # mha out_proj bias
        jnp.ones((H,), jnp.float32),  # ln1 weight
        jnp.ones((H,), jnp.float32),  # ln2 weight
        init(keys[6], (DFF, H)),      # ff[0] weight
        init(keys[7], (DFF,)),        # ff[0] bias
        init(keys[8], (H, DFF)),      # ff[2] weight
        init(keys[9], (H,)),          # ff[2] bias
    )


if __name__ == "__main__":
    root = jax.random.PRNGKey(0)
    k_small, k_med, kx1, kx2 = jax.random.split(root, 4)

    # ---- test 1: small shapes, f32 compute, single query block -------------------
    B, S, H, NHEAD, DFF = 2, 8, 32, 4, 64
    params = _make_params(k_small, H, DFF)
    x = jax.random.normal(kx1, (B, S, H), jnp.float32)

    out = attn_block(x, params, NHEAD, mask=None, is_causal=False)
    out = jax.block_until_ready(out)
    ref = attn_block_ref(x, params, NHEAD)
    assert out.shape == (B, S, H)
    err = float(jnp.max(jnp.abs(out - ref)))
    # relaxed tolerance: pl.reciprocal(approx=True) in the softmax denominator
    assert jnp.allclose(out, ref, atol=2e-3, rtol=2e-3), err

    # ---- test 2: multi query-block grid (exercises the KV scratch cache) ----------
    B2, S2, H2, NHEAD2, DFF2 = 2, 256, 64, 4, 128
    params2 = _make_params(k_med, H2, DFF2)
    x2 = jax.random.normal(kx2, (B2, S2, H2), jnp.float32)

    out2 = attn_block(x2, params2, NHEAD2, block_q=64)
    out2 = jax.block_until_ready(out2)
    ref2 = attn_block_ref(x2, params2, NHEAD2)
    err2 = float(jnp.max(jnp.abs(out2 - ref2)))
    assert jnp.allclose(out2, ref2, atol=5e-3, rtol=5e-3), err2

    # ---- test 3: bf16 compute-dtype path (bf16 MXU operands, bf16 KV, bf16 exp) ---
    out_bf = attn_block(x2, params2, NHEAD2, block_q=64, compute_dtype=jnp.bfloat16)
    out_bf = jax.block_until_ready(out_bf)
    err_bf = float(jnp.max(jnp.abs(out_bf.astype(jnp.float32) - ref2)))
    assert jnp.allclose(out_bf.astype(jnp.float32), ref2, atol=1e-1, rtol=1e-1), err_bf

    print("KERNEL_OK")
</pallas_src>

<mosaic_0001>
module attributes {stable_mosaic.version = 11 : i64} {
  func.func @attn_block_kernel(%arg0: i32, %arg1: i32, %arg2: memref<1x8x32xf32, #tpu.memory_space<vmem>>, %arg3: memref<32x32xf32, #tpu.memory_space<vmem>>, %arg4: memref<1x32xf32, #tpu.memory_space<vmem>>, %arg5: memref<32x32xf32, #tpu.memory_space<vmem>>, %arg6: memref<1x32xf32, #tpu.memory_space<vmem>>, %arg7: memref<32x32xf32, #tpu.memory_space<vmem>>, %arg8: memref<1x32xf32, #tpu.memory_space<vmem>>, %arg9: memref<32x32xf32, #tpu.memory_space<vmem>>, %arg10: memref<1x32xf32, #tpu.memory_space<vmem>>, %arg11: memref<1x32xf32, #tpu.memory_space<vmem>>, %arg12: memref<1x32xf32, #tpu.memory_space<vmem>>, %arg13: memref<32x64xf32, #tpu.memory_space<vmem>>, %arg14: memref<1x64xf32, #tpu.memory_space<vmem>>, %arg15: memref<64x32xf32, #tpu.memory_space<vmem>>, %arg16: memref<1x32xf32, #tpu.memory_space<vmem>>, %arg17: memref<1x8x32xf32, #tpu.memory_space<vmem>>, %arg18: memref<8x32xf32, #tpu.memory_space<vmem>>, %arg19: memref<8x32xf32, #tpu.memory_space<vmem>>, %arg20: memref<8x32xf32, #tpu.memory_space<vmem>>) attributes {dimension_semantics = [#tpu.dimension_semantics<parallel>, #tpu.dimension_semantics<arbitrary>], iteration_bounds = array<i64: 2, 1>, scalar_prefetch = 0 : i64, scratch_operands = 3 : i64, tpu.core_type = #tpu.core_type<tc>, window_params = [{transform_indices = @transform_0, window_bounds = array<i64: 1, 8, 32>}, {pipeline_mode = #tpu.pipeline_mode<synchronous>, transform_indices = @transform_1, window_bounds = array<i64: 32, 32>}, {pipeline_mode = #tpu.pipeline_mode<synchronous>, transform_indices = @transform_2, window_bounds = array<i64: 1, 32>}, {pipeline_mode = #tpu.pipeline_mode<synchronous>, transform_indices = @transform_3, window_bounds = array<i64: 32, 32>}, {pipeline_mode = #tpu.pipeline_mode<synchronous>, transform_indices = @transform_4, window_bounds = array<i64: 1, 32>}, {pipeline_mode = #tpu.pipeline_mode<synchronous>, transform_indices = @transform_5, window_bounds = array<i64: 32, 32>}, {pipeline_mode = #tpu.pipeline_mode<synchronous>, transform_indices = @transform_6, window_bounds = array<i64: 1, 32>}, {pipeline_mode = #tpu.pipeline_mode<synchronous>, transform_indices = @transform_7, window_bounds = array<i64: 32, 32>}, {pipeline_mode = #tpu.pipeline_mode<synchronous>, transform_indices = @transform_8, window_bounds = array<i64: 1, 32>}, {pipeline_mode = #tpu.pipeline_mode<synchronous>, transform_indices = @transform_9, window_bounds = array<i64: 1, 32>}, {pipeline_mode = #tpu.pipeline_mode<synchronous>, transform_indices = @transform_10, window_bounds = array<i64: 1, 32>}, {pipeline_mode = #tpu.pipeline_mode<synchronous>, transform_indices = @transform_11, window_bounds = array<i64: 32, 64>}, {pipeline_mode = #tpu.pipeline_mode<synchronous>, transform_indices = @transform_12, window_bounds = array<i64: 1, 64>}, {pipeline_mode = #tpu.pipeline_mode<synchronous>, transform_indices = @transform_13, window_bounds = array<i64: 64, 32>}, {pipeline_mode = #tpu.pipeline_mode<synchronous>, transform_indices = @transform_14, window_bounds = array<i64: 1, 32>}, {transform_indices = @transform_15, window_bounds = array<i64: 1, 8, 32>}]} {
    %c0_i32 = arith.constant 0 : i32
    %0 = arith.cmpi eq, %arg1, %c0_i32 : i32
    %1 = arith.extui %0 : i1 to i32
    %c0_i32_0 = arith.constant 0 : i32
    %2 = arith.cmpi ne, %1, %c0_i32_0 : i32
    scf.if %2 {
      %c0_74 = arith.constant 0 : index
      %c0_75 = arith.constant 0 : index
      %c0_76 = arith.constant 0 : index
      %142 = vector.load %arg2[%c0_74, %c0_75, %c0_76] : memref<1x8x32xf32, #tpu.memory_space<vmem>>, vector<1x8x32xf32>
      %143 = vector.shape_cast %142 : vector<1x8x32xf32> to vector<8x32xf32>
      %c0_77 = arith.constant 0 : index
      %c0_78 = arith.constant 0 : index
      %144 = vector.load %arg5[%c0_77, %c0_78] : memref<32x32xf32, #tpu.memory_space<vmem>>, vector<32x32xf32>
      %cst_79 = arith.constant dense<0.000000e+00> : vector<8x32xf32>
      %145 = tpu.matmul %143, %144, %cst_79 {dimension_numbers = #tpu.dot_dimension_numbers<[1], [0], [0], [1], [0, 0, 1, 1], [], []>} : vector<8x32xf32>, vector<32x32xf32>, vector<8x32xf32> -> vector<8x32xf32>
      %c0_80 = arith.constant 0 : index
      %c0_81 = arith.constant 0 : index
      %146 = vector.load %arg6[%c0_80, %c0_81] : memref<1x32xf32, #tpu.memory_space<vmem>>, vector<1x32xf32>
      %147 = vector.shape_cast %146 : vector<1x32xf32> to vector<32xf32>
      %148 = vector.shape_cast %147 : vector<32xf32> to vector<1x32xf32>
      %149 = vector.broadcast %148 : vector<1x32xf32> to vector<8x32xf32>
      %150 = arith.addf %145, %149 : vector<8x32xf32>
      %c0_82 = arith.constant 0 : index
      %c0_83 = arith.constant 0 : index
      %151 = vector.load %arg18[%c0_82, %c0_83] : memref<8x32xf32, #tpu.memory_space<vmem>>, vector<8x32xf32>
      tpu.vector_store %arg18[%c0_82, %c0_83], %150 {strides = array<i32>} : memref<8x32xf32, #tpu.memory_space<vmem>>, vector<8x32xf32>,
      %c0_84 = arith.constant 0 : index
      %c0_85 = arith.constant 0 : index
      %152 = vector.load %arg7[%c0_84, %c0_85] : memref<32x32xf32, #tpu.memory_space<vmem>>, vector<32x32xf32>
      %cst_86 = arith.constant dense<0.000000e+00> : vector<8x32xf32>
      %153 = tpu.matmul %143, %152, %cst_86 {dimension_numbers = #tpu.dot_dimension_numbers<[1], [0], [0], [1], [0, 0, 1, 1], [], []>} : vector<8x32xf32>, vector<32x32xf32>, vector<8x32xf32> -> vector<8x32xf32>
      %c0_87 = arith.constant 0 : index
      %c0_88 = arith.constant 0 : index
      %154 = vector.load %arg8[%c0_87, %c0_88] : memref<1x32xf32, #tpu.memory_space<vmem>>, vector<1x32xf32>
      %155 = vector.shape_cast %154 : vector<1x32xf32> to vector<32xf32>
      %156 = vector.shape_cast %155 : vector<32xf32> to vector<1x32xf32>
      %157 = vector.broadcast %156 : vector<1x32xf32> to vector<8x32xf32>
      %158 = arith.addf %153, %157 : vector<8x32xf32>
      %c0_89 = arith.constant 0 : index
      %c0_90 = arith.constant 0 : index
      %159 = vector.load %arg19[%c0_89, %c0_90] : memref<8x32xf32, #tpu.memory_space<vmem>>, vector<8x32xf32>
      tpu.vector_store %arg19[%c0_89, %c0_90], %158 {strides = array<i32>} : memref<8x32xf32, #tpu.memory_space<vmem>>, vector<8x32xf32>,
    } else {
    }
    %c8_i32 = arith.constant 8 : i32
    %3 = arith.muli %arg1, %c8_i32 : i32
    %4 = tpu.assume_multiple %3, 8 : i32
    %c0 = arith.constant 0 : index
    %5 = arith.index_cast %4 : i32 to index
    %c0_1 = arith.constant 0 : index
    %6 = vector.load %arg2[%c0, %5, %c0_1] : memref<1x8x32xf32, #tpu.memory_space<vmem>>, vector<1x8x32xf32>
    %7 = vector.shape_cast %6 : vector<1x8x32xf32> to vector<8x32xf32>
    %c0_2 = arith.constant 0 : index
    %c0_3 = arith.constant 0 : index
    %8 = vector.load %arg3[%c0_2, %c0_3] : memref<32x32xf32, #tpu.memory_space<vmem>>, vector<32x32xf32>
    %cst = arith.constant dense<0.000000e+00> : vector<8x32xf32>
    %9 = tpu.matmul %7, %8, %cst {dimension_numbers = #tpu.dot_dimension_numbers<[1], [0], [0], [1], [0, 0, 1, 1], [], []>} : vector<8x32xf32>, vector<32x32xf32>, vector<8x32xf32> -> vector<8x32xf32>
    %c0_4 = arith.constant 0 : index
    %c0_5 = arith.constant 0 : index
    %10 = vector.load %arg4[%c0_4, %c0_5] : memref<1x32xf32, #tpu.memory_space<vmem>>, vector<1x32xf32>
    %11 = vector.shape_cast %10 : vector<1x32xf32> to vector<32xf32>
    %12 = vector.shape_cast %11 : vector<32xf32> to vector<1x32xf32>
    %13 = vector.broadcast %12 : vector<1x32xf32> to vector<8x32xf32>
    %14 = arith.addf %9, %13 : vector<8x32xf32>
    %15 = vector.extract_strided_slice %14 {offsets = [0, 0], sizes = [8, 8], strides = [1, 1]} : vector<8x32xf32> to vector<8x8xf32>
    %c0_6 = arith.constant 0 : index
    %c0_7 = arith.constant 0 : index
    %16 = vector.load %arg18[%c0_6, %c0_7] : memref<8x32xf32, #tpu.memory_space<vmem>>, vector<8x8xf32>
    %c0_8 = arith.constant 0 : index
    %c0_9 = arith.constant 0 : index
    %17 = vector.load %arg19[%c0_8, %c0_9] : memref<8x32xf32, #tpu.memory_space<vmem>>, vector<8x8xf32>
    %cst_10 = arith.constant dense<0.000000e+00> : vector<8x8xf32>
    %18 = tpu.matmul %15, %16, %cst_10 {dimension_numbers = #tpu.dot_dimension_numbers<[1], [1], [0], [0], [0, 0, 1, 0], [], []>} : vector<8x8xf32>, vector<8x8xf32>, vector<8x8xf32> -> vector<8x8xf32>
    %cst_11 = arith.constant dense<0xFF800000> : vector<8xf32>
    %19 = vector.multi_reduction <maximumf>, %18, %cst_11 [1] : vector<8x8xf32> to vector<8xf32>
    %20 = vector.shape_cast %19 : vector<8xf32> to vector<8x1xf32>
    %21 = vector.broadcast %20 : vector<8x1xf32> to vector<8x8xf32>
    %22 = arith.subf %18, %21 : vector<8x8xf32>
    %23 = math.exp %22 : vector<8x8xf32>
    %cst_12 = arith.constant dense<0.000000e+00> : vector<8xf32>
    %24 = vector.multi_reduction <add>, %23, %cst_12 [1] : vector<8x8xf32> to vector<8xf32>
    %25 = vector.shape_cast %24 : vector<8xf32> to vector<8x1xf32>
    %cst_13 = arith.constant dense<0.000000e+00> : vector<8x8xf32>
    %26 = tpu.matmul %23, %17, %cst_13 {dimension_numbers = #tpu.dot_dimension_numbers<[1], [0], [0], [1], [0, 0, 1, 1], [], []>} : vector<8x8xf32>, vector<8x8xf32>, vector<8x8xf32> -> vector<8x8xf32>
    %27 = tpu.reciprocal %25 {approx = true} : vector<8x1xf32> -> vector<8x1xf32>
    %28 = vector.broadcast %27 : vector<8x1xf32> to vector<8x8xf32>
    %29 = arith.mulf %26, %28 : vector<8x8xf32>
    %c0_14 = arith.constant 0 : index
    %c0_15 = arith.constant 0 : index
    %30 = vector.load %arg20[%c0_14, %c0_15] : memref<8x32xf32, #tpu.memory_space<vmem>>, vector<8x8xf32>
    tpu.vector_store %arg20[%c0_14, %c0_15], %29 {strides = array<i32>} : memref<8x32xf32, #tpu.memory_space<vmem>>, vector<8x8xf32>,
    %31 = vector.extract_strided_slice %14 {offsets = [0, 8], sizes = [8, 8], strides = [1, 1]} : vector<8x32xf32> to vector<8x8xf32>
    %c0_16 = arith.constant 0 : index
    %c8 = arith.constant 8 : index
    %32 = vector.load %arg18[%c0_16, %c8] : memref<8x32xf32, #tpu.memory_space<vmem>>, vector<8x8xf32>
    %c0_17 = arith.constant 0 : index
    %c8_18 = arith.constant 8 : index
    %33 = vector.load %arg19[%c0_17, %c8_18] : memref<8x32xf32, #tpu.memory_space<vmem>>, vector<8x8xf32>
    %cst_19 = arith.constant dense<0.000000e+00> : vector<8x8xf32>
    %34 = tpu.matmul %31, %32, %cst_19 {dimension_numbers = #tpu.dot_dimension_numbers<[1], [1], [0], [0], [0, 0, 1, 0], [], []>} : vector<8x8xf32>, vector<8x8xf32>, vector<8x8xf32> -> vector<8x8xf32>
    %cst_20 = arith.constant dense<0xFF800000> : vector<8xf32>
    %35 = vector.multi_reduction <maximumf>, %34, %cst_20 [1] : vector<8x8xf32> to vector<8xf32>
    %36 = vector.shape_cast %35 : vector<8xf32> to vector<8x1xf32>
    %37 = vector.broadcast %36 : vector<8x1xf32> to vector<8x8xf32>
    %38 = arith.subf %34, %37 : vector<8x8xf32>
    %39 = math.exp %38 : vector<8x8xf32>
    %cst_21 = arith.constant dense<0.000000e+00> : vector<8xf32>
    %40 = vector.multi_reduction <add>, %39, %cst_21 [1] : vector<8x8xf32> to vector<8xf32>
    %41 = vector.shape_cast %40 : vector<8xf32> to vector<8x1xf32>
    %cst_22 = arith.constant dense<0.000000e+00> : vector<8x8xf32>
    %42 = tpu.matmul %39, %33, %cst_22 {dimension_numbers = #tpu.dot_dimension_numbers<[1], [0], [0], [1], [0, 0, 1, 1], [], []>} : vector<8x8xf32>, vector<8x8xf32>, vector<8x8xf32> -> vector<8x8xf32>
    %43 = tpu.reciprocal %41 {approx = true} : vector<8x1xf32> -> vector<8x1xf32>
    %44 = vector.broadcast %43 : vector<8x1xf32> to vector<8x8xf32>
    %45 = arith.mulf %42, %44 : vector<8x8xf32>
    %c0_23 = arith.constant 0 : index
    %c8_24 = arith.constant 8 : index
    %46 = vector.load %arg20[%c0_23, %c8_24] : memref<8x32xf32, #tpu.memory_space<vmem>>, vector<8x8xf32>
    tpu.vector_store %arg20[%c0_23, %c8_24], %45 {strides = array<i32>} : memref<8x32xf32, #tpu.memory_space<vmem>>, vector<8x8xf32>,
    %47 = vector.extract_strided_slice %14 {offsets = [0, 16], sizes = [8, 8], strides = [1, 1]} : vector<8x32xf32> to vector<8x8xf32>
    %c0_25 = arith.constant 0 : index
    %c16 = arith.constant 16 : index
    %48 = vector.load %arg18[%c0_25, %c16] : memref<8x32xf32, #tpu.memory_space<vmem>>, vector<8x8xf32>
    %c0_26 = arith.constant 0 : index
    %c16_27 = arith.constant 16 : index
    %49 = vector.load %arg19[%c0_26, %c16_27] : memref<8x32xf32, #tpu.memory_space<vmem>>, vector<8x8xf32>
    %cst_28 = arith.constant dense<0.000000e+00> : vector<8x8xf32>
    %50 = tpu.matmul %47, %48, %cst_28 {dimension_numbers = #tpu.dot_dimension_numbers<[1], [1], [0], [0], [0, 0, 1, 0], [], []>} : vector<8x8xf32>, vector<8x8xf32>, vector<8x8xf32> -> vector<8x8xf32>
    %cst_29 = arith.constant dense<0xFF800000> : vector<8xf32>
    %51 = vector.multi_reduction <maximumf>, %50, %cst_29 [1] : vector<8x8xf32> to vector<8xf32>
    %52 = vector.shape_cast %51 : vector<8xf32> to vector<8x1xf32>
    %53 = vector.broadcast %52 : vector<8x1xf32> to vector<8x8xf32>
    %54 = arith.subf %50, %53 : vector<8x8xf32>
    %55 = math.exp %54 : vector<8x8xf32>
    %cst_30 = arith.constant dense<0.000000e+00> : vector<8xf32>
    %56 = vector.multi_reduction <add>, %55, %cst_30 [1] : vector<8x8xf32> to vector<8xf32>
    %57 = vector.shape_cast %56 : vector<8xf32> to vector<8x1xf32>
    %cst_31 = arith.constant dense<0.000000e+00> : vector<8x8xf32>
    %58 = tpu.matmul %55, %49, %cst_31 {dimension_numbers = #tpu.dot_dimension_numbers<[1], [0], [0], [1], [0, 0, 1, 1], [], []>} : vector<8x8xf32>, vector<8x8xf32>, vector<8x8xf32> -> vector<8x8xf32>
    %59 = tpu.reciprocal %57 {approx = true} : vector<8x1xf32> -> vector<8x1xf32>
    %60 = vector.broadcast %59 : vector<8x1xf32> to vector<8x8xf32>
    %61 = arith.mulf %58, %60 : vector<8x8xf32>
    %c0_32 = arith.constant 0 : index
    %c16_33 = arith.constant 16 : index
    %62 = vector.load %arg20[%c0_32, %c16_33] : memref<8x32xf32, #tpu.memory_space<vmem>>, vector<8x8xf32>
    tpu.vector_store %arg20[%c0_32, %c16_33], %61 {strides = array<i32>} : memref<8x32xf32, #tpu.memory_space<vmem>>, vector<8x8xf32>,
    %63 = vector.extract_strided_slice %14 {offsets = [0, 24], sizes = [8, 8], strides = [1, 1]} : vector<8x32xf32> to vector<8x8xf32>
    %c0_34 = arith.constant 0 : index
    %c24 = arith.constant 24 : index
    %64 = vector.load %arg18[%c0_34, %c24] : memref<8x32xf32, #tpu.memory_space<vmem>>, vector<8x8xf32>
    %c0_35 = arith.constant 0 : index
    %c24_36 = arith.constant 24 : index
    %65 = vector.load %arg19[%c0_35, %c24_36] : memref<8x32xf32, #tpu.memory_space<vmem>>, vector<8x8xf32>
    %cst_37 = arith.constant dense<0.000000e+00> : vector<8x8xf32>
    %66 = tpu.matmul %63, %64, %cst_37 {dimension_numbers = #tpu.dot_dimension_numbers<[1], [1], [0], [0], [0, 0, 1, 0], [], []>} : vector<8x8xf32>, vector<8x8xf32>, vector<8x8xf32> -> vector<8x8xf32>
    %cst_38 = arith.constant dense<0xFF800000> : vector<8xf32>
    %67 = vector.multi_reduction <maximumf>, %66, %cst_38 [1] : vector<8x8xf32> to vector<8xf32>
    %68 = vector.shape_cast %67 : vector<8xf32> to vector<8x1xf32>
    %69 = vector.broadcast %68 : vector<8x1xf32> to vector<8x8xf32>
    %70 = arith.subf %66, %69 : vector<8x8xf32>
    %71 = math.exp %70 : vector<8x8xf32>
    %cst_39 = arith.constant dense<0.000000e+00> : vector<8xf32>
    %72 = vector.multi_reduction <add>, %71, %cst_39 [1] : vector<8x8xf32> to vector<8xf32>
    %73 = vector.shape_cast %72 : vector<8xf32> to vector<8x1xf32>
    %cst_40 = arith.constant dense<0.000000e+00> : vector<8x8xf32>
    %74 = tpu.matmul %71, %65, %cst_40 {dimension_numbers = #tpu.dot_dimension_numbers<[1], [0], [0], [1], [0, 0, 1, 1], [], []>} : vector<8x8xf32>, vector<8x8xf32>, vector<8x8xf32> -> vector<8x8xf32>
    %75 = tpu.reciprocal %73 {approx = true} : vector<8x1xf32> -> vector<8x1xf32>
    %76 = vector.broadcast %75 : vector<8x1xf32> to vector<8x8xf32>
    %77 = arith.mulf %74, %76 : vector<8x8xf32>
    %c0_41 = arith.constant 0 : index
    %c24_42 = arith.constant 24 : index
    %78 = vector.load %arg20[%c0_41, %c24_42] : memref<8x32xf32, #tpu.memory_space<vmem>>, vector<8x8xf32>
    tpu.vector_store %arg20[%c0_41, %c24_42], %77 {strides = array<i32>} : memref<8x32xf32, #tpu.memory_space<vmem>>, vector<8x8xf32>,
    %c0_43 = arith.constant 0 : index
    %c0_44 = arith.constant 0 : index
    %79 = vector.load %arg20[%c0_43, %c0_44] : memref<8x32xf32, #tpu.memory_space<vmem>>, vector<8x32xf32>
    %c0_45 = arith.constant 0 : index
    %c0_46 = arith.constant 0 : index
    %80 = vector.load %arg9[%c0_45, %c0_46] : memref<32x32xf32, #tpu.memory_space<vmem>>, vector<32x32xf32>
    %cst_47 = arith.constant dense<0.000000e+00> : vector<8x32xf32>
    %81 = tpu.matmul %79, %80, %cst_47 {dimension_numbers = #tpu.dot_dimension_numbers<[1], [0], [0], [1], [0, 0, 1, 1], [], []>} : vector<8x32xf32>, vector<32x32xf32>, vector<8x32xf32> -> vector<8x32xf32>
    %c0_48 = arith.constant 0 : index
    %c0_49 = arith.constant 0 : index
    %82 = vector.load %arg10[%c0_48, %c0_49] : memref<1x32xf32, #tpu.memory_space<vmem>>, vector<1x32xf32>
    %83 = vector.shape_cast %82 : vector<1x32xf32> to vector<32xf32>
    %84 = vector.shape_cast %83 : vector<32xf32> to vector<1x32xf32>
    %85 = vector.broadcast %84 : vector<1x32xf32> to vector<8x32xf32>
    %86 = arith.addf %81, %85 : vector<8x32xf32>
    %87 = arith.addf %7, %86 : vector<8x32xf32>
    %c0_50 = arith.constant 0 : index
    %c0_51 = arith.constant 0 : index
    %88 = vector.load %arg11[%c0_50, %c0_51] : memref<1x32xf32, #tpu.memory_space<vmem>>, vector<1x32xf32>
    %89 = vector.shape_cast %88 : vector<1x32xf32> to vector<32xf32>
    %90 = arith.mulf %87, %87 : vector<8x32xf32>
    %cst_52 = arith.constant dense<0.000000e+00> : vector<8xf32>
    %91 = vector.multi_reduction <add>, %90, %cst_52 [1] : vector<8x32xf32> to vector<8xf32>
    %92 = vector.shape_cast %91 : vector<8xf32> to vector<8x1xf32>
    %cst_53 = arith.constant 3.200000e+01 : f32
    %93 = vector.broadcast %cst_53 : f32 to vector<8x1xf32>
    %94 = arith.divf %92, %93 : vector<8x1xf32>
    %cst_54 = arith.constant 1.1920929E-7 : f32
    %95 = vector.broadcast %cst_54 : f32 to vector<8x1xf32>
    %96 = arith.addf %94, %95 : vector<8x1xf32>
    %97 = math.rsqrt %96 : vector<8x1xf32>
    %98 = vector.broadcast %97 : vector<8x1xf32> to vector<8x32xf32>
    %99 = arith.mulf %87, %98 : vector<8x32xf32>
    %100 = vector.shape_cast %89 : vector<32xf32> to vector<1x32xf32>
    %101 = vector.broadcast %100 : vector<1x32xf32> to vector<8x32xf32>
    %102 = arith.mulf %99, %101 : vector<8x32xf32>
    %c0_55 = arith.constant 0 : index
    %c0_56 = arith.constant 0 : index
    %103 = vector.load %arg13[%c0_55, %c0_56] : memref<32x64xf32, #tpu.memory_space<vmem>>, vector<32x64xf32>
    %cst_57 = arith.constant dense<0.000000e+00> : vector<8x64xf32>
    %104 = tpu.matmul %102, %103, %cst_57 {dimension_numbers = #tpu.dot_dimension_numbers<[1], [0], [0], [1], [0, 0, 1, 1], [], []>} : vector<8x32xf32>, vector<32x64xf32>, vector<8x64xf32> -> vector<8x64xf32>
    %c0_58 = arith.constant 0 : index
    %c0_59 = arith.constant 0 : index
    %105 = vector.load %arg14[%c0_58, %c0_59] : memref<1x64xf32, #tpu.memory_space<vmem>>, vector<1x64xf32>
    %106 = vector.shape_cast %105 : vector<1x64xf32> to vector<64xf32>
    %107 = vector.shape_cast %106 : vector<64xf32> to vector<1x64xf32>
    %108 = vector.broadcast %107 : vector<1x64xf32> to vector<8x64xf32>
    %109 = arith.addf %104, %108 : vector<8x64xf32>
    %110 = arith.negf %109 : vector<8x64xf32>
    %111 = math.exp %110 : vector<8x64xf32>
    %cst_60 = arith.constant 1.000000e+00 : f32
    %112 = vector.broadcast %cst_60 : f32 to vector<8x64xf32>
    %113 = arith.addf %112, %111 : vector<8x64xf32>
    %114 = arith.divf %112, %113 : vector<8x64xf32>
    %115 = arith.mulf %109, %114 : vector<8x64xf32>
    %c0_61 = arith.constant 0 : index
    %c0_62 = arith.constant 0 : index
    %116 = vector.load %arg15[%c0_61, %c0_62] : memref<64x32xf32, #tpu.memory_space<vmem>>, vector<64x32xf32>
    %cst_63 = arith.constant dense<0.000000e+00> : vector<8x32xf32>
    %117 = tpu.matmul %115, %116, %cst_63 {dimension_numbers = #tpu.dot_dimension_numbers<[1], [0], [0], [1], [0, 0, 1, 1], [], []>} : vector<8x64xf32>, vector<64x32xf32>, vector<8x32xf32> -> vector<8x32xf32>
    %c0_64 = arith.constant 0 : index
    %c0_65 = arith.constant 0 : index
    %118 = vector.load %arg16[%c0_64, %c0_65] : memref<1x32xf32, #tpu.memory_space<vmem>>, vector<1x32xf32>
    %119 = vector.shape_cast %118 : vector<1x32xf32> to vector<32xf32>
    %120 = vector.shape_cast %119 : vector<32xf32> to vector<1x32xf32>
    %121 = vector.broadcast %120 : vector<1x32xf32> to vector<8x32xf32>
    %122 = arith.addf %117, %121 : vector<8x32xf32>
    %123 = arith.addf %102, %122 : vector<8x32xf32>
    %c0_66 = arith.constant 0 : index
    %c0_67 = arith.constant 0 : index
    %124 = vector.load %arg12[%c0_66, %c0_67] : memref<1x32xf32, #tpu.memory_space<vmem>>, vector<1x32xf32>
    %125 = vector.shape_cast %124 : vector<1x32xf32> to vector<32xf32>
    %126 = arith.mulf %123, %123 : vector<8x32xf32>
    %cst_68 = arith.constant dense<0.000000e+00> : vector<8xf32>
    %127 = vector.multi_reduction <add>, %126, %cst_68 [1] : vector<8x32xf32> to vector<8xf32>
    %128 = vector.shape_cast %127 : vector<8xf32> to vector<8x1xf32>
    %cst_69 = arith.constant 3.200000e+01 : f32
    %129 = vector.broadcast %cst_69 : f32 to vector<8x1xf32>
    %130 = arith.divf %128, %129 : vector<8x1xf32>
    %cst_70 = arith.constant 1.1920929E-7 : f32
    %131 = vector.broadcast %cst_70 : f32 to vector<8x1xf32>
    %132 = arith.addf %130, %131 : vector<8x1xf32>
    %133 = math.rsqrt %132 : vector<8x1xf32>
    %134 = vector.broadcast %133 : vector<8x1xf32> to vector<8x32xf32>
    %135 = arith.mulf %123, %134 : vector<8x32xf32>
    %136 = vector.shape_cast %125 : vector<32xf32> to vector<1x32xf32>
    %137 = vector.broadcast %136 : vector<1x32xf32> to vector<8x32xf32>
    %138 = arith.mulf %135, %137 : vector<8x32xf32>
    %c0_71 = arith.constant 0 : index
    %c0_72 = arith.constant 0 : index
    %c0_73 = arith.constant 0 : index
    %139 = vector.load %arg17[%c0_71, %c0_72, %c0_73] : memref<1x8x32xf32, #tpu.memory_space<vmem>>, vector<1x8x32xf32>
    %140 = vector.shape_cast %139 : vector<1x8x32xf32> to vector<8x32xf32>
    %141 = vector.shape_cast %138 : vector<8x32xf32> to vector<1x8x32xf32>
    tpu.vector_store %arg17[%c0_71, %c0_72, %c0_73], %141 {strides = array<i32>} : memref<1x8x32xf32, #tpu.memory_space<vmem>>, vector<1x8x32xf32>,
    return
  }
  func.func @transform_0(%arg0: i32, %arg1: i32) -> (i32, i32, i32) {
    %c0_i32 = arith.constant 0 : i32
    %c0_i32_0 = arith.constant 0 : i32
    %c0_i32_1 = arith.constant 0 : i32
    return %arg0, %c0_i32, %c0_i32_0 : i32, i32, i32
  }
  func.func @transform_1(%arg0: i32, %arg1: i32) -> (i32, i32) {
    %c0_i32 = arith.constant 0 : i32
    %c0_i32_0 = arith.constant 0 : i32
    %c0_i32_1 = arith.constant 0 : i32
    return %c0_i32, %c0_i32_0 : i32, i32
  }
  func.func @transform_2(%arg0: i32, %arg1: i32) -> (i32, i32) {
    %c0_i32 = arith.constant 0 : i32
    %c0_i32_0 = arith.constant 0 : i32
    %c0_i32_1 = arith.constant 0 : i32
    return %c0_i32, %c0_i32_0 : i32, i32
  }
  func.func @transform_3(%arg0: i32, %arg1: i32) -> (i32, i32) {
    %c0_i32 = arith.constant 0 : i32
    %c0_i32_0 = arith.constant 0 : i32
    %c0_i32_1 = arith.constant 0 : i32
    return %c0_i32, %c0_i32_0 : i32, i32
  }
  func.func @transform_4(%arg0: i32, %arg1: i32) -> (i32, i32) {
    %c0_i32 = arith.constant 0 : i32
    %c0_i32_0 = arith.constant 0 : i32
    %c0_i32_1 = arith.constant 0 : i32
    return %c0_i32, %c0_i32_0 : i32, i32
  }
  func.func @transform_5(%arg0: i32, %arg1: i32) -> (i32, i32) {
    %c0_i32 = arith.constant 0 : i32
    %c0_i32_0 = arith.constant 0 : i32
    %c0_i32_1 = arith.constant 0 : i32
    return %c0_i32, %c0_i32_0 : i32, i32
  }
  func.func @transform_6(%arg0: i32, %arg1: i32) -> (i32, i32) {
    %c0_i32 = arith.constant 0 : i32
    %c0_i32_0 = arith.constant 0 : i32
    %c0_i32_1 = arith.constant 0 : i32
    return %c0_i32, %c0_i32_0 : i32, i32
  }
  func.func @transform_7(%arg0: i32, %arg1: i32) -> (i32, i32) {
    %c0_i32 = arith.constant 0 : i32
    %c0_i32_0 = arith.constant 0 : i32
    %c0_i32_1 = arith.constant 0 : i32
    return %c0_i32, %c0_i32_0 : i32, i32
  }
  func.func @transform_8(%arg0: i32, %arg1: i32) -> (i32, i32) {
    %c0_i32 = arith.constant 0 : i32
    %c0_i32_0 = arith.constant 0 : i32
    %c0_i32_1 = arith.constant 0 : i32
    return %c0_i32, %c0_i32_0 : i32, i32
  }
  func.func @transform_9(%arg0: i32, %arg1: i32) -> (i32, i32) {
    %c0_i32 = arith.constant 0 : i32
    %c0_i32_0 = arith.constant 0 : i32
    %c0_i32_1 = arith.constant 0 : i32
    return %c0_i32, %c0_i32_0 : i32, i32
  }
  func.func @transform_10(%arg0: i32, %arg1: i32) -> (i32, i32) {
    %c0_i32 = arith.constant 0 : i32
    %c0_i32_0 = arith.constant 0 : i32
    %c0_i32_1 = arith.constant 0 : i32
    return %c0_i32, %c0_i32_0 : i32, i32
  }
  func.func @transform_11(%arg0: i32, %arg1: i32) -> (i32, i32) {
    %c0_i32 = arith.constant 0 : i32
    %c0_i32_0 = arith.constant 0 : i32
    %c0_i32_1 = arith.constant 0 : i32
    return %c0_i32, %c0_i32_0 : i32, i32
  }
  func.func @transform_12(%arg0: i32, %arg1: i32) -> (i32, i32) {
    %c0_i32 = arith.constant 0 : i32
    %c0_i32_0 = arith.constant 0 : i32
    %c0_i32_1 = arith.constant 0 : i32
    return %c0_i32, %c0_i32_0 : i32, i32
  }
  func.func @transform_13(%arg0: i32, %arg1: i32) -> (i32, i32) {
    %c0_i32 = arith.constant 0 : i32
    %c0_i32_0 = arith.constant 0 : i32
    %c0_i32_1 = arith.constant 0 : i32
    return %c0_i32, %c0_i32_0 : i32, i32
  }
  func.func @transform_14(%arg0: i32, %arg1: i32) -> (i32, i32) {
    %c0_i32 = arith.constant 0 : i32
    %c0_i32_0 = arith.constant 0 : i32
    %c0_i32_1 = arith.constant 0 : i32
    return %c0_i32, %c0_i32_0 : i32, i32
  }
  func.func @transform_15(%arg0: i32, %arg1: i32) -> (i32, i32, i32) {
    %c0_i32 = arith.constant 0 : i32
    %c0_i32_0 = arith.constant 0 : i32
    return %arg0, %arg1, %c0_i32 : i32, i32, i32
  }
}

module attributes {stable_mosaic.version = 11 : i64} {
  func.func @attn_block_kernel(%arg0: i32, %arg1: i32, %arg2: memref<1x8x32xf32, #tpu.memory_space<vmem>>, %arg3: memref<32x32xf32, #tpu.memory_space<vmem>>, %arg4: memref<1x32xf32, #tpu.memory_space<vmem>>, %arg5: memref<32x32xf32, #tpu.memory_space<vmem>>, %arg6: memref<1x32xf32, #tpu.memory_space<vmem>>, %arg7: memref<32x32xf32, #tpu.memory_space<vmem>>, %arg8: memref<1x32xf32, #tpu.memory_space<vmem>>, %arg9: memref<32x32xf32, #tpu.memory_space<vmem>>, %arg10: memref<1x32xf32, #tpu.memory_space<vmem>>, %arg11: memref<1x32xf32, #tpu.memory_space<vmem>>, %arg12: memref<1x32xf32, #tpu.memory_space<vmem>>, %arg13: memref<32x64xf32, #tpu.memory_space<vmem>>, %arg14: memref<1x64xf32, #tpu.memory_space<vmem>>, %arg15: memref<64x32xf32, #tpu.memory_space<vmem>>, %arg16: memref<1x32xf32, #tpu.memory_space<vmem>>, %arg17: memref<1x8x32xf32, #tpu.memory_space<vmem>>, %arg18: memref<8x32xf32, #tpu.memory_space<vmem>>, %arg19: memref<8x32xf32, #tpu.memory_space<vmem>>, %arg20: memref<8x32xf32, #tpu.memory_space<vmem>>) attributes {dimension_semantics = [#tpu.dimension_semantics<parallel>, #tpu.dimension_semantics<arbitrary>], iteration_bounds = array<i64: 2, 1>, scalar_prefetch = 0 : i64, scratch_operands = 3 : i64, tpu.core_type = #tpu.core_type<tc>, window_params = [{transform_indices = @transform_0, window_bounds = array<i64: 1, 8, 32>}, {pipeline_mode = #tpu.pipeline_mode<synchronous>, transform_indices = @transform_1, window_bounds = array<i64: 32, 32>}, {pipeline_mode = #tpu.pipeline_mode<synchronous>, transform_indices = @transform_2, window_bounds = array<i64: 1, 32>}, {pipeline_mode = #tpu.pipeline_mode<synchronous>, transform_indices = @transform_3, window_bounds = array<i64: 32, 32>}, {pipeline_mode = #tpu.pipeline_mode<synchronous>, transform_indices = @transform_4, window_bounds = array<i64: 1, 32>}, {pipeline_mode = #tpu.pipeline_mode<synchronous>, transform_indices = @transform_5, window_bounds = array<i64: 32, 32>}, {pipeline_mode = #tpu.pipeline_mode<synchronous>, transform_indices = @transform_6, window_bounds = array<i64: 1, 32>}, {pipeline_mode = #tpu.pipeline_mode<synchronous>, transform_indices = @transform_7, window_bounds = array<i64: 32, 32>}, {pipeline_mode = #tpu.pipeline_mode<synchronous>, transform_indices = @transform_8, window_bounds = array<i64: 1, 32>}, {pipeline_mode = #tpu.pipeline_mode<synchronous>, transform_indices = @transform_9, window_bounds = array<i64: 1, 32>}, {pipeline_mode = #tpu.pipeline_mode<synchronous>, transform_indices = @transform_10, window_bounds = array<i64: 1, 32>}, {pipeline_mode = #tpu.pipeline_mode<synchronous>, transform_indices = @transform_11, window_bounds = array<i64: 32, 64>}, {pipeline_mode = #tpu.pipeline_mode<synchronous>, transform_indices = @transform_12, window_bounds = array<i64: 1, 64>}, {pipeline_mode = #tpu.pipeline_mode<synchronous>, transform_indices = @transform_13, window_bounds = array<i64: 64, 32>}, {pipeline_mode = #tpu.pipeline_mode<synchronous>, transform_indices = @transform_14, window_bounds = array<i64: 1, 32>}, {transform_indices = @transform_15, window_bounds = array<i64: 1, 8, 32>}]} {
    %c0_i32 = arith.constant 0 : i32
    %0 = arith.cmpi eq, %arg1, %c0_i32 : i32
    %1 = arith.extui %0 : i1 to i32
    %c0_i32_0 = arith.constant 0 : i32
    %2 = arith.cmpi ne, %1, %c0_i32_0 : i32
    scf.if %2 {
      %c0_74 = arith.constant 0 : index
      %c0_75 = arith.constant 0 : index
      %c0_76 = arith.constant 0 : index
      %142 = vector.load %arg2[%c0_74, %c0_75, %c0_76] : memref<1x8x32xf32, #tpu.memory_space<vmem>>, vector<1x8x32xf32>
      %143 = vector.shape_cast %142 : vector<1x8x32xf32> to vector<8x32xf32>
      %c0_77 = arith.constant 0 : index
      %c0_78 = arith.constant 0 : index
      %144 = vector.load %arg5[%c0_77, %c0_78] : memref<32x32xf32, #tpu.memory_space<vmem>>, vector<32x32xf32>
      %cst_79 = arith.constant dense<0.000000e+00> : vector<8x32xf32>
      %145 = tpu.matmul %143, %144, %cst_79 {dimension_numbers = #tpu.dot_dimension_numbers<[1], [0], [0], [1], [0, 0, 1, 1], [], []>} : vector<8x32xf32>, vector<32x32xf32>, vector<8x32xf32> -> vector<8x32xf32>
      %c0_80 = arith.constant 0 : index
      %c0_81 = arith.constant 0 : index
      %146 = vector.load %arg6[%c0_80, %c0_81] : memref<1x32xf32, #tpu.memory_space<vmem>>, vector<1x32xf32>
      %147 = vector.shape_cast %146 : vector<1x32xf32> to vector<32xf32>
      %148 = vector.shape_cast %147 : vector<32xf32> to vector<1x32xf32>
      %149 = vector.broadcast %148 : vector<1x32xf32> to vector<8x32xf32>
      %150 = arith.addf %145, %149 : vector<8x32xf32>
      %c0_82 = arith.constant 0 : index
      %c0_83 = arith.constant 0 : index
      %151 = vector.load %arg18[%c0_82, %c0_83] : memref<8x32xf32, #tpu.memory_space<vmem>>, vector<8x32xf32>
      tpu.vector_store %arg18[%c0_82, %c0_83], %150 {strides = array<i32>} : memref<8x32xf32, #tpu.memory_space<vmem>>, vector<8x32xf32>,
      %c0_84 = arith.constant 0 : index
      %c0_85 = arith.constant 0 : index
      %152 = vector.load %arg7[%c0_84, %c0_85] : memref<32x32xf32, #tpu.memory_space<vmem>>, vector<32x32xf32>
      %cst_86 = arith.constant dense<0.000000e+00> : vector<8x32xf32>
      %153 = tpu.matmul %143, %152, %cst_86 {dimension_numbers = #tpu.dot_dimension_numbers<[1], [0], [0], [1], [0, 0, 1, 1], [], []>} : vector<8x32xf32>, vector<32x32xf32>, vector<8x32xf32> -> vector<8x32xf32>
      %c0_87 = arith.constant 0 : index
      %c0_88 = arith.constant 0 : index
      %154 = vector.load %arg8[%c0_87, %c0_88] : memref<1x32xf32, #tpu.memory_space<vmem>>, vector<1x32xf32>
      %155 = vector.shape_cast %154 : vector<1x32xf32> to vector<32xf32>
      %156 = vector.shape_cast %155 : vector<32xf32> to vector<1x32xf32>
      %157 = vector.broadcast %156 : vector<1x32xf32> to vector<8x32xf32>
      %158 = arith.addf %153, %157 : vector<8x32xf32>
      %c0_89 = arith.constant 0 : index
      %c0_90 = arith.constant 0 : index
      %159 = vector.load %arg19[%c0_89, %c0_90] : memref<8x32xf32, #tpu.memory_space<vmem>>, vector<8x32xf32>
      tpu.vector_store %arg19[%c0_89, %c0_90], %158 {strides = array<i32>} : memref<8x32xf32, #tpu.memory_space<vmem>>, vector<8x32xf32>,
    } else {
    }
    %c8_i32 = arith.constant 8 : i32
    %3 = arith.muli %arg1, %c8_i32 : i32
    %4 = tpu.assume_multiple %3, 8 : i32
    %c0 = arith.constant 0 : index
    %5 = arith.index_cast %4 : i32 to index
    %c0_1 = arith.constant 0 : index
    %6 = vector.load %arg2[%c0, %5, %c0_1] : memref<1x8x32xf32, #tpu.memory_space<vmem>>, vector<1x8x32xf32>
    %7 = vector.shape_cast %6 : vector<1x8x32xf32> to vector<8x32xf32>
    %c0_2 = arith.constant 0 : index
    %c0_3 = arith.constant 0 : index
    %8 = vector.load %arg3[%c0_2, %c0_3] : memref<32x32xf32, #tpu.memory_space<vmem>>, vector<32x32xf32>
    %cst = arith.constant dense<0.000000e+00> : vector<8x32xf32>
    %9 = tpu.matmul %7, %8, %cst {dimension_numbers = #tpu.dot_dimension_numbers<[1], [0], [0], [1], [0, 0, 1, 1], [], []>} : vector<8x32xf32>, vector<32x32xf32>, vector<8x32xf32> -> vector<8x32xf32>
    %c0_4 = arith.constant 0 : index
    %c0_5 = arith.constant 0 : index
    %10 = vector.load %arg4[%c0_4, %c0_5] : memref<1x32xf32, #tpu.memory_space<vmem>>, vector<1x32xf32>
    %11 = vector.shape_cast %10 : vector<1x32xf32> to vector<32xf32>
    %12 = vector.shape_cast %11 : vector<32xf32> to vector<1x32xf32>
    %13 = vector.broadcast %12 : vector<1x32xf32> to vector<8x32xf32>
    %14 = arith.addf %9, %13 : vector<8x32xf32>
    %15 = vector.extract_strided_slice %14 {offsets = [0, 0], sizes = [8, 8], strides = [1, 1]} : vector<8x32xf32> to vector<8x8xf32>
    %c0_6 = arith.constant 0 : index
    %c0_7 = arith.constant 0 : index
    %16 = vector.load %arg18[%c0_6, %c0_7] : memref<8x32xf32, #tpu.memory_space<vmem>>, vector<8x8xf32>
    %c0_8 = arith.constant 0 : index
    %c0_9 = arith.constant 0 : index
    %17 = vector.load %arg19[%c0_8, %c0_9] : memref<8x32xf32, #tpu.memory_space<vmem>>, vector<8x8xf32>
    %cst_10 = arith.constant dense<0.000000e+00> : vector<8x8xf32>
    %18 = tpu.matmul %15, %16, %cst_10 {dimension_numbers = #tpu.dot_dimension_numbers<[1], [1], [0], [0], [0, 0, 1, 0], [], []>} : vector<8x8xf32>, vector<8x8xf32>, vector<8x8xf32> -> vector<8x8xf32>
    %cst_11 = arith.constant dense<0xFF800000> : vector<8xf32>
    %19 = vector.multi_reduction <maximumf>, %18, %cst_11 [1] : vector<8x8xf32> to vector<8xf32>
    %20 = vector.shape_cast %19 : vector<8xf32> to vector<8x1xf32>
    %21 = vector.broadcast %20 : vector<8x1xf32> to vector<8x8xf32>
    %22 = arith.subf %18, %21 : vector<8x8xf32>
    %23 = math.exp %22 : vector<8x8xf32>
    %cst_12 = arith.constant dense<0.000000e+00> : vector<8xf32>
    %24 = vector.multi_reduction <add>, %23, %cst_12 [1] : vector<8x8xf32> to vector<8xf32>
    %25 = vector.shape_cast %24 : vector<8xf32> to vector<8x1xf32>
    %cst_13 = arith.constant dense<0.000000e+00> : vector<8x8xf32>
    %26 = tpu.matmul %23, %17, %cst_13 {dimension_numbers = #tpu.dot_dimension_numbers<[1], [0], [0], [1], [0, 0, 1, 1], [], []>} : vector<8x8xf32>, vector<8x8xf32>, vector<8x8xf32> -> vector<8x8xf32>
    %27 = tpu.reciprocal %25 {approx = true} : vector<8x1xf32> -> vector<8x1xf32>
    %28 = vector.broadcast %27 : vector<8x1xf32> to vector<8x8xf32>
    %29 = arith.mulf %26, %28 : vector<8x8xf32>
    %c0_14 = arith.constant 0 : index
    %c0_15 = arith.constant 0 : index
    %30 = vector.load %arg20[%c0_14, %c0_15] : memref<8x32xf32, #tpu.memory_space<vmem>>, vector<8x8xf32>
    tpu.vector_store %arg20[%c0_14, %c0_15], %29 {strides = array<i32>} : memref<8x32xf32, #tpu.memory_space<vmem>>, vector<8x8xf32>,
    %31 = vector.extract_strided_slice %14 {offsets = [0, 8], sizes = [8, 8], strides = [1, 1]} : vector<8x32xf32> to vector<8x8xf32>
    %c0_16 = arith.constant 0 : index
    %c8 = arith.constant 8 : index
    %32 = vector.load %arg18[%c0_16, %c8] : memref<8x32xf32, #tpu.memory_space<vmem>>, vector<8x8xf32>
    %c0_17 = arith.constant 0 : index
    %c8_18 = arith.constant 8 : index
    %33 = vector.load %arg19[%c0_17, %c8_18] : memref<8x32xf32, #tpu.memory_space<vmem>>, vector<8x8xf32>
    %cst_19 = arith.constant dense<0.000000e+00> : vector<8x8xf32>
    %34 = tpu.matmul %31, %32, %cst_19 {dimension_numbers = #tpu.dot_dimension_numbers<[1], [1], [0], [0], [0, 0, 1, 0], [], []>} : vector<8x8xf32>, vector<8x8xf32>, vector<8x8xf32> -> vector<8x8xf32>
    %cst_20 = arith.constant dense<0xFF800000> : vector<8xf32>
    %35 = vector.multi_reduction <maximumf>, %34, %cst_20 [1] : vector<8x8xf32> to vector<8xf32>
    %36 = vector.shape_cast %35 : vector<8xf32> to vector<8x1xf32>
    %37 = vector.broadcast %36 : vector<8x1xf32> to vector<8x8xf32>
    %38 = arith.subf %34, %37 : vector<8x8xf32>
    %39 = math.exp %38 : vector<8x8xf32>
    %cst_21 = arith.constant dense<0.000000e+00> : vector<8xf32>
    %40 = vector.multi_reduction <add>, %39, %cst_21 [1] : vector<8x8xf32> to vector<8xf32>
    %41 = vector.shape_cast %40 : vector<8xf32> to vector<8x1xf32>
    %cst_22 = arith.constant dense<0.000000e+00> : vector<8x8xf32>
    %42 = tpu.matmul %39, %33, %cst_22 {dimension_numbers = #tpu.dot_dimension_numbers<[1], [0], [0], [1], [0, 0, 1, 1], [], []>} : vector<8x8xf32>, vector<8x8xf32>, vector<8x8xf32> -> vector<8x8xf32>
    %43 = tpu.reciprocal %41 {approx = true} : vector<8x1xf32> -> vector<8x1xf32>
    %44 = vector.broadcast %43 : vector<8x1xf32> to vector<8x8xf32>
    %45 = arith.mulf %42, %44 : vector<8x8xf32>
    %c0_23 = arith.constant 0 : index
    %c8_24 = arith.constant 8 : index
    %46 = vector.load %arg20[%c0_23, %c8_24] : memref<8x32xf32, #tpu.memory_space<vmem>>, vector<8x8xf32>
    tpu.vector_store %arg20[%c0_23, %c8_24], %45 {strides = array<i32>} : memref<8x32xf32, #tpu.memory_space<vmem>>, vector<8x8xf32>,
    %47 = vector.extract_strided_slice %14 {offsets = [0, 16], sizes = [8, 8], strides = [1, 1]} : vector<8x32xf32> to vector<8x8xf32>
    %c0_25 = arith.constant 0 : index
    %c16 = arith.constant 16 : index
    %48 = vector.load %arg18[%c0_25, %c16] : memref<8x32xf32, #tpu.memory_space<vmem>>, vector<8x8xf32>
    %c0_26 = arith.constant 0 : index
    %c16_27 = arith.constant 16 : index
    %49 = vector.load %arg19[%c0_26, %c16_27] : memref<8x32xf32, #tpu.memory_space<vmem>>, vector<8x8xf32>
    %cst_28 = arith.constant dense<0.000000e+00> : vector<8x8xf32>
    %50 = tpu.matmul %47, %48, %cst_28 {dimension_numbers = #tpu.dot_dimension_numbers<[1], [1], [0], [0], [0, 0, 1, 0], [], []>} : vector<8x8xf32>, vector<8x8xf32>, vector<8x8xf32> -> vector<8x8xf32>
    %cst_29 = arith.constant dense<0xFF800000> : vector<8xf32>
    %51 = vector.multi_reduction <maximumf>, %50, %cst_29 [1] : vector<8x8xf32> to vector<8xf32>
    %52 = vector.shape_cast %51 : vector<8xf32> to vector<8x1xf32>
    %53 = vector.broadcast %52 : vector<8x1xf32> to vector<8x8xf32>
    %54 = arith.subf %50, %53 : vector<8x8xf32>
    %55 = math.exp %54 : vector<8x8xf32>
    %cst_30 = arith.constant dense<0.000000e+00> : vector<8xf32>
    %56 = vector.multi_reduction <add>, %55, %cst_30 [1] : vector<8x8xf32> to vector<8xf32>
    %57 = vector.shape_cast %56 : vector<8xf32> to vector<8x1xf32>
    %cst_31 = arith.constant dense<0.000000e+00> : vector<8x8xf32>
    %58 = tpu.matmul %55, %49, %cst_31 {dimension_numbers = #tpu.dot_dimension_numbers<[1], [0], [0], [1], [0, 0, 1, 1], [], []>} : vector<8x8xf32>, vector<8x8xf32>, vector<8x8xf32> -> vector<8x8xf32>
    %59 = tpu.reciprocal %57 {approx = true} : vector<8x1xf32> -> vector<8x1xf32>
    %60 = vector.broadcast %59 : vector<8x1xf32> to vector<8x8xf32>
    %61 = arith.mulf %58, %60 : vector<8x8xf32>
    %c0_32 = arith.constant 0 : index
    %c16_33 = arith.constant 16 : index
    %62 = vector.load %arg20[%c0_32, %c16_33] : memref<8x32xf32, #tpu.memory_space<vmem>>, vector<8x8xf32>
    tpu.vector_store %arg20[%c0_32, %c16_33], %61 {strides = array<i32>} : memref<8x32xf32, #tpu.memory_space<vmem>>, vector<8x8xf32>,
    %63 = vector.extract_strided_slice %14 {offsets = [0, 24], sizes = [8, 8], strides = [1, 1]} : vector<8x32xf32> to vector<8x8xf32>
    %c0_34 = arith.constant 0 : index
    %c24 = arith.constant 24 : index
    %64 = vector.load %arg18[%c0_34, %c24] : memref<8x32xf32, #tpu.memory_space<vmem>>, vector<8x8xf32>
    %c0_35 = arith.constant 0 : index
    %c24_36 = arith.constant 24 : index
    %65 = vector.load %arg19[%c0_35, %c24_36] : memref<8x32xf32, #tpu.memory_space<vmem>>, vector<8x8xf32>
    %cst_37 = arith.constant dense<0.000000e+00> : vector<8x8xf32>
    %66 = tpu.matmul %63, %64, %cst_37 {dimension_numbers = #tpu.dot_dimension_numbers<[1], [1], [0], [0], [0, 0, 1, 0], [], []>} : vector<8x8xf32>, vector<8x8xf32>, vector<8x8xf32> -> vector<8x8xf32>
    %cst_38 = arith.constant dense<0xFF800000> : vector<8xf32>
    %67 = vector.multi_reduction <maximumf>, %66, %cst_38 [1] : vector<8x8xf32> to vector<8xf32>
    %68 = vector.shape_cast %67 : vector<8xf32> to vector<8x1xf32>
    %69 = vector.broadcast %68 : vector<8x1xf32> to vector<8x8xf32>
    %70 = arith.subf %66, %69 : vector<8x8xf32>
    %71 = math.exp %70 : vector<8x8xf32>
    %cst_39 = arith.constant dense<0.000000e+00> : vector<8xf32>
    %72 = vector.multi_reduction <add>, %71, %cst_39 [1] : vector<8x8xf32> to vector<8xf32>
    %73 = vector.shape_cast %72 : vector<8xf32> to vector<8x1xf32>
    %cst_40 = arith.constant dense<0.000000e+00> : vector<8x8xf32>
    %74 = tpu.matmul %71, %65, %cst_40 {dimension_numbers = #tpu.dot_dimension_numbers<[1], [0], [0], [1], [0, 0, 1, 1], [], []>} : vector<8x8xf32>, vector<8x8xf32>, vector<8x8xf32> -> vector<8x8xf32>
    %75 = tpu.reciprocal %73 {approx = true} : vector<8x1xf32> -> vector<8x1xf32>
    %76 = vector.broadcast %75 : vector<8x1xf32> to vector<8x8xf32>
    %77 = arith.mulf %74, %76 : vector<8x8xf32>
    %c0_41 = arith.constant 0 : index
    %c24_42 = arith.constant 24 : index
    %78 = vector.load %arg20[%c0_41, %c24_42] : memref<8x32xf32, #tpu.memory_space<vmem>>, vector<8x8xf32>
    tpu.vector_store %arg20[%c0_41, %c24_42], %77 {strides = array<i32>} : memref<8x32xf32, #tpu.memory_space<vmem>>, vector<8x8xf32>,
    %c0_43 = arith.constant 0 : index
    %c0_44 = arith.constant 0 : index
    %79 = vector.load %arg20[%c0_43, %c0_44] : memref<8x32xf32, #tpu.memory_space<vmem>>, vector<8x32xf32>
    %c0_45 = arith.constant 0 : index
    %c0_46 = arith.constant 0 : index
    %80 = vector.load %arg9[%c0_45, %c0_46] : memref<32x32xf32, #tpu.memory_space<vmem>>, vector<32x32xf32>
    %cst_47 = arith.constant dense<0.000000e+00> : vector<8x32xf32>
    %81 = tpu.matmul %79, %80, %cst_47 {dimension_numbers = #tpu.dot_dimension_numbers<[1], [0], [0], [1], [0, 0, 1, 1], [], []>} : vector<8x32xf32>, vector<32x32xf32>, vector<8x32xf32> -> vector<8x32xf32>
    %c0_48 = arith.constant 0 : index
    %c0_49 = arith.constant 0 : index
    %82 = vector.load %arg10[%c0_48, %c0_49] : memref<1x32xf32, #tpu.memory_space<vmem>>, vector<1x32xf32>
    %83 = vector.shape_cast %82 : vector<1x32xf32> to vector<32xf32>
    %84 = vector.shape_cast %83 : vector<32xf32> to vector<1x32xf32>
    %85 = vector.broadcast %84 : vector<1x32xf32> to vector<8x32xf32>
    %86 = arith.addf %81, %85 : vector<8x32xf32>
    %87 = arith.addf %7, %86 : vector<8x32xf32>
    %c0_50 = arith.constant 0 : index
    %c0_51 = arith.constant 0 : index
    %88 = vector.load %arg11[%c0_50, %c0_51] : memref<1x32xf32, #tpu.memory_space<vmem>>, vector<1x32xf32>
    %89 = vector.shape_cast %88 : vector<1x32xf32> to vector<32xf32>
    %90 = arith.mulf %87, %87 : vector<8x32xf32>
    %cst_52 = arith.constant dense<0.000000e+00> : vector<8xf32>
    %91 = vector.multi_reduction <add>, %90, %cst_52 [1] : vector<8x32xf32> to vector<8xf32>
    %92 = vector.shape_cast %91 : vector<8xf32> to vector<8x1xf32>
    %cst_53 = arith.constant 3.200000e+01 : f32
    %93 = vector.broadcast %cst_53 : f32 to vector<8x1xf32>
    %94 = arith.divf %92, %93 : vector<8x1xf32>
    %cst_54 = arith.constant 1.1920929E-7 : f32
    %95 = vector.broadcast %cst_54 : f32 to vector<8x1xf32>
    %96 = arith.addf %94, %95 : vector<8x1xf32>
    %97 = math.rsqrt %96 : vector<8x1xf32>
    %98 = vector.broadcast %97 : vector<8x1xf32> to vector<8x32xf32>
    %99 = arith.mulf %87, %98 : vector<8x32xf32>
    %100 = vector.shape_cast %89 : vector<32xf32> to vector<1x32xf32>
    %101 = vector.broadcast %100 : vector<1x32xf32> to vector<8x32xf32>
    %102 = arith.mulf %99, %101 : vector<8x32xf32>
    %c0_55 = arith.constant 0 : index
    %c0_56 = arith.constant 0 : index
    %103 = vector.load %arg13[%c0_55, %c0_56] : memref<32x64xf32, #tpu.memory_space<vmem>>, vector<32x64xf32>
    %cst_57 = arith.constant dense<0.000000e+00> : vector<8x64xf32>
    %104 = tpu.matmul %102, %103, %cst_57 {dimension_numbers = #tpu.dot_dimension_numbers<[1], [0], [0], [1], [0, 0, 1, 1], [], []>} : vector<8x32xf32>, vector<32x64xf32>, vector<8x64xf32> -> vector<8x64xf32>
    %c0_58 = arith.constant 0 : index
    %c0_59 = arith.constant 0 : index
    %105 = vector.load %arg14[%c0_58, %c0_59] : memref<1x64xf32, #tpu.memory_space<vmem>>, vector<1x64xf32>
    %106 = vector.shape_cast %105 : vector<1x64xf32> to vector<64xf32>
    %107 = vector.shape_cast %106 : vector<64xf32> to vector<1x64xf32>
    %108 = vector.broadcast %107 : vector<1x64xf32> to vector<8x64xf32>
    %109 = arith.addf %104, %108 : vector<8x64xf32>
    %110 = arith.negf %109 : vector<8x64xf32>
    %111 = math.exp %110 : vector<8x64xf32>
    %cst_60 = arith.constant 1.000000e+00 : f32
    %112 = vector.broadcast %cst_60 : f32 to vector<8x64xf32>
    %113 = arith.addf %112, %111 : vector<8x64xf32>
    %114 = arith.divf %112, %113 : vector<8x64xf32>
    %115 = arith.mulf %109, %114 : vector<8x64xf32>
    %c0_61 = arith.constant 0 : index
    %c0_62 = arith.constant 0 : index
    %116 = vector.load %arg15[%c0_61, %c0_62] : memref<64x32xf32, #tpu.memory_space<vmem>>, vector<64x32xf32>
    %cst_63 = arith.constant dense<0.000000e+00> : vector<8x32xf32>
    %117 = tpu.matmul %115, %116, %cst_63 {dimension_numbers = #tpu.dot_dimension_numbers<[1], [0], [0], [1], [0, 0, 1, 1], [], []>} : vector<8x64xf32>, vector<64x32xf32>, vector<8x32xf32> -> vector<8x32xf32>
    %c0_64 = arith.constant 0 : index
    %c0_65 = arith.constant 0 : index
    %118 = vector.load %arg16[%c0_64, %c0_65] : memref<1x32xf32, #tpu.memory_space<vmem>>, vector<1x32xf32>
    %119 = vector.shape_cast %118 : vector<1x32xf32> to vector<32xf32>
    %120 = vector.shape_cast %119 : vector<32xf32> to vector<1x32xf32>
    %121 = vector.broadcast %120 : vector<1x32xf32> to vector<8x32xf32>
    %122 = arith.addf %117, %121 : vector<8x32xf32>
    %123 = arith.addf %102, %122 : vector<8x32xf32>
    %c0_66 = arith.constant 0 : index
    %c0_67 = arith.constant 0 : index
    %124 = vector.load %arg12[%c0_66, %c0_67] : memref<1x32xf32, #tpu.memory_space<vmem>>, vector<1x32xf32>
    %125 = vector.shape_cast %124 : vector<1x32xf32> to vector<32xf32>
    %126 = arith.mulf %123, %123 : vector<8x32xf32>
    %cst_68 = arith.constant dense<0.000000e+00> : vector<8xf32>
    %127 = vector.multi_reduction <add>, %126, %cst_68 [1] : vector<8x32xf32> to vector<8xf32>
    %128 = vector.shape_cast %127 : vector<8xf32> to vector<8x1xf32>
    %cst_69 = arith.constant 3.200000e+01 : f32
    %129 = vector.broadcast %cst_69 : f32 to vector<8x1xf32>
    %130 = arith.divf %128, %129 : vector<8x1xf32>
    %cst_70 = arith.constant 1.1920929E-7 : f32
    %131 = vector.broadcast %cst_70 : f32 to vector<8x1xf32>
    %132 = arith.addf %130, %131 : vector<8x1xf32>
    %133 = math.rsqrt %132 : vector<8x1xf32>
    %134 = vector.broadcast %133 : vector<8x1xf32> to vector<8x32xf32>
    %135 = arith.mulf %123, %134 : vector<8x32xf32>
    %136 = vector.shape_cast %125 : vector<32xf32> to vector<1x32xf32>
    %137 = vector.broadcast %136 : vector<1x32xf32> to vector<8x32xf32>
    %138 = arith.mulf %135, %137 : vector<8x32xf32>
    %c0_71 = arith.constant 0 : index
    %c0_72 = arith.constant 0 : index
    %c0_73 = arith.constant 0 : index
    %139 = vector.load %arg17[%c0_71, %c0_72, %c0_73] : memref<1x8x32xf32, #tpu.memory_space<vmem>>, vector<1x8x32xf32>
    %140 = vector.shape_cast %139 : vector<1x8x32xf32> to vector<8x32xf32>
    %141 = vector.shape_cast %138 : vector<8x32xf32> to vector<1x8x32xf32>
    tpu.vector_store %arg17[%c0_71, %c0_72, %c0_73], %141 {strides = array<i32>} : memref<1x8x32xf32, #tpu.memory_space<vmem>>, vector<1x8x32xf32>,
    return
  }
  func.func @transform_0(%arg0: i32, %arg1: i32) -> (i32, i32, i32) {
    %c0_i32 = arith.constant 0 : i32
    %c0_i32_0 = arith.constant 0 : i32
    %c0_i32_1 = arith.constant 0 : i32
    return %arg0, %c0_i32, %c0_i32_0 : i32, i32, i32
  }
  func.func @transform_1(%arg0: i32, %arg1: i32) -> (i32, i32) {
    %c0_i32 = arith.constant 0 : i32
    %c0_i32_0 = arith.constant 0 : i32
    %c0_i32_1 = arith.constant 0 : i32
    return %c0_i32, %c0_i32_0 : i32, i32
  }
  func.func @transform_2(%arg0: i32, %arg1: i32) -> (i32, i32) {
    %c0_i32 = arith.constant 0 : i32
    %c0_i32_0 = arith.constant 0 : i32
    %c0_i32_1 = arith.constant 0 : i32
    return %c0_i32, %c0_i32_0 : i32, i32
  }
  func.func @transform_3(%arg0: i32, %arg1: i32) -> (i32, i32) {
    %c0_i32 = arith.constant 0 : i32
    %c0_i32_0 = arith.constant 0 : i32
    %c0_i32_1 = arith.constant 0 : i32
    return %c0_i32, %c0_i32_0 : i32, i32
  }
  func.func @transform_4(%arg0: i32, %arg1: i32) -> (i32, i32) {
    %c0_i32 = arith.constant 0 : i32
    %c0_i32_0 = arith.constant 0 : i32
    %c0_i32_1 = arith.constant 0 : i32
    return %c0_i32, %c0_i32_0 : i32, i32
  }
  func.func @transform_5(%arg0: i32, %arg1: i32) -> (i32, i32) {
    %c0_i32 = arith.constant 0 : i32
    %c0_i32_0 = arith.constant 0 : i32
    %c0_i32_1 = arith.constant 0 : i32
    return %c0_i32, %c0_i32_0 : i32, i32
  }
  func.func @transform_6(%arg0: i32, %arg1: i32) -> (i32, i32) {
    %c0_i32 = arith.constant 0 : i32
    %c0_i32_0 = arith.constant 0 : i32
    %c0_i32_1 = arith.constant 0 : i32
    return %c0_i32, %c0_i32_0 : i32, i32
  }
  func.func @transform_7(%arg0: i32, %arg1: i32) -> (i32, i32) {
    %c0_i32 = arith.constant 0 : i32
    %c0_i32_0 = arith.constant 0 : i32
    %c0_i32_1 = arith.constant 0 : i32
    return %c0_i32, %c0_i32_0 : i32, i32
  }
  func.func @transform_8(%arg0: i32, %arg1: i32) -> (i32, i32) {
    %c0_i32 = arith.constant 0 : i32
    %c0_i32_0 = arith.constant 0 : i32
    %c0_i32_1 = arith.constant 0 : i32
    return %c0_i32, %c0_i32_0 : i32, i32
  }
  func.func @transform_9(%arg0: i32, %arg1: i32) -> (i32, i32) {
    %c0_i32 = arith.constant 0 : i32
    %c0_i32_0 = arith.constant 0 : i32
    %c0_i32_1 = arith.constant 0 : i32
    return %c0_i32, %c0_i32_0 : i32, i32
  }
  func.func @transform_10(%arg0: i32, %arg1: i32) -> (i32, i32) {
    %c0_i32 = arith.constant 0 : i32
    %c0_i32_0 = arith.constant 0 : i32
    %c0_i32_1 = arith.constant 0 : i32
    return %c0_i32, %c0_i32_0 : i32, i32
  }
  func.func @transform_11(%arg0: i32, %arg1: i32) -> (i32, i32) {
    %c0_i32 = arith.constant 0 : i32
    %c0_i32_0 = arith.constant 0 : i32
    %c0_i32_1 = arith.constant 0 : i32
    return %c0_i32, %c0_i32_0 : i32, i32
  }
  func.func @transform_12(%arg0: i32, %arg1: i32) -> (i32, i32) {
    %c0_i32 = arith.constant 0 : i32
    %c0_i32_0 = arith.constant 0 : i32
    %c0_i32_1 = arith.constant 0 : i32
    return %c0_i32, %c0_i32_0 : i32, i32
  }
  func.func @transform_13(%arg0: i32, %arg1: i32) -> (i32, i32) {
    %c0_i32 = arith.constant 0 : i32
    %c0_i32_0 = arith.constant 0 : i32
    %c0_i32_1 = arith.constant 0 : i32
    return %c0_i32, %c0_i32_0 : i32, i32
  }
  func.func @transform_14(%arg0: i32, %arg1: i32) -> (i32, i32) {
    %c0_i32 = arith.constant 0 : i32
    %c0_i32_0 = arith.constant 0 : i32
    %c0_i32_1 = arith.constant 0 : i32
    return %c0_i32, %c0_i32_0 : i32, i32
  }
  func.func @transform_15(%arg0: i32, %arg1: i32) -> (i32, i32, i32) {
    %c0_i32 = arith.constant 0 : i32
    %c0_i32_0 = arith.constant 0 : i32
    return %arg0, %arg1, %c0_i32 : i32, i32, i32
  }
}

</mosaic_0001>

<llo_original>
// kernel: tpu_custom_call.1
$region0: #{tpu_custom_call.1}
  #allocation0 [shape = 'u32[]', space=smem, size = 0x4, offset = 0x4, fixed_abs, tag = 'smem constant byte address 0x4 - core index']
  #allocation1 [shape = 'u32[72,128]{1,0:T(1,128)}', space=vmem, size = 0x9000, scoped, tag = 'internal scratch']
  #allocation2 [shape = 'f32[8,32]{1,0:T(8,128)}', space=vmem, size = 0x1000, scoped, tag = 'scratch operand']
  #allocation3 [shape = 'f32[8,32]{1,0:T(8,128)}', space=vmem, size = 0x1000, scoped, tag = 'scratch operand']
  #allocation4 [shape = 'f32[8,32]{1,0:T(8,128)}', space=vmem, size = 0x1000, scoped, tag = 'scratch operand']
  %s0 = inlined_call_operand.hbm [shape: f32[2,8,32], index: 0, kind: input, shape index: {}]
  %s1 = inlined_call_operand.vmem [shape: f32[32,32], index: 1, kind: input, shape index: {}]
  %s2 = inlined_call_operand.vmem [shape: f32[1,32], index: 2, kind: input, shape index: {}]
  %s3 = inlined_call_operand.vmem [shape: f32[32,32], index: 3, kind: input, shape index: {}]
  %s4 = inlined_call_operand.vmem [shape: f32[1,32], index: 4, kind: input, shape index: {}]
  %s5 = inlined_call_operand.vmem [shape: f32[32,32], index: 5, kind: input, shape index: {}]
  %s6 = inlined_call_operand.vmem [shape: f32[1,32], index: 6, kind: input, shape index: {}]
  %s7 = inlined_call_operand.hbm [shape: f32[32,32], index: 7, kind: input, shape index: {}]
  %s8 = inlined_call_operand.vmem [shape: f32[1,32], index: 8, kind: input, shape index: {}]
  %s9 = inlined_call_operand.vmem [shape: f32[1,32], index: 9, kind: input, shape index: {}]
  %s10 = inlined_call_operand.vmem [shape: f32[1,32], index: 10, kind: input, shape index: {}]
  %s11 = inlined_call_operand.hbm [shape: f32[32,64], index: 11, kind: input, shape index: {}]
  %s12 = inlined_call_operand.vmem [shape: f32[1,64], index: 12, kind: input, shape index: {}]
  %s13 = inlined_call_operand.vmem [shape: f32[64,32], index: 13, kind: input, shape index: {}]
  %s14 = inlined_call_operand.vmem [shape: f32[1,32], index: 14, kind: input, shape index: {}]
  %s15 = inlined_call_operand.hbm [shape: f32[2,8,32], index: 15, kind: output, shape index: {}]
  %s16 = sld [smem:[#allocation0]]
  $region109: #{tpu_custom_call.1} parent=0
    _
  %s18 = ssub.s32 1, %s16
  %s19 = scalar_select 0, %s18, %s16
  $region1: #{tpu_custom_call.1} parent=0
    #allocation5 [shape = 'u8[8192]{0}', space=vmem, size = 0x2000, scoped, tag = 'input window, operand 0']
    #allocation6 [shape = 's32[2]{0}', space=sflag, size = 0x8, scoped, tag = 'scoped memory for tpu_custom_call.1']
    #allocation7 [shape = 's32[2]{0}', space=sflag, size = 0x8, scoped, tag = 'scoped memory for tpu_custom_call.1']
    #allocation8 [shape = 'u8[16384]{0}', space=vmem, size = 0x4000, scoped, tag = 'input window, operand 7, single buffered']
    #allocation9 [shape = 's32[1]{0}', space=sflag, size = 0x4, scoped, tag = 'scoped memory for tpu_custom_call.1']
    #allocation10 [shape = 'u8[16384]{0}', space=vmem, size = 0x4000, scoped, tag = 'input window, operand 11, single buffered']
    #allocation11 [shape = 'u8[8192]{0}', space=vmem, size = 0x2000, scoped, tag = 'output window, operand 0']
    %20 = vsyncpa [#allocation6], 0
    %s21 = scalar_lea.sflag [#allocation6], 1
    %22 = vsyncpa %s21, 0
    %23 = vsyncpa [#allocation9], 0
    %24 = vsyncpa [#allocation7], 0
    %s25 = scalar_lea.sflag [#allocation7], 1
    %26 = vsyncpa %s25, 0
    loop: start=0, step=1, limit=4
    $region2: #{tpu_custom_call.1} parent=1 // loop_pre_header
      _
    $region3: #{tpu_custom_call.1} parent=1 // loop_header
      %s28 = sphi 0, %s32
      %p29 = scmp.ge.s32.totalorder %s28, 4
      %s35 = sphi 0, %s47
      %s36 = sphi 0, %s43
      %s37 = sphi 0, %s35
      %s38 = sphi 0, %s36
      %s39 = sphi 0, %s37
      %s40 = sphi 0, %s38
      %s50 = sphi 0, %s52
      %s53 = sphi 0, %s50
      %s54 = sphi 0, %s53
      %s70 = sphi 0, %s54
      %s74 = sphi 0, %s74
      %s76 = sphi 0, %s74
      %s77 = sphi 0, %s76
      %s91 = sphi 0, %s77
      %s95 = sphi 0, %s95
      %s97 = sphi 0, %s95
      %s98 = sphi 0, %s97
      %s112 = sphi 0, %s98
      %s116 = sphi 0, %s116
      %s118 = sphi 0, %s116
      %s119 = sphi 0, %s118
      %s133 = sphi 0, %s119
      %s137 = sphi 0, %s137
      %s139 = sphi 0, %s137
      %s140 = sphi 0, %s139
      %s154 = sphi 0, %s140
      %s158 = sphi 0, %s158
      %s160 = sphi 0, %s158
      %s161 = sphi 0, %s160
      %s175 = sphi 0, %s161
      %s179 = sphi 0, %s179
      %s181 = sphi 0, %s179
      %s182 = sphi 0, %s181
      %s196 = sphi 0, %s182
      %s200 = sphi 0, %s200
      %s202 = sphi 0, %s200
      %s203 = sphi 0, %s202
      %s217 = sphi 0, %s203
      %s221 = sphi 0, %s221
      %s223 = sphi 0, %s221
      %s224 = sphi 0, %s223
      %s238 = sphi 0, %s224
      %s242 = sphi 0, %s242
      %s244 = sphi 0, %s242
      %s245 = sphi 0, %s244
      %s259 = sphi 0, %s245
      %s263 = sphi 0, %s263
      %s265 = sphi 0, %s263
      %s266 = sphi 0, %s265
      %s280 = sphi 0, %s266
      %s284 = sphi 0, %s284
      %s286 = sphi 0, %s284
      %s287 = sphi 0, %s286
      %s301 = sphi 0, %s287
      %s305 = sphi 0, %s305
      %s307 = sphi 0, %s305
      %s308 = sphi 0, %s307
      %s322 = sphi 0, %s308
      %s326 = sphi 0, %s326
      %s328 = sphi 0, %s326
      %s329 = sphi 0, %s328
      %s343 = sphi 0, %s329
      %s347 = sphi 0, %s347
      %s349 = sphi 0, %s347
      %s350 = sphi 0, %s349
      %s364 = sphi 0, %s350
      %s372 = sphi 0, %s374
      %s375 = sphi 0, %s372
      %s376 = sphi 0, %s375
      %s392 = sphi 0, %s376
    $region4: #{tpu_custom_call.1} parent=1 // loop_header_branch
      %31 = sbr.rel (%p29) target = $region8
    $region5: #{tpu_custom_call.1} parent=1 // loop_body
      %s33 = ssub.s32 %s28, 1
      %s34 = ssub.s32 %s28, 2
      %s41 = sadd.s32 1, %s36
      %p42 = scmp.ge.s32.totalorder %s41, 1
      %s43 = scalar_select %p42, 0, %s41
      %s44 = sadd.s32 1, %s35
      %s45 = scalar_select %p42, %s44, %s35
      %p46 = scmp.ge.s32.totalorder %s45, 2
      %s47 = scalar_select %p46, 0, %s45
      %s48 = ssub.s32 %s35, %s47
      %p49 = scmp.eq.s32.totalorder %s48, 0
      %s51 = sadd.s32 %s50, 1
      %s52 = scalar_select %p49, %s50, %s51
      %p55 = pneg %p49
      %p56 = scmp.eq.s32.totalorder %s28, 1
      %p57 = por %p55, %p56
      %p58 = scmp.ne.s32.totalorder %s50, %s53
      %p59 = scmp.eq.s32.totalorder %s28, 0
      %p60 = por %p58, %p59
      %p61 = scmp.ne.s32.totalorder %s50, %s53
      %p62 = scmp.eq.s32.totalorder %s33, 1
      %p63 = por %p61, %p62
      %p64 = scmp.ne.s32.totalorder %s53, %s54
      %p65 = scmp.eq.s32.totalorder %s33, 0
      %p66 = por %p64, %p65
      %p67 = scmp.ne.s32.totalorder %s53, %s54
      %p68 = scmp.eq.s32.totalorder %s34, 1
      %p69 = por %p67, %p68
      %p71 = scmp.ne.s32.totalorder %s54, %s70
      %p72 = scmp.eq.s32.totalorder %s34, 0
      %p73 = por %p71, %p72
      %s75 = sadd.s32 %s74, 1
      %p78 = scmp.eq.s32.totalorder %s28, 1
      %p79 = scmp.ne.s32.totalorder %s74, %s76
      %p80 = scmp.eq.s32.totalorder %s28, 0
      %p81 = por %p79, %p80
      %p82 = scmp.ne.s32.totalorder %s74, %s76
      %p83 = scmp.eq.s32.totalorder %s33, 1
      %p84 = por %p82, %p83
      %p85 = scmp.ne.s32.totalorder %s76, %s77
      %p86 = scmp.eq.s32.totalorder %s33, 0
      %p87 = por %p85, %p86
      %p88 = scmp.ne.s32.totalorder %s76, %s77
      %p89 = scmp.eq.s32.totalorder %s34, 1
      %p90 = por %p88, %p89
      %p92 = scmp.ne.s32.totalorder %s77, %s91
      %p93 = scmp.eq.s32.totalorder %s34, 0
      %p94 = por %p92, %p93
      %s96 = sadd.s32 %s95, 1
      %p99 = scmp.eq.s32.totalorder %s28, 1
      %p100 = scmp.ne.s32.totalorder %s95, %s97
      %p101 = scmp.eq.s32.totalorder %s28, 0
      %p102 = por %p100, %p101
      %p103 = scmp.ne.s32.totalorder %s95, %s97
      %p104 = scmp.eq.s32.totalorder %s33, 1
      %p105 = por %p103, %p104
      %p106 = scmp.ne.s32.totalorder %s97, %s98
      %p107 = scmp.eq.s32.totalorder %s33, 0
      %p108 = por %p106, %p107
      %p109 = scmp.ne.s32.totalorder %s97, %s98
      %p110 = scmp.eq.s32.totalorder %s34, 1
      %p111 = por %p109, %p110
      %p113 = scmp.ne.s32.totalorder %s98, %s112
      %p114 = scmp.eq.s32.totalorder %s34, 0
      %p115 = por %p113, %p114
      %s117 = sadd.s32 %s116, 1
      %p120 = scmp.eq.s32.totalorder %s28, 1
      %p121 = scmp.ne.s32.totalorder %s116, %s118
      %p122 = scmp.eq.s32.totalorder %s28, 0
      %p123 = por %p121, %p122
      %p124 = scmp.ne.s32.totalorder %s116, %s118
      %p125 = scmp.eq.s32.totalorder %s33, 1
      %p126 = por %p124, %p125
      %p127 = scmp.ne.s32.totalorder %s118, %s119
      %p128 = scmp.eq.s32.totalorder %s33, 0
      %p129 = por %p127, %p128
      %p130 = scmp.ne.s32.totalorder %s118, %s119
      %p131 = scmp.eq.s32.totalorder %s34, 1
      %p132 = por %p130, %p131
      %p134 = scmp.ne.s32.totalorder %s119, %s133
      %p135 = scmp.eq.s32.totalorder %s34, 0
      %p136 = por %p134, %p135
      %s138 = sadd.s32 %s137, 1
      %p141 = scmp.eq.s32.totalorder %s28, 1
      %p142 = scmp.ne.s32.totalorder %s137, %s139
      %p143 = scmp.eq.s32.totalorder %s28, 0
      %p144 = por %p142, %p143
      %p145 = scmp.ne.s32.totalorder %s137, %s139
      %p146 = scmp.eq.s32.totalorder %s33, 1
      %p147 = por %p145, %p146
      %p148 = scmp.ne.s32.totalorder %s139, %s140
      %p149 = scmp.eq.s32.totalorder %s33, 0
      %p150 = por %p148, %p149
      %p151 = scmp.ne.s32.totalorder %s139, %s140
      %p152 = scmp.eq.s32.totalorder %s34, 1
      %p153 = por %p151, %p152
      %p155 = scmp.ne.s32.totalorder %s140, %s154
      %p156 = scmp.eq.s32.totalorder %s34, 0
      %p157 = por %p155, %p156
      %s159 = sadd.s32 %s158, 1
      %p162 = scmp.eq.s32.totalorder %s28, 1
      %p163 = scmp.ne.s32.totalorder %s158, %s160
      %p164 = scmp.eq.s32.totalorder %s28, 0
      %p165 = por %p163, %p164
      %p166 = scmp.ne.s32.totalorder %s158, %s160
      %p167 = scmp.eq.s32.totalorder %s33, 1
      %p168 = por %p166, %p167
      %p169 = scmp.ne.s32.totalorder %s160, %s161
      %p170 = scmp.eq.s32.totalorder %s33, 0
      %p171 = por %p169, %p170
      %p172 = scmp.ne.s32.totalorder %s160, %s161
      %p173 = scmp.eq.s32.totalorder %s34, 1
      %p174 = por %p172, %p173
      %p176 = scmp.ne.s32.totalorder %s161, %s175
      %p177 = scmp.eq.s32.totalorder %s34, 0
      %p178 = por %p176, %p177
      %s180 = sadd.s32 %s179, 1
      %p183 = scmp.eq.s32.totalorder %s28, 1
      %p184 = scmp.ne.s32.totalorder %s179, %s181
      %p185 = scmp.eq.s32.totalorder %s28, 0
      %p186 = por %p184, %p185
      %p187 = scmp.ne.s32.totalorder %s179, %s181
      %p188 = scmp.eq.s32.totalorder %s33, 1
      %p189 = por %p187, %p188
      %p190 = scmp.ne.s32.totalorder %s181, %s182
      %p191 = scmp.eq.s32.totalorder %s33, 0
      %p192 = por %p190, %p191
      %p193 = scmp.ne.s32.totalorder %s181, %s182
      %p194 = scmp.eq.s32.totalorder %s34, 1
      %p195 = por %p193, %p194
      %p197 = scmp.ne.s32.totalorder %s182, %s196
      %p198 = scmp.eq.s32.totalorder %s34, 0
      %p199 = por %p197, %p198
      %s201 = sadd.s32 %s200, 1
      %p204 = scmp.eq.s32.totalorder %s28, 1
      %p205 = scmp.ne.s32.totalorder %s200, %s202
      %p206 = scmp.eq.s32.totalorder %s28, 0
      %p207 = por %p205, %p206
      %p208 = scmp.ne.s32.totalorder %s200, %s202
      %p209 = scmp.eq.s32.totalorder %s33, 1
      %p210 = por %p208, %p209
      %p211 = scmp.ne.s32.totalorder %s202, %s203
      %p212 = scmp.eq.s32.totalorder %s33, 0
      %p213 = por %p211, %p212
      %p214 = scmp.ne.s32.totalorder %s202, %s203
      %p215 = scmp.eq.s32.totalorder %s34, 1
      %p216 = por %p214, %p215
      %p218 = scmp.ne.s32.totalorder %s203, %s217
      %p219 = scmp.eq.s32.totalorder %s34, 0
      %p220 = por %p218, %p219
      %s222 = sadd.s32 %s221, 1
      %p225 = scmp.eq.s32.totalorder %s28, 1
      %p226 = scmp.ne.s32.totalorder %s221, %s223
      %p227 = scmp.eq.s32.totalorder %s28, 0
      %p228 = por %p226, %p227
      %p229 = scmp.ne.s32.totalorder %s221, %s223
      %p230 = scmp.eq.s32.totalorder %s33, 1
      %p231 = por %p229, %p230
      %p232 = scmp.ne.s32.totalorder %s223, %s224
      %p233 = scmp.eq.s32.totalorder %s33, 0
      %p234 = por %p232, %p233
      %p235 = scmp.ne.s32.totalorder %s223, %s224
      %p236 = scmp.eq.s32.totalorder %s34, 1
      %p237 = por %p235, %p236
      %p239 = scmp.ne.s32.totalorder %s224, %s238
      %p240 = scmp.eq.s32.totalorder %s34, 0
      %p241 = por %p239, %p240
      %s243 = sadd.s32 %s242, 1
      %p246 = scmp.eq.s32.totalorder %s28, 1
      %p247 = scmp.ne.s32.totalorder %s242, %s244
      %p248 = scmp.eq.s32.totalorder %s28, 0
      %p249 = por %p247, %p248
      %p250 = scmp.ne.s32.totalorder %s242, %s244
      %p251 = scmp.eq.s32.totalorder %s33, 1
      %p252 = por %p250, %p251
      %p253 = scmp.ne.s32.totalorder %s244, %s245
      %p254 = scmp.eq.s32.totalorder %s33, 0
      %p255 = por %p253, %p254
      %p256 = scmp.ne.s32.totalorder %s244, %s245
      %p257 = scmp.eq.s32.totalorder %s34, 1
      %p258 = por %p256, %p257
      %p260 = scmp.ne.s32.totalorder %s245, %s259
      %p261 = scmp.eq.s32.totalorder %s34, 0
      %p262 = por %p260, %p261
      %s264 = sadd.s32 %s263, 1
      %p267 = scmp.eq.s32.totalorder %s28, 1
      %p268 = scmp.ne.s32.totalorder %s263, %s265
      %p269 = scmp.eq.s32.totalorder %s28, 0
      %p270 = por %p268, %p269
      %p271 = scmp.ne.s32.totalorder %s263, %s265
      %p272 = scmp.eq.s32.totalorder %s33, 1
      %p273 = por %p271, %p272
      %p274 = scmp.ne.s32.totalorder %s265, %s266
      %p275 = scmp.eq.s32.totalorder %s33, 0
      %p276 = por %p274, %p275
      %p277 = scmp.ne.s32.totalorder %s265, %s266
      %p278 = scmp.eq.s32.totalorder %s34, 1
      %p279 = por %p277, %p278
      %p281 = scmp.ne.s32.totalorder %s266, %s280
      %p282 = scmp.eq.s32.totalorder %s34, 0
      %p283 = por %p281, %p282
      %s285 = sadd.s32 %s284, 1
      %p288 = scmp.eq.s32.totalorder %s28, 1
      %p289 = scmp.ne.s32.totalorder %s284, %s286
      %p290 = scmp.eq.s32.totalorder %s28, 0
      %p291 = por %p289, %p290
      %p292 = scmp.ne.s32.totalorder %s284, %s286
      %p293 = scmp.eq.s32.totalorder %s33, 1
      %p294 = por %p292, %p293
      %p295 = scmp.ne.s32.totalorder %s286, %s287
      %p296 = scmp.eq.s32.totalorder %s33, 0
      %p297 = por %p295, %p296
      %p298 = scmp.ne.s32.totalorder %s286, %s287
      %p299 = scmp.eq.s32.totalorder %s34, 1
      %p300 = por %p298, %p299
      %p302 = scmp.ne.s32.totalorder %s287, %s301
      %p303 = scmp.eq.s32.totalorder %s34, 0
      %p304 = por %p302, %p303
      %s306 = sadd.s32 %s305, 1
      %p309 = scmp.eq.s32.totalorder %s28, 1
      %p310 = scmp.ne.s32.totalorder %s305, %s307
      %p311 = scmp.eq.s32.totalorder %s28, 0
      %p312 = por %p310, %p311
      %p313 = scmp.ne.s32.totalorder %s305, %s307
      %p314 = scmp.eq.s32.totalorder %s33, 1
      %p315 = por %p313, %p314
      %p316 = scmp.ne.s32.totalorder %s307, %s308
      %p317 = scmp.eq.s32.totalorder %s33, 0
      %p318 = por %p316, %p317
      %p319 = scmp.ne.s32.totalorder %s307, %s308
      %p320 = scmp.eq.s32.totalorder %s34, 1
      %p321 = por %p319, %p320
      %p323 = scmp.ne.s32.totalorder %s308, %s322
      %p324 = scmp.eq.s32.totalorder %s34, 0
      %p325 = por %p323, %p324
      %s327 = sadd.s32 %s326, 1
      %p330 = scmp.eq.s32.totalorder %s28, 1
      %p331 = scmp.ne.s32.totalorder %s326, %s328
      %p332 = scmp.eq.s32.totalorder %s28, 0
      %p333 = por %p331, %p332
      %p334 = scmp.ne.s32.totalorder %s326, %s328
      %p335 = scmp.eq.s32.totalorder %s33, 1
      %p336 = por %p334, %p335
      %p337 = scmp.ne.s32.totalorder %s328, %s329
      %p338 = scmp.eq.s32.totalorder %s33, 0
      %p339 = por %p337, %p338
      %p340 = scmp.ne.s32.totalorder %s328, %s329
      %p341 = scmp.eq.s32.totalorder %s34, 1
      %p342 = por %p340, %p341
      %p344 = scmp.ne.s32.totalorder %s329, %s343
      %p345 = scmp.eq.s32.totalorder %s34, 0
      %p346 = por %p344, %p345
      %s348 = sadd.s32 %s347, 1
      %p351 = scmp.eq.s32.totalorder %s28, 1
      %p352 = scmp.ne.s32.totalorder %s347, %s349
      %p353 = scmp.eq.s32.totalorder %s28, 0
      %p354 = por %p352, %p353
      %p355 = scmp.ne.s32.totalorder %s347, %s349
      %p356 = scmp.eq.s32.totalorder %s33, 1
      %p357 = por %p355, %p356
      %p358 = scmp.ne.s32.totalorder %s349, %s350
      %p359 = scmp.eq.s32.totalorder %s33, 0
      %p360 = por %p358, %p359
      %p361 = scmp.ne.s32.totalorder %s349, %s350
      %p362 = scmp.eq.s32.totalorder %s34, 1
      %p363 = por %p361, %p362
      %p365 = scmp.ne.s32.totalorder %s350, %s364
      %p366 = scmp.eq.s32.totalorder %s34, 0
      %p367 = por %p365, %p366
      %s368 = ssub.s32 %s35, %s47
      %s369 = ssub.s32 %s36, %s43
      %s370 = sor.u32 %s368, %s369
      %p371 = scmp.eq.s32.totalorder %s370, 0
      %s373 = sadd.s32 %s372, 1
      %s374 = scalar_select %p371, %s372, %s373
      %p377 = pneg %p371
      %p378 = scmp.eq.s32.totalorder %s28, 1
      %p379 = por %p377, %p378
      %p380 = scmp.ne.s32.totalorder %s372, %s375
      %p381 = scmp.eq.s32.totalorder %s28, 0
      %p382 = por %p380, %p381
      %p383 = scmp.ne.s32.totalorder %s372, %s375
      %p384 = scmp.eq.s32.totalorder %s33, 1
      %p385 = por %p383, %p384
      %p386 = scmp.ne.s32.totalorder %s375, %s376
      %p387 = scmp.eq.s32.totalorder %s33, 0
      %p388 = por %p386, %p387
      %p389 = scmp.ne.s32.totalorder %s375, %s376
      %p390 = scmp.eq.s32.totalorder %s34, 1
      %p391 = por %p389, %p390
      %p393 = scmp.ne.s32.totalorder %s376, %s392
      %p394 = scmp.eq.s32.totalorder %s34, 0
      %p395 = por %p393, %p394
      %p396 = scmp.le.s32.totalorder 1, %s28
      %p397 = scmp.lt.s32.totalorder %s28, 3
      %p398 = pnand %p396, %p397
      %p399 = pneg %p398
      // Predicated region
      $region9: #{tpu_custom_call.1} parent=5 // pred_check
        _
      $region10: #{tpu_custom_call.1} parent=5 // pred_check_branch
        %401 = sbr.rel (%p398) target = $region12
      $region11: #{tpu_custom_call.1} parent=5 // pred_region
        %s402 = ssub.s32 %s28, 1
        // Predicated region
        $region13: #{tpu_custom_call.1} parent=11 // pred_check
          %p403 = pneg %p87
        $region14: #{tpu_custom_call.1} parent=11 // pred_check_branch
          %405 = sbr.rel (%p403) target = $region16
        $region15: #{tpu_custom_call.1} parent=11 // pred_region
          _
        $region16: #{tpu_custom_call.1} parent=11 // pred_fallthru
          _
        // Predicated region
        $region17: #{tpu_custom_call.1} parent=11 // pred_check
          %p406 = pneg %p108
        $region18: #{tpu_custom_call.1} parent=11 // pred_check_branch
          %408 = sbr.rel (%p406) target = $region20
        $region19: #{tpu_custom_call.1} parent=11 // pred_region
          _
        $region20: #{tpu_custom_call.1} parent=11 // pred_fallthru
          _
        // Predicated region
        $region21: #{tpu_custom_call.1} parent=11 // pred_check
          %p409 = pneg %p129
        $region22: #{tpu_custom_call.1} parent=11 // pred_check_branch
          %411 = sbr.rel (%p409) target = $region24
        $region23: #{tpu_custom_call.1} parent=11 // pred_region
          _
        $region24: #{tpu_custom_call.1} parent=11 // pred_fallthru
          _
        // Predicated region
        $region25: #{tpu_custom_call.1} parent=11 // pred_check
          %p412 = pneg %p150
        $region26: #{tpu_custom_call.1} parent=11 // pred_check_branch
          %414 = sbr.rel (%p412) target = $region28
        $region27: #{tpu_custom_call.1} parent=11 // pred_region
          _
        $region28: #{tpu_custom_call.1} parent=11 // pred_fallthru
          _
        // Predicated region
        $region29: #{tpu_custom_call.1} parent=11 // pred_check
          %p415 = pneg %p171
        $region30: #{tpu_custom_call.1} parent=11 // pred_check_branch
          %417 = sbr.rel (%p415) target = $region32
        $region31: #{tpu_custom_call.1} parent=11 // pred_region
          _
        $region32: #{tpu_custom_call.1} parent=11 // pred_fallthru
          _
        // Predicated region
        $region33: #{tpu_custom_call.1} parent=11 // pred_check
          %p418 = pneg %p192
        $region34: #{tpu_custom_call.1} parent=11 // pred_check_branch
          %420 = sbr.rel (%p418) target = $region36
        $region35: #{tpu_custom_call.1} parent=11 // pred_region
          _
        $region36: #{tpu_custom_call.1} parent=11 // pred_fallthru
          _
        // Predicated region
        $region37: #{tpu_custom_call.1} parent=11 // pred_check
          %p421 = pneg %p213
        $region38: #{tpu_custom_call.1} parent=11 // pred_check_branch
          %423 = sbr.rel (%p421) target = $region40
        $region39: #{tpu_custom_call.1} parent=11 // pred_region
          %425 = vsyncadd [#allocation9], 0
          %s426 = sshll.u32 %s7, 4
          %s427 = int_to_ptr.hbm [resolvable:$true] %s426
          %s428 = sshll.u32 [#allocation8], 4
          %s429 = int_to_ptr.vmem [resolvable:$true] %s428
          %434 = dma.hbm_to_vmem [thread:$0]  %s427, 512, %s429, [#allocation9], 128, 128, 8
        $region40: #{tpu_custom_call.1} parent=11 // pred_fallthru
          _
        // Predicated region
        $region41: #{tpu_custom_call.1} parent=11 // pred_check
          %p435 = pneg %p234
        $region42: #{tpu_custom_call.1} parent=11 // pred_check_branch
          %437 = sbr.rel (%p435) target = $region44
        $region43: #{tpu_custom_call.1} parent=11 // pred_region
          _
        $region44: #{tpu_custom_call.1} parent=11 // pred_fallthru
          _
        // Predicated region
        $region45: #{tpu_custom_call.1} parent=11 // pred_check
          %p438 = pneg %p255
        $region46: #{tpu_custom_call.1} parent=11 // pred_check_branch
          %440 = sbr.rel (%p438) target = $region48
        $region47: #{tpu_custom_call.1} parent=11 // pred_region
          _
        $region48: #{tpu_custom_call.1} parent=11 // pred_fallthru
          _
        // Predicated region
        $region49: #{tpu_custom_call.1} parent=11 // pred_check
          %p441 = pneg %p276
        $region50: #{tpu_custom_call.1} parent=11 // pred_check_branch
          %443 = sbr.rel (%p441) target = $region52
        $region51: #{tpu_custom_call.1} parent=11 // pred_region
          _
        $region52: #{tpu_custom_call.1} parent=11 // pred_fallthru
          _
        // Predicated region
        $region53: #{tpu_custom_call.1} parent=11 // pred_check
          %p444 = pneg %p297
        $region54: #{tpu_custom_call.1} parent=11 // pred_check_branch
          %446 = sbr.rel (%p444) target = $region56
        $region55: #{tpu_custom_call.1} parent=11 // pred_region
          %448 = vsyncadd [#allocation9], 0
          %s449 = sshll.u32 %s11, 4
          %s450 = int_to_ptr.hbm [resolvable:$true] %s449
          %s451 = sshll.u32 [#allocation10], 4
          %s452 = int_to_ptr.vmem [resolvable:$true] %s451
          %457 = dma.hbm_to_vmem [thread:$0]  %s450, 512, %s452, [#allocation9], 128, 128, 8
        $region56: #{tpu_custom_call.1} parent=11 // pred_fallthru
          _
        // Predicated region
        $region57: #{tpu_custom_call.1} parent=11 // pred_check
          %p458 = pneg %p318
        $region58: #{tpu_custom_call.1} parent=11 // pred_check_branch
          %460 = sbr.rel (%p458) target = $region60
        $region59: #{tpu_custom_call.1} parent=11 // pred_region
          _
        $region60: #{tpu_custom_call.1} parent=11 // pred_fallthru
          _
        // Predicated region
        $region61: #{tpu_custom_call.1} parent=11 // pred_check
          %p461 = pneg %p339
        $region62: #{tpu_custom_call.1} parent=11 // pred_check_branch
          %463 = sbr.rel (%p461) target = $region64
        $region63: #{tpu_custom_call.1} parent=11 // pred_region
          _
        $region64: #{tpu_custom_call.1} parent=11 // pred_fallthru
          _
        // Predicated region
        $region65: #{tpu_custom_call.1} parent=11 // pred_check
          %p464 = pneg %p360
        $region66: #{tpu_custom_call.1} parent=11 // pred_check_branch
          %466 = sbr.rel (%p464) target = $region68
        $region67: #{tpu_custom_call.1} parent=11 // pred_region
          _
        $region68: #{tpu_custom_call.1} parent=11 // pred_fallthru
          _
      $region12: #{tpu_custom_call.1} parent=5 // pred_fallthru
        _
      %p467 = scmp.lt.s32.totalorder %s28, 2
      // Predicated region
      $region69: #{tpu_custom_call.1} parent=5 // pred_check
        %p468 = pneg %p467
      $region70: #{tpu_custom_call.1} parent=5 // pred_check_branch
        %470 = sbr.rel (%p468) target = $region72
      $region71: #{tpu_custom_call.1} parent=5 // pred_region
        // Predicated region
        $region73: #{tpu_custom_call.1} parent=71 // pred_check
          %p471 = pneg %p60
        $region74: #{tpu_custom_call.1} parent=71 // pred_check_branch
          %473 = sbr.rel (%p471) target = $region76
        $region75: #{tpu_custom_call.1} parent=71 // pred_region
          %s474 = sand.u32 %s50, 1
          %s475 = scalar_lea.sflag [#allocation6], %s474
          %s476 = sand.u32 %s50, 1
          %s477 = smul.addr %s476, 8
          %s478 = scalar_lea.vmem [#allocation5], %s477
          %480 = vsyncadd %s475, 0
          %s481 = smul.addr %s35, 8
          %s482 = scalar_lea.hbm %s0, %s481
          %s484 = sshll.u32 %s482, 4
          %s485 = int_to_ptr.hbm [resolvable:$true] %s484
          %s486 = sshll.u32 %s478, 4
          %s487 = int_to_ptr.vmem [resolvable:$true] %s486
          %489 = dma.hbm_to_vmem [thread:$0]  %s485, 128, %s487, %s475
        $region76: #{tpu_custom_call.1} parent=71 // pred_fallthru
          _
      $region72: #{tpu_custom_call.1} parent=5 // pred_fallthru
        _
      %p490 = scmp.le.s32.totalorder 1, %s28
      %p491 = scmp.lt.s32.totalorder %s28, 3
      %p492 = pnand %p490, %p491
      %p493 = pneg %p492
      // Predicated region
      $region77: #{tpu_custom_call.1} parent=5 // pred_check
        _
      $region78: #{tpu_custom_call.1} parent=5 // pred_check_branch
        %495 = sbr.rel (%p492) target = $region80
      $region79: #{tpu_custom_call.1} parent=5 // pred_region
        %s496 = ssub.s32 %s28, 1
        %s497 = sand.u32 %s53, 1
        %s498 = scalar_lea.sflag [#allocation6], %s497
        %s499 = sand.u32 %s53, 1
        %s500 = smul.addr %s499, 8
        %s501 = scalar_lea.vmem [#allocation5], %s500
        // Predicated region
        $region81: #{tpu_custom_call.1} parent=79 // pred_check
          %p502 = pneg %p66
        $region82: #{tpu_custom_call.1} parent=79 // pred_check_branch
          %504 = sbr.rel (%p502) target = $region84
        $region83: #{tpu_custom_call.1} parent=79 // pred_region
          %506 = dma.done %s498, 128
        $region84: #{tpu_custom_call.1} parent=79 // pred_fallthru
          _
        // Predicated region
        $region85: #{tpu_custom_call.1} parent=79 // pred_check
          %p507 = pneg %p213
        $region86: #{tpu_custom_call.1} parent=79 // pred_check_branch
          %509 = sbr.rel (%p507) target = $region88
        $region87: #{tpu_custom_call.1} parent=79 // pred_region
          %511 = dma.done [#allocation9], 512
        $region88: #{tpu_custom_call.1} parent=79 // pred_fallthru
          _
        // Predicated region
        $region89: #{tpu_custom_call.1} parent=79 // pred_check
          %p512 = pneg %p297
        $region90: #{tpu_custom_call.1} parent=79 // pred_check_branch
          %514 = sbr.rel (%p512) target = $region92
        $region91: #{tpu_custom_call.1} parent=79 // pred_region
          %516 = dma.done [#allocation9], 512
        $region92: #{tpu_custom_call.1} parent=79 // pred_fallthru
          _
        %s517 = sand.u32 %s53, 1
        %s518 = scalar_lea.sflag [#allocation6], %s517
        %s519 = sand.u32 %s53, 1
        %s520 = smul.addr %s519, 8
        %s521 = scalar_lea.vmem [#allocation5], %s520
        %p522 = pneg %p66
        %p523 = pneg %p63
        %p524 = pneg %p87
        %p525 = pneg %p84
        %p526 = pneg %p108
        %p527 = pneg %p105
        %p528 = pneg %p129
        %p529 = pneg %p126
        %p530 = pneg %p150
        %p531 = pneg %p147
        %p532 = pneg %p171
        %p533 = pneg %p168
        %p534 = pneg %p192
        %p535 = pneg %p189
        %p536 = pneg %p213
        %p537 = pneg %p210
        %p538 = pneg %p234
        %p539 = pneg %p231
        %p540 = pneg %p255
        %p541 = pneg %p252
        %p542 = pneg %p276
        %p543 = pneg %p273
        %p544 = pneg %p297
        %p545 = pneg %p294
        %p546 = pneg %p318
        %p547 = pneg %p315
        %p548 = pneg %p339
        %p549 = pneg %p336
        %p550 = pneg %p360
        %p551 = pneg %p357
        %p552 = pneg %p388
        %p553 = pneg %p385
        %s554 = sand.u32 %s375, 1
        %s555 = scalar_lea.sflag [#allocation7], %s554
        %s556 = sand.u32 %s375, 1
        %s557 = smul.addr %s556, 8
        %s558 = scalar_lea.vmem [#allocation11], %s557
        %p559 = scmp.eq.s32.totalorder %s38, 0
        // Predicated region
        $region93: #{tpu_custom_call.1} parent=79 // pred_check
          %p560 = pneg %p559
        $region94: #{tpu_custom_call.1} parent=79 // pred_check_branch
          %562 = sbr.rel (%p560) target = $region96
        $region95: #{tpu_custom_call.1} parent=79 // pred_region
          %v563 = vld [vmem:[%s501] sm:$0xff]
          %v564 = vld [vmem:[%s3] sm:$0xff]
          %v565 = vld [vmem:[%s3 + $0x8] sm:$0xff]
          %v566 = vld [vmem:[%s3 + $0x10] sm:$0xff]
          %v567 = vld [vmem:[%s3 + $0x18] sm:$0xff]
          %v568 = vld [vmem:[%s4] sm:$0x1]
          %v570 = vperm.slane %v568, 0
          %vm572 = vcmask 261120
          %v574 = vsel %vm572, %v563, 0
          %576 = vmatpush.msra.mxu0 0.0
          %577 = vmatpush.msra.mxu0 0.0
          %578 = vmatpush.msra.mxu0 0.0
          %579 = vmatpush.msra.mxu0 0.0
          %580 = vmatpush.msra.mxu0 0.0
          %581 = vmatpush.msra.mxu0 0.0
          %582 = vmatpush.msra.mxu0 0.0
          %583 = vmatpush.msra.mxu0 0.0
          %584 = vmatpush.msra.mxu0 0.0
          %585 = vmatpush.msra.mxu0 0.0
          %586 = vmatpush.msra.mxu0 0.0
          %587 = vmatpush.msra.mxu0 0.0
          %588 = vmatpush.msra.mxu0 %v567
          %589 = vmatpush.msra.mxu0 %v566
          %590 = vmatpush.msra.mxu0 %v565
          %591 = vmatpush.msra.mxu0 %v564
          %592 = vmatmul.f32.gmra.mxu0 %v574
          %v593 = vpop.f32.mrf.mxu0
          %v594 = vadd.f32 %v570, %v593
          %595 = vdwg.mxu0
          %596 = vst.msk [vmem:[#allocation2] sm:$0xff] %vm572, %v594
          %v597 = vld [vmem:[%s5] sm:$0xff]
          %v598 = vld [vmem:[%s5 + $0x8] sm:$0xff]
          %v599 = vld [vmem:[%s5 + $0x10] sm:$0xff]
          %v600 = vld [vmem:[%s5 + $0x18] sm:$0xff]
          %v601 = vld [vmem:[%s6] sm:$0x1]
          %v603 = vperm.slane %v601, 0
          %605 = vmatpush.msra.mxu0 0.0
          %606 = vmatpush.msra.mxu0 0.0
          %607 = vmatpush.msra.mxu0 0.0
          %608 = vmatpush.msra.mxu0 0.0
          %609 = vmatpush.msra.mxu0 0.0
          %610 = vmatpush.msra.mxu0 0.0
          %611 = vmatpush.msra.mxu0 0.0
          %612 = vmatpush.msra.mxu0 0.0
          %613 = vmatpush.msra.mxu0 0.0
          %614 = vmatpush.msra.mxu0 0.0
          %615 = vmatpush.msra.mxu0 0.0
          %616 = vmatpush.msra.mxu0 0.0
          %617 = vmatpush.msra.mxu0 %v600
          %618 = vmatpush.msra.mxu0 %v599
          %619 = vmatpush.msra.mxu0 %v598
          %620 = vmatpush.msra.mxu0 %v597
          %621 = vmatmul.f32.gmra.mxu0 %v574
          %v622 = vpop.f32.mrf.mxu0
          %v623 = vadd.f32 %v603, %v622
          %624 = vdwg.mxu0
          %625 = vst.msk [vmem:[#allocation3] sm:$0xff] %vm572, %v623
        $region96: #{tpu_custom_call.1} parent=79 // pred_fallthru
          _
        %s626 = smul.u32 %s38, 8
        %s627 = scalar_lea.vmem %s501, %s626 [#allocation5]
        %v628 = vld [vmem:[%s627] sm:$0xff]
        %v629 = vld [vmem:[%s1] sm:$0xff]
        %v630 = vld [vmem:[%s1 + $0x8] sm:$0xff]
        %v631 = vld [vmem:[%s1 + $0x10] sm:$0xff]
        %v632 = vld [vmem:[%s1 + $0x18] sm:$0xff]
        %v633 = vld [vmem:[%s2] sm:$0x1]
        %v635 = vperm.slane %v633, 0
        %vm637 = vcmask 261120
        %v639 = vsel %vm637, %v628, 0
        %641 = vmatpush.msra.mxu0 0.0
        %642 = vmatpush.msra.mxu0 0.0
        %643 = vmatpush.msra.mxu0 0.0
        %644 = vmatpush.msra.mxu0 0.0
        %645 = vmatpush.msra.mxu0 0.0
        %646 = vmatpush.msra.mxu0 0.0
        %647 = vmatpush.msra.mxu0 0.0
        %648 = vmatpush.msra.mxu0 0.0
        %649 = vmatpush.msra.mxu0 0.0
        %650 = vmatpush.msra.mxu0 0.0
        %651 = vmatpush.msra.mxu0 0.0
        %652 = vmatpush.msra.mxu0 0.0
        %653 = vmatpush.msra.mxu0 %v632
        %654 = vmatpush.msra.mxu0 %v631
        %655 = vmatpush.msra.mxu0 %v630
        %656 = vmatpush.msra.mxu0 %v629
        %657 = vmatmul.f32.gmra.mxu0 %v639
        %v658 = vpop.f32.mrf.mxu0
        %v659 = vadd.f32 %v635, %v658
        %660 = vdwg.mxu0
        %v661 = vld [vmem:[#allocation2] sm:$0xff]
        %v662 = vld [vmem:[#allocation3] sm:$0xff]
        %vm663 = vcmask 64512
        %v665 = vsel %vm663, %v659, 0
        %v668 = vsel %vm663, %v661, 0
        %670 = vmatpush.xpose.msra.mxu0 0.0
        %671 = vmatpush.xpose.msra.mxu0 0.0
        %672 = vmatpush.xpose.msra.mxu0 0.0
        %673 = vmatpush.xpose.msra.mxu0 0.0
        %674 = vmatpush.xpose.msra.mxu0 0.0
        %675 = vmatpush.xpose.msra.mxu0 0.0
        %676 = vmatpush.xpose.msra.mxu0 0.0
        %677 = vmatpush.xpose.msra.mxu0 0.0
        %678 = vmatpush.xpose.msra.mxu0 0.0
        %679 = vmatpush.xpose.msra.mxu0 0.0
        %680 = vmatpush.xpose.msra.mxu0 0.0
        %681 = vmatpush.xpose.msra.mxu0 0.0
        %682 = vmatpush.xpose.msra.mxu0 0.0
        %683 = vmatpush.xpose.msra.mxu0 0.0
        %684 = vmatpush.xpose.msra.mxu0 0.0
        %685 = vmatpush.xpose.msra.mxu0 %v668
        %686 = vmatmul.f32.gmra.mxu0 %v665
        %v687 = vpop.f32.mrf.mxu0
        %v688 = vadd.f32 0.0, %v687
        %689 = vdwg.mxu0
        %v690 = vsel %vm663, %v688, -inf
        %691 = vmax.xlane.f32.xlu0 %v690
        %v692 = vpop.xlane.xlu0 %691
        %v693 = vsub.f32 %v688, %v692
        %v694 = vmul.f32 %v693, 1.442695
        %v695 = vpow.pop %v694
        %v696 = vsel %vm663, %v695, 0.0
        %697 = vadd.xlane.f32.xlu0 %v696
        %v698 = vpop.xlane.xlu0 %697
        %v700 = vsel %vm663, %v695, 0
        %702 = vmatpush.msra.mxu0 0.0
        %703 = vmatpush.msra.mxu0 0.0
        %704 = vmatpush.msra.mxu0 0.0
        %705 = vmatpush.msra.mxu0 0.0
        %706 = vmatpush.msra.mxu0 0.0
        %707 = vmatpush.msra.mxu0 0.0
        %708 = vmatpush.msra.mxu0 0.0
        %709 = vmatpush.msra.mxu0 0.0
        %710 = vmatpush.msra.mxu0 0.0
        %711 = vmatpush.msra.mxu0 0.0
        %712 = vmatpush.msra.mxu0 0.0
        %713 = vmatpush.msra.mxu0 0.0
        %714 = vmatpush.msra.mxu0 0.0
        %715 = vmatpush.msra.mxu0 0.0
        %716 = vmatpush.msra.mxu0 0.0
        %717 = vmatpush.msra.mxu0 %v662
        %718 = vmatmul.f32.gmra.mxu0 %v700
        %v719 = vpop.f32.mrf.mxu0
        %v720 = vadd.f32 0.0, %v719
        %721 = vdwg.mxu0
        %v722 = vrcp.pop %v698
        %v723 = vmul.f32 %v720, %v722
        %724 = vst.msk [vmem:[#allocation4] sm:$0xff] %vm663, %v723
        %v725 = vld [vmem:[#allocation2] sm:$0xff]
        %v726 = vld [vmem:[#allocation3] sm:$0xff]
        %727 = vrot.lane.b32.xlu0 %v659, 120
        %v728 = vpop.permute.xlu0 %727
        %730 = vrot.lane.b32.xlu0 %v725, 120
        %v731 = vpop.permute.xlu0 %730
        %v732 = vsel %vm663, %v728, 0
        %v734 = vsel %vm663, %v731, 0
        %736 = vmatpush.xpose.msra.mxu0 0.0
        %737 = vmatpush.xpose.msra.mxu0 0.0
        %738 = vmatpush.xpose.msra.mxu0 0.0
        %739 = vmatpush.xpose.msra.mxu0 0.0
        %740 = vmatpush.xpose.msra.mxu0 0.0
        %741 = vmatpush.xpose.msra.mxu0 0.0
        %742 = vmatpush.xpose.msra.mxu0 0.0
        %743 = vmatpush.xpose.msra.mxu0 0.0
        %744 = vmatpush.xpose.msra.mxu0 0.0
        %745 = vmatpush.xpose.msra.mxu0 0.0
        %746 = vmatpush.xpose.msra.mxu0 0.0
        %747 = vmatpush.xpose.msra.mxu0 0.0
        %748 = vmatpush.xpose.msra.mxu0 0.0
        %749 = vmatpush.xpose.msra.mxu0 0.0
        %750 = vmatpush.xpose.msra.mxu0 0.0
        %751 = vmatpush.xpose.msra.mxu0 %v734
        %752 = vmatmul.f32.gmra.mxu0 %v732
        %v753 = vpop.f32.mrf.mxu0
        %v754 = vadd.f32 0.0, %v753
        %755 = vdwg.mxu0
        %v756 = vsel %vm663, %v754, -inf
        %757 = vmax.xlane.f32.xlu0 %v756
        %v758 = vpop.xlane.xlu0 %757
        %v759 = vsub.f32 %v754, %v758
        %v760 = vmul.f32 %v759, 1.442695
        %v761 = vpow.pop %v760
        %v762 = vsel %vm663, %v761, 0.0
        %763 = vadd.xlane.f32.xlu0 %v762
        %v764 = vpop.xlane.xlu0 %763
        %766 = vrot.lane.b32.xlu0 %v726, 120
        %v767 = vpop.permute.xlu0 %766
        %v770 = vsel %vm663, %v761, 0
        %772 = vmatpush.msra.mxu0 0.0
        %773 = vmatpush.msra.mxu0 0.0
        %774 = vmatpush.msra.mxu0 0.0
        %775 = vmatpush.msra.mxu0 0.0
        %776 = vmatpush.msra.mxu0 0.0
        %777 = vmatpush.msra.mxu0 0.0
        %778 = vmatpush.msra.mxu0 0.0
        %779 = vmatpush.msra.mxu0 0.0
        %780 = vmatpush.msra.mxu0 0.0
        %781 = vmatpush.msra.mxu0 0.0
        %782 = vmatpush.msra.mxu0 0.0
        %783 = vmatpush.msra.mxu0 0.0
        %784 = vmatpush.msra.mxu0 0.0
        %785 = vmatpush.msra.mxu0 0.0
        %786 = vmatpush.msra.mxu0 0.0
        %787 = vmatpush.msra.mxu0 %v767
        %788 = vmatmul.f32.gmra.mxu0 %v770
        %v789 = vpop.f32.mrf.mxu0
        %v790 = vadd.f32 0.0, %v789
        %791 = vdwg.mxu0
        %v792 = vrcp.pop %v764
        %v793 = vmul.f32 %v790, %v792
        %795 = vrot.lane.b32.xlu0 %v793, 8
        %v796 = vpop.permute.xlu0 %795
        %vm798 = vcmask 130112
        %799 = vst.msk [vmem:[#allocation4] sm:$0xff] %vm798, %v796
        %v800 = vld [vmem:[#allocation2] sm:$0xff]
        %v801 = vld [vmem:[#allocation3] sm:$0xff]
        %802 = vrot.lane.b32.xlu0 %v659, 112
        %v803 = vpop.permute.xlu0 %802
        %805 = vrot.lane.b32.xlu0 %v800, 112
        %v806 = vpop.permute.xlu0 %805
        %v807 = vsel %vm663, %v803, 0
        %v809 = vsel %vm663, %v806, 0
        %811 = vmatpush.xpose.msra.mxu0 0.0
        %812 = vmatpush.xpose.msra.mxu0 0.0
        %813 = vmatpush.xpose.msra.mxu0 0.0
        %814 = vmatpush.xpose.msra.mxu0 0.0
        %815 = vmatpush.xpose.msra.mxu0 0.0
        %816 = vmatpush.xpose.msra.mxu0 0.0
        %817 = vmatpush.xpose.msra.mxu0 0.0
        %818 = vmatpush.xpose.msra.mxu0 0.0
        %819 = vmatpush.xpose.msra.mxu0 0.0
        %820 = vmatpush.xpose.msra.mxu0 0.0
        %821 = vmatpush.xpose.msra.mxu0 0.0
        %822 = vmatpush.xpose.msra.mxu0 0.0
        %823 = vmatpush.xpose.msra.mxu0 0.0
        %824 = vmatpush.xpose.msra.mxu0 0.0
        %825 = vmatpush.xpose.msra.mxu0 0.0
        %826 = vmatpush.xpose.msra.mxu0 %v809
        %827 = vmatmul.f32.gmra.mxu0 %v807
        %v828 = vpop.f32.mrf.mxu0
        %v829 = vadd.f32 0.0, %v828
        %830 = vdwg.mxu0
        %v831 = vsel %vm663, %v829, -inf
        %832 = vmax.xlane.f32.xlu0 %v831
        %v833 = vpop.xlane.xlu0 %832
        %v834 = vsub.f32 %v829, %v833
        %v835 = vmul.f32 %v834, 1.442695
        %v836 = vpow.pop %v835
        %v837 = vsel %vm663, %v836, 0.0
        %838 = vadd.xlane.f32.xlu0 %v837
        %v839 = vpop.xlane.xlu0 %838
        %841 = vrot.lane.b32.xlu0 %v801, 112
        %v842 = vpop.permute.xlu0 %841
        %v845 = vsel %vm663, %v836, 0
        %847 = vmatpush.msra.mxu0 0.0
        %848 = vmatpush.msra.mxu0 0.0
        %849 = vmatpush.msra.mxu0 0.0
        %850 = vmatpush.msra.mxu0 0.0
        %851 = vmatpush.msra.mxu0 0.0
        %852 = vmatpush.msra.mxu0 0.0
        %853 = vmatpush.msra.mxu0 0.0
        %854 = vmatpush.msra.mxu0 0.0
        %855 = vmatpush.msra.mxu0 0.0
        %856 = vmatpush.msra.mxu0 0.0
        %857 = vmatpush.msra.mxu0 0.0
        %858 = vmatpush.msra.mxu0 0.0
        %859 = vmatpush.msra.mxu0 0.0
        %860 = vmatpush.msra.mxu0 0.0
        %861 = vmatpush.msra.mxu0 0.0
        %862 = vmatpush.msra.mxu0 %v842
        %863 = vmatmul.f32.gmra.mxu0 %v845
        %v864 = vpop.f32.mrf.mxu0
        %v865 = vadd.f32 0.0, %v864
        %866 = vdwg.mxu0
        %v867 = vrcp.pop %v839
        %v868 = vmul.f32 %v865, %v867
        %870 = vrot.lane.b32.xlu0 %v868, 16
        %v871 = vpop.permute.xlu0 %870
        %vm873 = vcmask 195712
        %874 = vst.msk [vmem:[#allocation4] sm:$0xff] %vm873, %v871
        %v875 = vld [vmem:[#allocation2] sm:$0xff]
        %v876 = vld [vmem:[#allocation3] sm:$0xff]
        %877 = vrot.lane.b32.xlu0 %v659, 104
        %v878 = vpop.permute.xlu0 %877
        %880 = vrot.lane.b32.xlu0 %v875, 104
        %v881 = vpop.permute.xlu0 %880
        %v882 = vsel %vm663, %v878, 0
        %v884 = vsel %vm663, %v881, 0
        %886 = vmatpush.xpose.msra.mxu0 0.0
        %887 = vmatpush.xpose.msra.mxu0 0.0
        %888 = vmatpush.xpose.msra.mxu0 0.0
        %889 = vmatpush.xpose.msra.mxu0 0.0
        %890 = vmatpush.xpose.msra.mxu0 0.0
        %891 = vmatpush.xpose.msra.mxu0 0.0
        %892 = vmatpush.xpose.msra.mxu0 0.0
        %893 = vmatpush.xpose.msra.mxu0 0.0
        %894 = vmatpush.xpose.msra.mxu0 0.0
        %895 = vmatpush.xpose.msra.mxu0 0.0
        %896 = vmatpush.xpose.msra.mxu0 0.0
        %897 = vmatpush.xpose.msra.mxu0 0.0
        %898 = vmatpush.xpose.msra.mxu0 0.0
        %899 = vmatpush.xpose.msra.mxu0 0.0
        %900 = vmatpush.xpose.msra.mxu0 0.0
        %901 = vmatpush.xpose.msra.mxu0 %v884
        %902 = vmatmul.f32.gmra.mxu0 %v882
        %v903 = vpop.f32.mrf.mxu0
        %v904 = vadd.f32 0.0, %v903
        %905 = vdwg.mxu0
        %v906 = vsel %vm663, %v904, -inf
        %907 = vmax.xlane.f32.xlu0 %v906
        %v908 = vpop.xlane.xlu0 %907
        %v909 = vsub.f32 %v904, %v908
        %v910 = vmul.f32 %v909, 1.442695
        %v911 = vpow.pop %v910
        %v912 = vsel %vm663, %v911, 0.0
        %913 = vadd.xlane.f32.xlu0 %v912
        %v914 = vpop.xlane.xlu0 %913
        %916 = vrot.lane.b32.xlu0 %v876, 104
        %v917 = vpop.permute.xlu0 %916
        %v920 = vsel %vm663, %v911, 0
        %922 = vmatpush.msra.mxu0 0.0
        %923 = vmatpush.msra.mxu0 0.0
        %924 = vmatpush.msra.mxu0 0.0
        %925 = vmatpush.msra.mxu0 0.0
        %926 = vmatpush.msra.mxu0 0.0
        %927 = vmatpush.msra.mxu0 0.0
        %928 = vmatpush.msra.mxu0 0.0
        %929 = vmatpush.msra.mxu0 0.0
        %930 = vmatpush.msra.mxu0 0.0
        %931 = vmatpush.msra.mxu0 0.0
        %932 = vmatpush.msra.mxu0 0.0
        %933 = vmatpush.msra.mxu0 0.0
        %934 = vmatpush.msra.mxu0 0.0
        %935 = vmatpush.msra.mxu0 0.0
        %936 = vmatpush.msra.mxu0 0.0
        %937 = vmatpush.msra.mxu0 %v917
        %938 = vmatmul.f32.gmra.mxu0 %v920
        %v939 = vpop.f32.mrf.mxu0
        %v940 = vadd.f32 0.0, %v939
        %941 = vdwg.mxu0
        %v942 = vrcp.pop %v914
        %v943 = vmul.f32 %v940, %v942
        %945 = vrot.lane.b32.xlu0 %v943, 24
        %v946 = vpop.permute.xlu0 %945
        %vm948 = vcmask 261312
        %949 = vst.msk [vmem:[#allocation4] sm:$0xff] %vm948, %v946
        %v950 = vld [vmem:[#allocation4] sm:$0xff]
        %v951 = vld [vmem:[#allocation8] sm:$0xff]
        %v952 = vld [vmem:[#allocation8 + $0x8] sm:$0xff]
        %v953 = vld [vmem:[#allocation8 + $0x10] sm:$0xff]
        %v954 = vld [vmem:[#allocation8 + $0x18] sm:$0xff]
        %v955 = vld [vmem:[%s8] sm:$0x1]
        %v957 = vperm.slane %v955, 0
        %v960 = vsel %vm637, %v950, 0
        %962 = vmatpush.msra.mxu0 0.0
        %963 = vmatpush.msra.mxu0 0.0
        %964 = vmatpush.msra.mxu0 0.0
        %965 = vmatpush.msra.mxu0 0.0
        %966 = vmatpush.msra.mxu0 0.0
        %967 = vmatpush.msra.mxu0 0.0
        %968 = vmatpush.msra.mxu0 0.0
        %969 = vmatpush.msra.mxu0 0.0
        %970 = vmatpush.msra.mxu0 0.0
        %971 = vmatpush.msra.mxu0 0.0
        %972 = vmatpush.msra.mxu0 0.0
        %973 = vmatpush.msra.mxu0 0.0
        %974 = vmatpush.msra.mxu0 %v954
        %975 = vmatpush.msra.mxu0 %v953
        %976 = vmatpush.msra.mxu0 %v952
        %977 = vmatpush.msra.mxu0 %v951
        %978 = vmatmul.f32.gmra.mxu0 %v960
        %v979 = vpop.f32.mrf.mxu0
        %v980 = vadd.f32 %v957, %v979
        %981 = vdwg.mxu0
        %v982 = vadd.f32 %v628, %v980
        %v983 = vld [vmem:[%s9] sm:$0x1]
        %v984 = vmul.f32 %v982, %v982
        %v985 = vsel %vm637, %v984, 0.0
        %986 = vadd.xlane.f32.xlu0 %v985
        %v987 = vpop.xlane.xlu0 %986
        %v988 = vrcp.pop 32.0
        %v989 = vmul.f32 32.0, %v988
        %v990 = vsub.f32 1.0, %v989
        %v991 = vmul.f32 %v988, %v990
        %v992 = vadd.f32 %v988, %v991
        %vm993 = vweird.f32 %v988
        %v994 = vsel %vm993, %v988, %v992
        %v995 = vmul.f32 %v987, %v994
        %v996 = vadd.f32 %v995, 1.1920929e-07
        %v997 = vrsqrt.pop %v996
        %v998 = vmul.f32 %v997, %v996
        %v999 = vmul.f32 %v998, %v997
        %v1000 = vmul.f32 0.5, %v999
        %v1001 = vsub.f32 1.5, %v1000
        %v1002 = vmul.f32 %v997, %v1001
        %vm1003 = vweird.f32 %v996
        %vm1004 = vweird.f32 %v997
        %vm1005 = vmor %vm1003, %vm1004
        %v1006 = vsel %vm1005, %v997, %v1002
        %v1007 = vmul.f32 %v982, %v1006
        %v1009 = vperm.slane %v983, 0
        %v1011 = vmul.f32 %v1007, %v1009
        %v1012 = vld [vmem:[#allocation10] sm:$0xff]
        %v1013 = vld [vmem:[#allocation10 + $0x8] sm:$0xff]
        %v1014 = vld [vmem:[#allocation10 + $0x10] sm:$0xff]
        %v1015 = vld [vmem:[#allocation10 + $0x18] sm:$0xff]
        %v1016 = vld [vmem:[%s12] sm:$0x1]
        %v1018 = vperm.slane %v1016, 0
        %v1021 = vsel %vm637, %v1011, 0
        %1023 = vmatpush.msra.mxu0 0.0
        %1024 = vmatpush.msra.mxu0 0.0
        %1025 = vmatpush.msra.mxu0 0.0
        %1026 = vmatpush.msra.mxu0 0.0
        %1027 = vmatpush.msra.mxu0 0.0
        %1028 = vmatpush.msra.mxu0 0.0
        %1029 = vmatpush.msra.mxu0 0.0
        %1030 = vmatpush.msra.mxu0 0.0
        %1031 = vmatpush.msra.mxu0 0.0
        %1032 = vmatpush.msra.mxu0 0.0
        %1033 = vmatpush.msra.mxu0 0.0
        %1034 = vmatpush.msra.mxu0 0.0
        %1035 = vmatpush.msra.mxu0 %v1015
        %1036 = vmatpush.msra.mxu0 %v1014
        %1037 = vmatpush.msra.mxu0 %v1013
        %1038 = vmatpush.msra.mxu0 %v1012
        %1039 = vmatmul.f32.gmra.mxu0 %v1021
        %v1040 = vpop.f32.mrf.mxu0
        %v1041 = vadd.f32 %v1018, %v1040
        %1042 = vdwg.mxu0
        %v1043 = vxor.u32 %v1041, 2147483648
        %v1044 = vmul.f32 %v1043, 1.442695
        %v1045 = vpow.pop %v1044
        %v1046 = vadd.f32 %v1045, 1.0
        %v1047 = vrcp.pop %v1046
        %v1048 = vmul.f32 %v1046, %v1047
        %v1049 = vsub.f32 1.0, %v1048
        %v1050 = vmul.f32 %v1047, %v1049
        %v1051 = vadd.f32 %v1047, %v1050
        %vm1052 = vweird.f32 %v1046
        %vm1053 = vweird.f32 %v1047
        %vm1054 = vmor %vm1052, %vm1053
        %v1055 = vsel %vm1054, %v1047, %v1051
        %v1056 = vand.u32 2147483647, %v1046
        %vm1057 = vcmp.eq.f32.partialorder %v1056, 8.507059e+37
        %v1058 = vand.u32 %v1046, 2147483648
        %v1059 = vor.u32 1.1754944e-38, %v1058
        %v1060 = vsel %vm1057, %v1059, %v1055
        %v1061 = vmul.f32 1.0, %v1060
        %v1062 = vmul.f32 %v1041, %v1061
        %v1063 = vld [vmem:[%s13] sm:$0xff]
        %v1064 = vld [vmem:[%s13 + $0x8] sm:$0xff]
        %v1065 = vld [vmem:[%s13 + $0x10] sm:$0xff]
        %v1066 = vld [vmem:[%s13 + $0x18] sm:$0xff]
        %v1067 = vld [vmem:[%s13 + $0x20] sm:$0xff]
        %v1068 = vld [vmem:[%s13 + $0x28] sm:$0xff]
        %v1069 = vld [vmem:[%s13 + $0x30] sm:$0xff]
        %v1070 = vld [vmem:[%s13 + $0x38] sm:$0xff]
        %v1071 = vld [vmem:[%s14] sm:$0x1]
        %v1073 = vperm.slane %v1071, 0
        %vm1075 = vcmask 523264
        %v1077 = vsel %vm1075, %v1062, 0
        %1079 = vmatpush.msra.mxu0 0.0
        %1080 = vmatpush.msra.mxu0 0.0
        %1081 = vmatpush.msra.mxu0 0.0
        %1082 = vmatpush.msra.mxu0 0.0
        %1083 = vmatpush.msra.mxu0 0.0
        %1084 = vmatpush.msra.mxu0 0.0
        %1085 = vmatpush.msra.mxu0 0.0
        %1086 = vmatpush.msra.mxu0 0.0
        %1087 = vmatpush.msra.mxu0 %v1070
        %1088 = vmatpush.msra.mxu0 %v1069
        %1089 = vmatpush.msra.mxu0 %v1068
        %1090 = vmatpush.msra.mxu0 %v1067
        %1091 = vmatpush.msra.mxu0 %v1066
        %1092 = vmatpush.msra.mxu0 %v1065
        %1093 = vmatpush.msra.mxu0 %v1064
        %1094 = vmatpush.msra.mxu0 %v1063
        %1095 = vmatmul.f32.gmra.mxu0 %v1077
        %v1096 = vpop.f32.mrf.mxu0
        %v1097 = vadd.f32 %v1073, %v1096
        %1098 = vdwg.mxu0
        %v1099 = vadd.f32 %v1011, %v1097
        %v1100 = vld [vmem:[%s10] sm:$0x1]
        %v1101 = vmul.f32 %v1099, %v1099
        %v1102 = vsel %vm637, %v1101, 0.0
        %1103 = vadd.xlane.f32.xlu0 %v1102
        %v1104 = vpop.xlane.xlu0 %1103
        %v1105 = vmul.f32 %v1104, %v994
        %v1106 = vadd.f32 %v1105, 1.1920929e-07
        %v1107 = vrsqrt.pop %v1106
        %v1108 = vmul.f32 %v1107, %v1106
        %v1109 = vmul.f32 %v1108, %v1107
        %v1110 = vmul.f32 0.5, %v1109
        %v1111 = vsub.f32 1.5, %v1110
        %v1112 = vmul.f32 %v1107, %v1111
        %vm1113 = vweird.f32 %v1106
        %vm1114 = vweird.f32 %v1107
        %vm1115 = vmor %vm1113, %vm1114
        %v1116 = vsel %vm1115, %v1107, %v1112
        %v1117 = vmul.f32 %v1099, %v1116
        %v1119 = vperm.slane %v1100, 0
        %v1121 = vmul.f32 %v1117, %v1119
        %1122 = vst.msk [vmem:[%s558] sm:$0xff] %vm637, %v1121
        %s1123 = sand.u32 %s375, 1
        %s1124 = scalar_lea.sflag [#allocation7], %s1123
        %s1125 = sand.u32 %s375, 1
        %s1126 = smul.addr %s1125, 8
        %s1127 = scalar_lea.vmem [#allocation11], %s1126
        // Predicated region
        $region97: #{tpu_custom_call.1} parent=79 // pred_check
          %p1128 = pneg %p385
        $region98: #{tpu_custom_call.1} parent=79 // pred_check_branch
          %1130 = sbr.rel (%p1128) target = $region100
        $region99: #{tpu_custom_call.1} parent=79 // pred_region
          %1132 = vsyncadd %s1124, 0
          %s1133 = sadd.s32 %s38, %s37
          %s1134 = smul.addr %s1133, 8
          %s1135 = scalar_lea.hbm %s15, %s1134
          %s1137 = sshll.u32 %s1127, 4
          %s1138 = int_to_ptr.vmem [resolvable:$true] %s1137
          %s1139 = sshll.u32 %s1135, 4
          %s1140 = int_to_ptr.hbm [resolvable:$true] %s1139
          %1142 = dma.vmem_to_hbm [thread:$0]  %s1138, 128, %s1140, %s1124
        $region100: #{tpu_custom_call.1} parent=79 // pred_fallthru
          _
      $region80: #{tpu_custom_call.1} parent=5 // pred_fallthru
        _
      %p1143 = scmp.le.s32.totalorder 2, %s28
      // Predicated region
      $region101: #{tpu_custom_call.1} parent=5 // pred_check
        %p1144 = pneg %p1143
      $region102: #{tpu_custom_call.1} parent=5 // pred_check_branch
        %1146 = sbr.rel (%p1144) target = $region104
      $region103: #{tpu_custom_call.1} parent=5 // pred_region
        %s1147 = ssub.s32 %s28, 2
        // Predicated region
        $region105: #{tpu_custom_call.1} parent=103 // pred_check
          %p1148 = pneg %p391
        $region106: #{tpu_custom_call.1} parent=103 // pred_check_branch
          %1150 = sbr.rel (%p1148) target = $region108
        $region107: #{tpu_custom_call.1} parent=103 // pred_region
          %s1151 = sand.u32 %s376, 1
          %s1152 = scalar_lea.sflag [#allocation7], %s1151
          %s1153 = sand.u32 %s376, 1
          %s1154 = smul.addr %s1153, 8
          %s1155 = scalar_lea.vmem [#allocation11], %s1154
          %1157 = dma.done %s1152, 128
        $region108: #{tpu_custom_call.1} parent=103 // pred_fallthru
          _
      $region104: #{tpu_custom_call.1} parent=5 // pred_fallthru
        _
    $region6: #{tpu_custom_call.1} parent=1 // loop_footer
      %s32 = sadd.s32 1, %s28
    $region7: #{tpu_custom_call.1} parent=1 // loop_footer_branch
      %27 = sbr.rel target = $region3
    $region8: #{tpu_custom_call.1} parent=1 // loop_exit
      _
    %1158 = vsyncpa [#allocation6], 1
    %s1159 = scalar_lea.sflag [#allocation6], 1
    %1160 = vsyncpa %s1159, 1
    %1161 = vsyncpa [#allocation9], 1
    %1162 = vsyncpa [#allocation7], 1
    %s1163 = scalar_lea.sflag [#allocation7], 1
    %1164 = vsyncpa %s1163, 1

// kernel: tpu_custom_call.1
$region0: #{tpu_custom_call.1}
  #allocation0 [shape = 'u32[]', space=smem, size = 0x4, offset = 0x4, fixed_abs, tag = 'smem constant byte address 0x4 - core index']
  #allocation1 [shape = 'u32[72,128]{1,0:T(1,128)}', space=vmem, size = 0x9000, scoped, tag = 'internal scratch']
  #allocation2 [shape = 'f32[8,32]{1,0:T(8,128)}', space=vmem, size = 0x1000, scoped, tag = 'scratch operand']
  #allocation3 [shape = 'f32[8,32]{1,0:T(8,128)}', space=vmem, size = 0x1000, scoped, tag = 'scratch operand']
  #allocation4 [shape = 'f32[8,32]{1,0:T(8,128)}', space=vmem, size = 0x1000, scoped, tag = 'scratch operand']
  %s0 = inlined_call_operand.hbm [shape: f32[2,8,32], index: 0, kind: input, shape index: {}]
  %s1 = inlined_call_operand.vmem [shape: f32[32,32], index: 1, kind: input, shape index: {}]
  %s2 = inlined_call_operand.vmem [shape: f32[1,32], index: 2, kind: input, shape index: {}]
  %s3 = inlined_call_operand.vmem [shape: f32[32,32], index: 3, kind: input, shape index: {}]
  %s4 = inlined_call_operand.vmem [shape: f32[1,32], index: 4, kind: input, shape index: {}]
  %s5 = inlined_call_operand.vmem [shape: f32[32,32], index: 5, kind: input, shape index: {}]
  %s6 = inlined_call_operand.vmem [shape: f32[1,32], index: 6, kind: input, shape index: {}]
  %s7 = inlined_call_operand.hbm [shape: f32[32,32], index: 7, kind: input, shape index: {}]
  %s8 = inlined_call_operand.vmem [shape: f32[1,32], index: 8, kind: input, shape index: {}]
  %s9 = inlined_call_operand.vmem [shape: f32[1,32], index: 9, kind: input, shape index: {}]
  %s10 = inlined_call_operand.vmem [shape: f32[1,32], index: 10, kind: input, shape index: {}]
  %s11 = inlined_call_operand.hbm [shape: f32[32,64], index: 11, kind: input, shape index: {}]
  %s12 = inlined_call_operand.vmem [shape: f32[1,64], index: 12, kind: input, shape index: {}]
  %s13 = inlined_call_operand.vmem [shape: f32[64,32], index: 13, kind: input, shape index: {}]
  %s14 = inlined_call_operand.vmem [shape: f32[1,32], index: 14, kind: input, shape index: {}]
  %s15 = inlined_call_operand.hbm [shape: f32[2,8,32], index: 15, kind: output, shape index: {}]
  %s16 = sld [smem:[#allocation0]]
  $region109: #{tpu_custom_call.1} parent=0
    _
  %s18 = ssub.s32 1, %s16
  %s19 = scalar_select 0, %s18, %s16
  $region1: #{tpu_custom_call.1} parent=0
    #allocation5 [shape = 'u8[8192]{0}', space=vmem, size = 0x2000, scoped, tag = 'input window, operand 0']
    #allocation6 [shape = 's32[2]{0}', space=sflag, size = 0x8, scoped, tag = 'scoped memory for tpu_custom_call.1']
    #allocation7 [shape = 's32[2]{0}', space=sflag, size = 0x8, scoped, tag = 'scoped memory for tpu_custom_call.1']
    #allocation8 [shape = 'u8[16384]{0}', space=vmem, size = 0x4000, scoped, tag = 'input window, operand 7, single buffered']
    #allocation9 [shape = 's32[1]{0}', space=sflag, size = 0x4, scoped, tag = 'scoped memory for tpu_custom_call.1']
    #allocation10 [shape = 'u8[16384]{0}', space=vmem, size = 0x4000, scoped, tag = 'input window, operand 11, single buffered']
    #allocation11 [shape = 'u8[8192]{0}', space=vmem, size = 0x2000, scoped, tag = 'output window, operand 0']
    %20 = vsyncpa [#allocation6], 0
    %s21 = scalar_lea.sflag [#allocation6], 1
    %22 = vsyncpa %s21, 0
    %23 = vsyncpa [#allocation9], 0
    %24 = vsyncpa [#allocation7], 0
    %s25 = scalar_lea.sflag [#allocation7], 1
    %26 = vsyncpa %s25, 0
    loop: start=0, step=1, limit=4
    $region2: #{tpu_custom_call.1} parent=1 // loop_pre_header
      _
    $region3: #{tpu_custom_call.1} parent=1 // loop_header
      %s28 = sphi 0, %s32
      %p29 = scmp.ge.s32.totalorder %s28, 4
      %s35 = sphi 0, %s47
      %s36 = sphi 0, %s43
      %s37 = sphi 0, %s35
      %s38 = sphi 0, %s36
      %s39 = sphi 0, %s37
      %s40 = sphi 0, %s38
      %s50 = sphi 0, %s52
      %s53 = sphi 0, %s50
      %s54 = sphi 0, %s53
      %s70 = sphi 0, %s54
      %s74 = sphi 0, %s74
      %s76 = sphi 0, %s74
      %s77 = sphi 0, %s76
      %s91 = sphi 0, %s77
      %s95 = sphi 0, %s95
      %s97 = sphi 0, %s95
      %s98 = sphi 0, %s97
      %s112 = sphi 0, %s98
      %s116 = sphi 0, %s116
      %s118 = sphi 0, %s116
      %s119 = sphi 0, %s118
      %s133 = sphi 0, %s119
      %s137 = sphi 0, %s137
      %s139 = sphi 0, %s137
      %s140 = sphi 0, %s139
      %s154 = sphi 0, %s140
      %s158 = sphi 0, %s158
      %s160 = sphi 0, %s158
      %s161 = sphi 0, %s160
      %s175 = sphi 0, %s161
      %s179 = sphi 0, %s179
      %s181 = sphi 0, %s179
      %s182 = sphi 0, %s181
      %s196 = sphi 0, %s182
      %s200 = sphi 0, %s200
      %s202 = sphi 0, %s200
      %s203 = sphi 0, %s202
      %s217 = sphi 0, %s203
      %s221 = sphi 0, %s221
      %s223 = sphi 0, %s221
      %s224 = sphi 0, %s223
      %s238 = sphi 0, %s224
      %s242 = sphi 0, %s242
      %s244 = sphi 0, %s242
      %s245 = sphi 0, %s244
      %s259 = sphi 0, %s245
      %s263 = sphi 0, %s263
      %s265 = sphi 0, %s263
      %s266 = sphi 0, %s265
      %s280 = sphi 0, %s266
      %s284 = sphi 0, %s284
      %s286 = sphi 0, %s284
      %s287 = sphi 0, %s286
      %s301 = sphi 0, %s287
      %s305 = sphi 0, %s305
      %s307 = sphi 0, %s305
      %s308 = sphi 0, %s307
      %s322 = sphi 0, %s308
      %s326 = sphi 0, %s326
      %s328 = sphi 0, %s326
      %s329 = sphi 0, %s328
      %s343 = sphi 0, %s329
      %s347 = sphi 0, %s347
      %s349 = sphi 0, %s347
      %s350 = sphi 0, %s349
      %s364 = sphi 0, %s350
      %s372 = sphi 0, %s374
      %s375 = sphi 0, %s372
      %s376 = sphi 0, %s375
      %s392 = sphi 0, %s376
    $region4: #{tpu_custom_call.1} parent=1 // loop_header_branch
      %31 = sbr.rel (%p29) target = $region8
    $region5: #{tpu_custom_call.1} parent=1 // loop_body
      %s33 = ssub.s32 %s28, 1
      %s34 = ssub.s32 %s28, 2
      %s41 = sadd.s32 1, %s36
      %p42 = scmp.ge.s32.totalorder %s41, 1
      %s43 = scalar_select %p42, 0, %s41
      %s44 = sadd.s32 1, %s35
      %s45 = scalar_select %p42, %s44, %s35
      %p46 = scmp.ge.s32.totalorder %s45, 2
      %s47 = scalar_select %p46, 0, %s45
      %s48 = ssub.s32 %s35, %s47
      %p49 = scmp.eq.s32.totalorder %s48, 0
      %s51 = sadd.s32 %s50, 1
      %s52 = scalar_select %p49, %s50, %s51
      %p55 = pneg %p49
      %p56 = scmp.eq.s32.totalorder %s28, 1
      %p57 = por %p55, %p56
      %p58 = scmp.ne.s32.totalorder %s50, %s53
      %p59 = scmp.eq.s32.totalorder %s28, 0
      %p60 = por %p58, %p59
      %p61 = scmp.ne.s32.totalorder %s50, %s53
      %p62 = scmp.eq.s32.totalorder %s33, 1
      %p63 = por %p61, %p62
      %p64 = scmp.ne.s32.totalorder %s53, %s54
      %p65 = scmp.eq.s32.totalorder %s33, 0
      %p66 = por %p64, %p65
      %p67 = scmp.ne.s32.totalorder %s53, %s54
      %p68 = scmp.eq.s32.totalorder %s34, 1
      %p69 = por %p67, %p68
      %p71 = scmp.ne.s32.totalorder %s54, %s70
      %p72 = scmp.eq.s32.totalorder %s34, 0
      %p73 = por %p71, %p72
      %s75 = sadd.s32 %s74, 1
      %p78 = scmp.eq.s32.totalorder %s28, 1
      %p79 = scmp.ne.s32.totalorder %s74, %s76
      %p80 = scmp.eq.s32.totalorder %s28, 0
      %p81 = por %p79, %p80
      %p82 = scmp.ne.s32.totalorder %s74, %s76
      %p83 = scmp.eq.s32.totalorder %s33, 1
      %p84 = por %p82, %p83
      %p85 = scmp.ne.s32.totalorder %s76, %s77
      %p86 = scmp.eq.s32.totalorder %s33, 0
      %p87 = por %p85, %p86
      %p88 = scmp.ne.s32.totalorder %s76, %s77
      %p89 = scmp.eq.s32.totalorder %s34, 1
      %p90 = por %p88, %p89
      %p92 = scmp.ne.s32.totalorder %s77, %s91
      %p93 = scmp.eq.s32.totalorder %s34, 0
      %p94 = por %p92, %p93
      %s96 = sadd.s32 %s95, 1
      %p99 = scmp.eq.s32.totalorder %s28, 1
      %p100 = scmp.ne.s32.totalorder %s95, %s97
      %p101 = scmp.eq.s32.totalorder %s28, 0
      %p102 = por %p100, %p101
      %p103 = scmp.ne.s32.totalorder %s95, %s97
      %p104 = scmp.eq.s32.totalorder %s33, 1
      %p105 = por %p103, %p104
      %p106 = scmp.ne.s32.totalorder %s97, %s98
      %p107 = scmp.eq.s32.totalorder %s33, 0
      %p108 = por %p106, %p107
      %p109 = scmp.ne.s32.totalorder %s97, %s98
      %p110 = scmp.eq.s32.totalorder %s34, 1
      %p111 = por %p109, %p110
      %p113 = scmp.ne.s32.totalorder %s98, %s112
      %p114 = scmp.eq.s32.totalorder %s34, 0
      %p115 = por %p113, %p114
      %s117 = sadd.s32 %s116, 1
      %p120 = scmp.eq.s32.totalorder %s28, 1
      %p121 = scmp.ne.s32.totalorder %s116, %s118
      %p122 = scmp.eq.s32.totalorder %s28, 0
      %p123 = por %p121, %p122
      %p124 = scmp.ne.s32.totalorder %s116, %s118
      %p125 = scmp.eq.s32.totalorder %s33, 1
      %p126 = por %p124, %p125
      %p127 = scmp.ne.s32.totalorder %s118, %s119
      %p128 = scmp.eq.s32.totalorder %s33, 0
      %p129 = por %p127, %p128
      %p130 = scmp.ne.s32.totalorder %s118, %s119
      %p131 = scmp.eq.s32.totalorder %s34, 1
      %p132 = por %p130, %p131
      %p134 = scmp.ne.s32.totalorder %s119, %s133
      %p135 = scmp.eq.s32.totalorder %s34, 0
      %p136 = por %p134, %p135
      %s138 = sadd.s32 %s137, 1
      %p141 = scmp.eq.s32.totalorder %s28, 1
      %p142 = scmp.ne.s32.totalorder %s137, %s139
      %p143 = scmp.eq.s32.totalorder %s28, 0
      %p144 = por %p142, %p143
      %p145 = scmp.ne.s32.totalorder %s137, %s139
      %p146 = scmp.eq.s32.totalorder %s33, 1
      %p147 = por %p145, %p146
      %p148 = scmp.ne.s32.totalorder %s139, %s140
      %p149 = scmp.eq.s32.totalorder %s33, 0
      %p150 = por %p148, %p149
      %p151 = scmp.ne.s32.totalorder %s139, %s140
      %p152 = scmp.eq.s32.totalorder %s34, 1
      %p153 = por %p151, %p152
      %p155 = scmp.ne.s32.totalorder %s140, %s154
      %p156 = scmp.eq.s32.totalorder %s34, 0
      %p157 = por %p155, %p156
      %s159 = sadd.s32 %s158, 1
      %p162 = scmp.eq.s32.totalorder %s28, 1
      %p163 = scmp.ne.s32.totalorder %s158, %s160
      %p164 = scmp.eq.s32.totalorder %s28, 0
      %p165 = por %p163, %p164
      %p166 = scmp.ne.s32.totalorder %s158, %s160
      %p167 = scmp.eq.s32.totalorder %s33, 1
      %p168 = por %p166, %p167
      %p169 = scmp.ne.s32.totalorder %s160, %s161
      %p170 = scmp.eq.s32.totalorder %s33, 0
      %p171 = por %p169, %p170
      %p172 = scmp.ne.s32.totalorder %s160, %s161
      %p173 = scmp.eq.s32.totalorder %s34, 1
      %p174 = por %p172, %p173
      %p176 = scmp.ne.s32.totalorder %s161, %s175
      %p177 = scmp.eq.s32.totalorder %s34, 0
      %p178 = por %p176, %p177
      %s180 = sadd.s32 %s179, 1
      %p183 = scmp.eq.s32.totalorder %s28, 1
      %p184 = scmp.ne.s32.totalorder %s179, %s181
      %p185 = scmp.eq.s32.totalorder %s28, 0
      %p186 = por %p184, %p185
      %p187 = scmp.ne.s32.totalorder %s179, %s181
      %p188 = scmp.eq.s32.totalorder %s33, 1
      %p189 = por %p187, %p188
      %p190 = scmp.ne.s32.totalorder %s181, %s182
      %p191 = scmp.eq.s32.totalorder %s33, 0
      %p192 = por %p190, %p191
      %p193 = scmp.ne.s32.totalorder %s181, %s182
      %p194 = scmp.eq.s32.totalorder %s34, 1
      %p195 = por %p193, %p194
      %p197 = scmp.ne.s32.totalorder %s182, %s196
      %p198 = scmp.eq.s32.totalorder %s34, 0
      %p199 = por %p197, %p198
      %s201 = sadd.s32 %s200, 1
      %p204 = scmp.eq.s32.totalorder %s28, 1
      %p205 = scmp.ne.s32.totalorder %s200, %s202
      %p206 = scmp.eq.s32.totalorder %s28, 0
      %p207 = por %p205, %p206
      %p208 = scmp.ne.s32.totalorder %s200, %s202
      %p209 = scmp.eq.s32.totalorder %s33, 1
      %p210 = por %p208, %p209
      %p211 = scmp.ne.s32.totalorder %s202, %s203
      %p212 = scmp.eq.s32.totalorder %s33, 0
      %p213 = por %p211, %p212
      %p214 = scmp.ne.s32.totalorder %s202, %s203
      %p215 = scmp.eq.s32.totalorder %s34, 1
      %p216 = por %p214, %p215
      %p218 = scmp.ne.s32.totalorder %s203, %s217
      %p219 = scmp.eq.s32.totalorder %s34, 0
      %p220 = por %p218, %p219
      %s222 = sadd.s32 %s221, 1
      %p225 = scmp.eq.s32.totalorder %s28, 1
      %p226 = scmp.ne.s32.totalorder %s221, %s223
      %p227 = scmp.eq.s32.totalorder %s28, 0
      %p228 = por %p226, %p227
      %p229 = scmp.ne.s32.totalorder %s221, %s223
      %p230 = scmp.eq.s32.totalorder %s33, 1
      %p231 = por %p229, %p230
      %p232 = scmp.ne.s32.totalorder %s223, %s224
      %p233 = scmp.eq.s32.totalorder %s33, 0
      %p234 = por %p232, %p233
      %p235 = scmp.ne.s32.totalorder %s223, %s224
      %p236 = scmp.eq.s32.totalorder %s34, 1
      %p237 = por %p235, %p236
      %p239 = scmp.ne.s32.totalorder %s224, %s238
      %p240 = scmp.eq.s32.totalorder %s34, 0
      %p241 = por %p239, %p240
      %s243 = sadd.s32 %s242, 1
      %p246 = scmp.eq.s32.totalorder %s28, 1
      %p247 = scmp.ne.s32.totalorder %s242, %s244
      %p248 = scmp.eq.s32.totalorder %s28, 0
      %p249 = por %p247, %p248
      %p250 = scmp.ne.s32.totalorder %s242, %s244
      %p251 = scmp.eq.s32.totalorder %s33, 1
      %p252 = por %p250, %p251
      %p253 = scmp.ne.s32.totalorder %s244, %s245
      %p254 = scmp.eq.s32.totalorder %s33, 0
      %p255 = por %p253, %p254
      %p256 = scmp.ne.s32.totalorder %s244, %s245
      %p257 = scmp.eq.s32.totalorder %s34, 1
      %p258 = por %p256, %p257
      %p260 = scmp.ne.s32.totalorder %s245, %s259
      %p261 = scmp.eq.s32.totalorder %s34, 0
      %p262 = por %p260, %p261
      %s264 = sadd.s32 %s263, 1
      %p267 = scmp.eq.s32.totalorder %s28, 1
      %p268 = scmp.ne.s32.totalorder %s263, %s265
      %p269 = scmp.eq.s32.totalorder %s28, 0
      %p270 = por %p268, %p269
      %p271 = scmp.ne.s32.totalorder %s263, %s265
      %p272 = scmp.eq.s32.totalorder %s33, 1
      %p273 = por %p271, %p272
      %p274 = scmp.ne.s32.totalorder %s265, %s266
      %p275 = scmp.eq.s32.totalorder %s33, 0
      %p276 = por %p274, %p275
      %p277 = scmp.ne.s32.totalorder %s265, %s266
      %p278 = scmp.eq.s32.totalorder %s34, 1
      %p279 = por %p277, %p278
      %p281 = scmp.ne.s32.totalorder %s266, %s280
      %p282 = scmp.eq.s32.totalorder %s34, 0
      %p283 = por %p281, %p282
      %s285 = sadd.s32 %s284, 1
      %p288 = scmp.eq.s32.totalorder %s28, 1
      %p289 = scmp.ne.s32.totalorder %s284, %s286
      %p290 = scmp.eq.s32.totalorder %s28, 0
      %p291 = por %p289, %p290
      %p292 = scmp.ne.s32.totalorder %s284, %s286
      %p293 = scmp.eq.s32.totalorder %s33, 1
      %p294 = por %p292, %p293
      %p295 = scmp.ne.s32.totalorder %s286, %s287
      %p296 = scmp.eq.s32.totalorder %s33, 0
      %p297 = por %p295, %p296
      %p298 = scmp.ne.s32.totalorder %s286, %s287
      %p299 = scmp.eq.s32.totalorder %s34, 1
      %p300 = por %p298, %p299
      %p302 = scmp.ne.s32.totalorder %s287, %s301
      %p303 = scmp.eq.s32.totalorder %s34, 0
      %p304 = por %p302, %p303
      %s306 = sadd.s32 %s305, 1
      %p309 = scmp.eq.s32.totalorder %s28, 1
      %p310 = scmp.ne.s32.totalorder %s305, %s307
      %p311 = scmp.eq.s32.totalorder %s28, 0
      %p312 = por %p310, %p311
      %p313 = scmp.ne.s32.totalorder %s305, %s307
      %p314 = scmp.eq.s32.totalorder %s33, 1
      %p315 = por %p313, %p314
      %p316 = scmp.ne.s32.totalorder %s307, %s308
      %p317 = scmp.eq.s32.totalorder %s33, 0
      %p318 = por %p316, %p317
      %p319 = scmp.ne.s32.totalorder %s307, %s308
      %p320 = scmp.eq.s32.totalorder %s34, 1
      %p321 = por %p319, %p320
      %p323 = scmp.ne.s32.totalorder %s308, %s322
      %p324 = scmp.eq.s32.totalorder %s34, 0
      %p325 = por %p323, %p324
      %s327 = sadd.s32 %s326, 1
      %p330 = scmp.eq.s32.totalorder %s28, 1
      %p331 = scmp.ne.s32.totalorder %s326, %s328
      %p332 = scmp.eq.s32.totalorder %s28, 0
      %p333 = por %p331, %p332
      %p334 = scmp.ne.s32.totalorder %s326, %s328
      %p335 = scmp.eq.s32.totalorder %s33, 1
      %p336 = por %p334, %p335
      %p337 = scmp.ne.s32.totalorder %s328, %s329
      %p338 = scmp.eq.s32.totalorder %s33, 0
      %p339 = por %p337, %p338
      %p340 = scmp.ne.s32.totalorder %s328, %s329
      %p341 = scmp.eq.s32.totalorder %s34, 1
      %p342 = por %p340, %p341
      %p344 = scmp.ne.s32.totalorder %s329, %s343
      %p345 = scmp.eq.s32.totalorder %s34, 0
      %p346 = por %p344, %p345
      %s348 = sadd.s32 %s347, 1
      %p351 = scmp.eq.s32.totalorder %s28, 1
      %p352 = scmp.ne.s32.totalorder %s347, %s349
      %p353 = scmp.eq.s32.totalorder %s28, 0
      %p354 = por %p352, %p353
      %p355 = scmp.ne.s32.totalorder %s347, %s349
      %p356 = scmp.eq.s32.totalorder %s33, 1
      %p357 = por %p355, %p356
      %p358 = scmp.ne.s32.totalorder %s349, %s350
      %p359 = scmp.eq.s32.totalorder %s33, 0
      %p360 = por %p358, %p359
      %p361 = scmp.ne.s32.totalorder %s349, %s350
      %p362 = scmp.eq.s32.totalorder %s34, 1
      %p363 = por %p361, %p362
      %p365 = scmp.ne.s32.totalorder %s350, %s364
      %p366 = scmp.eq.s32.totalorder %s34, 0
      %p367 = por %p365, %p366
      %s368 = ssub.s32 %s35, %s47
      %s369 = ssub.s32 %s36, %s43
      %s370 = sor.u32 %s368, %s369
      %p371 = scmp.eq.s32.totalorder %s370, 0
      %s373 = sadd.s32 %s372, 1
      %s374 = scalar_select %p371, %s372, %s373
      %p377 = pneg %p371
      %p378 = scmp.eq.s32.totalorder %s28, 1
      %p379 = por %p377, %p378
      %p380 = scmp.ne.s32.totalorder %s372, %s375
      %p381 = scmp.eq.s32.totalorder %s28, 0
      %p382 = por %p380, %p381
      %p383 = scmp.ne.s32.totalorder %s372, %s375
      %p384 = scmp.eq.s32.totalorder %s33, 1
      %p385 = por %p383, %p384
      %p386 = scmp.ne.s32.totalorder %s375, %s376
      %p387 = scmp.eq.s32.totalorder %s33, 0
      %p388 = por %p386, %p387
      %p389 = scmp.ne.s32.totalorder %s375, %s376
      %p390 = scmp.eq.s32.totalorder %s34, 1
      %p391 = por %p389, %p390
      %p393 = scmp.ne.s32.totalorder %s376, %s392
      %p394 = scmp.eq.s32.totalorder %s34, 0
      %p395 = por %p393, %p394
      %p396 = scmp.le.s32.totalorder 1, %s28
      %p397 = scmp.lt.s32.totalorder %s28, 3
      %p398 = pnand %p396, %p397
      %p399 = pneg %p398
      // Predicated region
      $region9: #{tpu_custom_call.1} parent=5 // pred_check
        _
      $region10: #{tpu_custom_call.1} parent=5 // pred_check_branch
        %401 = sbr.rel (%p398) target = $region12
      $region11: #{tpu_custom_call.1} parent=5 // pred_region
        %s402 = ssub.s32 %s28, 1
        // Predicated region
        $region13: #{tpu_custom_call.1} parent=11 // pred_check
          %p403 = pneg %p87
        $region14: #{tpu_custom_call.1} parent=11 // pred_check_branch
          %405 = sbr.rel (%p403) target = $region16
        $region15: #{tpu_custom_call.1} parent=11 // pred_region
          _
        $region16: #{tpu_custom_call.1} parent=11 // pred_fallthru
          _
        // Predicated region
        $region17: #{tpu_custom_call.1} parent=11 // pred_check
          %p406 = pneg %p108
        $region18: #{tpu_custom_call.1} parent=11 // pred_check_branch
          %408 = sbr.rel (%p406) target = $region20
        $region19: #{tpu_custom_call.1} parent=11 // pred_region
          _
        $region20: #{tpu_custom_call.1} parent=11 // pred_fallthru
          _
        // Predicated region
        $region21: #{tpu_custom_call.1} parent=11 // pred_check
          %p409 = pneg %p129
        $region22: #{tpu_custom_call.1} parent=11 // pred_check_branch
          %411 = sbr.rel (%p409) target = $region24
        $region23: #{tpu_custom_call.1} parent=11 // pred_region
          _
        $region24: #{tpu_custom_call.1} parent=11 // pred_fallthru
          _
        // Predicated region
        $region25: #{tpu_custom_call.1} parent=11 // pred_check
          %p412 = pneg %p150
        $region26: #{tpu_custom_call.1} parent=11 // pred_check_branch
          %414 = sbr.rel (%p412) target = $region28
        $region27: #{tpu_custom_call.1} parent=11 // pred_region
          _
        $region28: #{tpu_custom_call.1} parent=11 // pred_fallthru
          _
        // Predicated region
        $region29: #{tpu_custom_call.1} parent=11 // pred_check
          %p415 = pneg %p171
        $region30: #{tpu_custom_call.1} parent=11 // pred_check_branch
          %417 = sbr.rel (%p415) target = $region32
        $region31: #{tpu_custom_call.1} parent=11 // pred_region
          _
        $region32: #{tpu_custom_call.1} parent=11 // pred_fallthru
          _
        // Predicated region
        $region33: #{tpu_custom_call.1} parent=11 // pred_check
          %p418 = pneg %p192
        $region34: #{tpu_custom_call.1} parent=11 // pred_check_branch
          %420 = sbr.rel (%p418) target = $region36
        $region35: #{tpu_custom_call.1} parent=11 // pred_region
          _
        $region36: #{tpu_custom_call.1} parent=11 // pred_fallthru
          _
        // Predicated region
        $region37: #{tpu_custom_call.1} parent=11 // pred_check
          %p421 = pneg %p213
        $region38: #{tpu_custom_call.1} parent=11 // pred_check_branch
          %423 = sbr.rel (%p421) target = $region40
        $region39: #{tpu_custom_call.1} parent=11 // pred_region
          %425 = vsyncadd [#allocation9], 0
          %s426 = sshll.u32 %s7, 4
          %s427 = int_to_ptr.hbm [resolvable:$true] %s426
          %s428 = sshll.u32 [#allocation8], 4
          %s429 = int_to_ptr.vmem [resolvable:$true] %s428
          %434 = dma.hbm_to_vmem [thread:$0]  %s427, 512, %s429, [#allocation9], 128, 128, 8
        $region40: #{tpu_custom_call.1} parent=11 // pred_fallthru
          _
        // Predicated region
        $region41: #{tpu_custom_call.1} parent=11 // pred_check
          %p435 = pneg %p234
        $region42: #{tpu_custom_call.1} parent=11 // pred_check_branch
          %437 = sbr.rel (%p435) target = $region44
        $region43: #{tpu_custom_call.1} parent=11 // pred_region
          _
        $region44: #{tpu_custom_call.1} parent=11 // pred_fallthru
          _
        // Predicated region
        $region45: #{tpu_custom_call.1} parent=11 // pred_check
          %p438 = pneg %p255
        $region46: #{tpu_custom_call.1} parent=11 // pred_check_branch
          %440 = sbr.rel (%p438) target = $region48
        $region47: #{tpu_custom_call.1} parent=11 // pred_region
          _
        $region48: #{tpu_custom_call.1} parent=11 // pred_fallthru
          _
        // Predicated region
        $region49: #{tpu_custom_call.1} parent=11 // pred_check
          %p441 = pneg %p276
        $region50: #{tpu_custom_call.1} parent=11 // pred_check_branch
          %443 = sbr.rel (%p441) target = $region52
        $region51: #{tpu_custom_call.1} parent=11 // pred_region
          _
        $region52: #{tpu_custom_call.1} parent=11 // pred_fallthru
          _
        // Predicated region
        $region53: #{tpu_custom_call.1} parent=11 // pred_check
          %p444 = pneg %p297
        $region54: #{tpu_custom_call.1} parent=11 // pred_check_branch
          %446 = sbr.rel (%p444) target = $region56
        $region55: #{tpu_custom_call.1} parent=11 // pred_region
          %448 = vsyncadd [#allocation9], 0
          %s449 = sshll.u32 %s11, 4
          %s450 = int_to_ptr.hbm [resolvable:$true] %s449
          %s451 = sshll.u32 [#allocation10], 4
          %s452 = int_to_ptr.vmem [resolvable:$true] %s451
          %457 = dma.hbm_to_vmem [thread:$0]  %s450, 512, %s452, [#allocation9], 128, 128, 8
        $region56: #{tpu_custom_call.1} parent=11 // pred_fallthru
          _
        // Predicated region
        $region57: #{tpu_custom_call.1} parent=11 // pred_check
          %p458 = pneg %p318
        $region58: #{tpu_custom_call.1} parent=11 // pred_check_branch
          %460 = sbr.rel (%p458) target = $region60
        $region59: #{tpu_custom_call.1} parent=11 // pred_region
          _
        $region60: #{tpu_custom_call.1} parent=11 // pred_fallthru
          _
        // Predicated region
        $region61: #{tpu_custom_call.1} parent=11 // pred_check
          %p461 = pneg %p339
        $region62: #{tpu_custom_call.1} parent=11 // pred_check_branch
          %463 = sbr.rel (%p461) target = $region64
        $region63: #{tpu_custom_call.1} parent=11 // pred_region
          _
        $region64: #{tpu_custom_call.1} parent=11 // pred_fallthru
          _
        // Predicated region
        $region65: #{tpu_custom_call.1} parent=11 // pred_check
          %p464 = pneg %p360
        $region66: #{tpu_custom_call.1} parent=11 // pred_check_branch
          %466 = sbr.rel (%p464) target = $region68
        $region67: #{tpu_custom_call.1} parent=11 // pred_region
          _
        $region68: #{tpu_custom_call.1} parent=11 // pred_fallthru
          _
      $region12: #{tpu_custom_call.1} parent=5 // pred_fallthru
        _
      %p467 = scmp.lt.s32.totalorder %s28, 2
      // Predicated region
      $region69: #{tpu_custom_call.1} parent=5 // pred_check
        %p468 = pneg %p467
      $region70: #{tpu_custom_call.1} parent=5 // pred_check_branch
        %470 = sbr.rel (%p468) target = $region72
      $region71: #{tpu_custom_call.1} parent=5 // pred_region
        // Predicated region
        $region73: #{tpu_custom_call.1} parent=71 // pred_check
          %p471 = pneg %p60
        $region74: #{tpu_custom_call.1} parent=71 // pred_check_branch
          %473 = sbr.rel (%p471) target = $region76
        $region75: #{tpu_custom_call.1} parent=71 // pred_region
          %s474 = sand.u32 %s50, 1
          %s475 = scalar_lea.sflag [#allocation6], %s474
          %s476 = sand.u32 %s50, 1
          %s477 = smul.addr %s476, 8
          %s478 = scalar_lea.vmem [#allocation5], %s477
          %480 = vsyncadd %s475, 0
          %s481 = smul.addr %s35, 8
          %s482 = scalar_lea.hbm %s0, %s481
          %s484 = sshll.u32 %s482, 4
          %s485 = int_to_ptr.hbm [resolvable:$true] %s484
          %s486 = sshll.u32 %s478, 4
          %s487 = int_to_ptr.vmem [resolvable:$true] %s486
          %489 = dma.hbm_to_vmem [thread:$0]  %s485, 128, %s487, %s475
        $region76: #{tpu_custom_call.1} parent=71 // pred_fallthru
          _
      $region72: #{tpu_custom_call.1} parent=5 // pred_fallthru
        _
      %p490 = scmp.le.s32.totalorder 1, %s28
      %p491 = scmp.lt.s32.totalorder %s28, 3
      %p492 = pnand %p490, %p491
      %p493 = pneg %p492
      // Predicated region
      $region77: #{tpu_custom_call.1} parent=5 // pred_check
        _
      $region78: #{tpu_custom_call.1} parent=5 // pred_check_branch
        %495 = sbr.rel (%p492) target = $region80
      $region79: #{tpu_custom_call.1} parent=5 // pred_region
        %s496 = ssub.s32 %s28, 1
        %s497 = sand.u32 %s53, 1
        %s498 = scalar_lea.sflag [#allocation6], %s497
        %s499 = sand.u32 %s53, 1
        %s500 = smul.addr %s499, 8
        %s501 = scalar_lea.vmem [#allocation5], %s500
        // Predicated region
        $region81: #{tpu_custom_call.1} parent=79 // pred_check
          %p502 = pneg %p66
        $region82: #{tpu_custom_call.1} parent=79 // pred_check_branch
          %504 = sbr.rel (%p502) target = $region84
        $region83: #{tpu_custom_call.1} parent=79 // pred_region
          %506 = dma.done %s498, 128
        $region84: #{tpu_custom_call.1} parent=79 // pred_fallthru
          _
        // Predicated region
        $region85: #{tpu_custom_call.1} parent=79 // pred_check
          %p507 = pneg %p213
        $region86: #{tpu_custom_call.1} parent=79 // pred_check_branch
          %509 = sbr.rel (%p507) target = $region88
        $region87: #{tpu_custom_call.1} parent=79 // pred_region
          %511 = dma.done [#allocation9], 512
        $region88: #{tpu_custom_call.1} parent=79 // pred_fallthru
          _
        // Predicated region
        $region89: #{tpu_custom_call.1} parent=79 // pred_check
          %p512 = pneg %p297
        $region90: #{tpu_custom_call.1} parent=79 // pred_check_branch
          %514 = sbr.rel (%p512) target = $region92
        $region91: #{tpu_custom_call.1} parent=79 // pred_region
          %516 = dma.done [#allocation9], 512
        $region92: #{tpu_custom_call.1} parent=79 // pred_fallthru
          _
        %s517 = sand.u32 %s53, 1
        %s518 = scalar_lea.sflag [#allocation6], %s517
        %s519 = sand.u32 %s53, 1
        %s520 = smul.addr %s519, 8
        %s521 = scalar_lea.vmem [#allocation5], %s520
        %p522 = pneg %p66
        %p523 = pneg %p63
        %p524 = pneg %p87
        %p525 = pneg %p84
        %p526 = pneg %p108
        %p527 = pneg %p105
        %p528 = pneg %p129
        %p529 = pneg %p126
        %p530 = pneg %p150
        %p531 = pneg %p147
        %p532 = pneg %p171
        %p533 = pneg %p168
        %p534 = pneg %p192
        %p535 = pneg %p189
        %p536 = pneg %p213
        %p537 = pneg %p210
        %p538 = pneg %p234
        %p539 = pneg %p231
        %p540 = pneg %p255
        %p541 = pneg %p252
        %p542 = pneg %p276
        %p543 = pneg %p273
        %p544 = pneg %p297
        %p545 = pneg %p294
        %p546 = pneg %p318
        %p547 = pneg %p315
        %p548 = pneg %p339
        %p549 = pneg %p336
        %p550 = pneg %p360
        %p551 = pneg %p357
        %p552 = pneg %p388
        %p553 = pneg %p385
        %s554 = sand.u32 %s375, 1
        %s555 = scalar_lea.sflag [#allocation7], %s554
        %s556 = sand.u32 %s375, 1
        %s557 = smul.addr %s556, 8
        %s558 = scalar_lea.vmem [#allocation11], %s557
        %p559 = scmp.eq.s32.totalorder %s38, 0
        // Predicated region
        $region93: #{tpu_custom_call.1} parent=79 // pred_check
          %p560 = pneg %p559
        $region94: #{tpu_custom_call.1} parent=79 // pred_check_branch
          %562 = sbr.rel (%p560) target = $region96
        $region95: #{tpu_custom_call.1} parent=79 // pred_region
          %v563 = vld [vmem:[%s501] sm:$0xff]
          %v564 = vld [vmem:[%s3] sm:$0xff]
          %v565 = vld [vmem:[%s3 + $0x8] sm:$0xff]
          %v566 = vld [vmem:[%s3 + $0x10] sm:$0xff]
          %v567 = vld [vmem:[%s3 + $0x18] sm:$0xff]
          %v568 = vld [vmem:[%s4] sm:$0x1]
          %v570 = vperm.slane %v568, 0
          %vm572 = vcmask 261120
          %v574 = vsel %vm572, %v563, 0
          %576 = vmatpush.msra.mxu0 0.0
          %577 = vmatpush.msra.mxu0 0.0
          %578 = vmatpush.msra.mxu0 0.0
          %579 = vmatpush.msra.mxu0 0.0
          %580 = vmatpush.msra.mxu0 0.0
          %581 = vmatpush.msra.mxu0 0.0
          %582 = vmatpush.msra.mxu0 0.0
          %583 = vmatpush.msra.mxu0 0.0
          %584 = vmatpush.msra.mxu0 0.0
          %585 = vmatpush.msra.mxu0 0.0
          %586 = vmatpush.msra.mxu0 0.0
          %587 = vmatpush.msra.mxu0 0.0
          %588 = vmatpush.msra.mxu0 %v567
          %589 = vmatpush.msra.mxu0 %v566
          %590 = vmatpush.msra.mxu0 %v565
          %591 = vmatpush.msra.mxu0 %v564
          %592 = vmatmul.f32.gmra.mxu0 %v574
          %v593 = vpop.f32.mrf.mxu0
          %v594 = vadd.f32 %v570, %v593
          %595 = vdwg.mxu0
          %596 = vst.msk [vmem:[#allocation2] sm:$0xff] %vm572, %v594
          %v597 = vld [vmem:[%s5] sm:$0xff]
          %v598 = vld [vmem:[%s5 + $0x8] sm:$0xff]
          %v599 = vld [vmem:[%s5 + $0x10] sm:$0xff]
          %v600 = vld [vmem:[%s5 + $0x18] sm:$0xff]
          %v601 = vld [vmem:[%s6] sm:$0x1]
          %v603 = vperm.slane %v601, 0
          %605 = vmatpush.msra.mxu0 0.0
          %606 = vmatpush.msra.mxu0 0.0
          %607 = vmatpush.msra.mxu0 0.0
          %608 = vmatpush.msra.mxu0 0.0
          %609 = vmatpush.msra.mxu0 0.0
          %610 = vmatpush.msra.mxu0 0.0
          %611 = vmatpush.msra.mxu0 0.0
          %612 = vmatpush.msra.mxu0 0.0
          %613 = vmatpush.msra.mxu0 0.0
          %614 = vmatpush.msra.mxu0 0.0
          %615 = vmatpush.msra.mxu0 0.0
          %616 = vmatpush.msra.mxu0 0.0
          %617 = vmatpush.msra.mxu0 %v600
          %618 = vmatpush.msra.mxu0 %v599
          %619 = vmatpush.msra.mxu0 %v598
          %620 = vmatpush.msra.mxu0 %v597
          %621 = vmatmul.f32.gmra.mxu0 %v574
          %v622 = vpop.f32.mrf.mxu0
          %v623 = vadd.f32 %v603, %v622
          %624 = vdwg.mxu0
          %625 = vst.msk [vmem:[#allocation3] sm:$0xff] %vm572, %v623
        $region96: #{tpu_custom_call.1} parent=79 // pred_fallthru
          _
        %s626 = smul.u32 %s38, 8
        %s627 = scalar_lea.vmem %s501, %s626 [#allocation5]
        %v628 = vld [vmem:[%s627] sm:$0xff]
        %v629 = vld [vmem:[%s1] sm:$0xff]
        %v630 = vld [vmem:[%s1 + $0x8] sm:$0xff]
        %v631 = vld [vmem:[%s1 + $0x10] sm:$0xff]
        %v632 = vld [vmem:[%s1 + $0x18] sm:$0xff]
        %v633 = vld [vmem:[%s2] sm:$0x1]
        %v635 = vperm.slane %v633, 0
        %vm637 = vcmask 261120
        %v639 = vsel %vm637, %v628, 0
        %641 = vmatpush.msra.mxu0 0.0
        %642 = vmatpush.msra.mxu0 0.0
        %643 = vmatpush.msra.mxu0 0.0
        %644 = vmatpush.msra.mxu0 0.0
        %645 = vmatpush.msra.mxu0 0.0
        %646 = vmatpush.msra.mxu0 0.0
        %647 = vmatpush.msra.mxu0 0.0
        %648 = vmatpush.msra.mxu0 0.0
        %649 = vmatpush.msra.mxu0 0.0
        %650 = vmatpush.msra.mxu0 0.0
        %651 = vmatpush.msra.mxu0 0.0
        %652 = vmatpush.msra.mxu0 0.0
        %653 = vmatpush.msra.mxu0 %v632
        %654 = vmatpush.msra.mxu0 %v631
        %655 = vmatpush.msra.mxu0 %v630
        %656 = vmatpush.msra.mxu0 %v629
        %657 = vmatmul.f32.gmra.mxu0 %v639
        %v658 = vpop.f32.mrf.mxu0
        %v659 = vadd.f32 %v635, %v658
        %660 = vdwg.mxu0
        %v661 = vld [vmem:[#allocation2] sm:$0xff]
        %v662 = vld [vmem:[#allocation3] sm:$0xff]
        %vm663 = vcmask 64512
        %v665 = vsel %vm663, %v659, 0
        %v668 = vsel %vm663, %v661, 0
        %670 = vmatpush.xpose.msra.mxu0 0.0
        %671 = vmatpush.xpose.msra.mxu0 0.0
        %672 = vmatpush.xpose.msra.mxu0 0.0
        %673 = vmatpush.xpose.msra.mxu0 0.0
        %674 = vmatpush.xpose.msra.mxu0 0.0
        %675 = vmatpush.xpose.msra.mxu0 0.0
        %676 = vmatpush.xpose.msra.mxu0 0.0
        %677 = vmatpush.xpose.msra.mxu0 0.0
        %678 = vmatpush.xpose.msra.mxu0 0.0
        %679 = vmatpush.xpose.msra.mxu0 0.0
        %680 = vmatpush.xpose.msra.mxu0 0.0
        %681 = vmatpush.xpose.msra.mxu0 0.0
        %682 = vmatpush.xpose.msra.mxu0 0.0
        %683 = vmatpush.xpose.msra.mxu0 0.0
        %684 = vmatpush.xpose.msra.mxu0 0.0
        %685 = vmatpush.xpose.msra.mxu0 %v668
        %686 = vmatmul.f32.gmra.mxu0 %v665
        %v687 = vpop.f32.mrf.mxu0
        %v688 = vadd.f32 0.0, %v687
        %689 = vdwg.mxu0
        %v690 = vsel %vm663, %v688, -inf
        %691 = vmax.xlane.f32.xlu0 %v690
        %v692 = vpop.xlane.xlu0 %691
        %v693 = vsub.f32 %v688, %v692
        %v694 = vmul.f32 %v693, 1.442695
        %v695 = vpow.pop %v694
        %v696 = vsel %vm663, %v695, 0.0
        %697 = vadd.xlane.f32.xlu0 %v696
        %v698 = vpop.xlane.xlu0 %697
        %v700 = vsel %vm663, %v695, 0
        %702 = vmatpush.msra.mxu0 0.0
        %703 = vmatpush.msra.mxu0 0.0
        %704 = vmatpush.msra.mxu0 0.0
        %705 = vmatpush.msra.mxu0 0.0
        %706 = vmatpush.msra.mxu0 0.0
        %707 = vmatpush.msra.mxu0 0.0
        %708 = vmatpush.msra.mxu0 0.0
        %709 = vmatpush.msra.mxu0 0.0
        %710 = vmatpush.msra.mxu0 0.0
        %711 = vmatpush.msra.mxu0 0.0
        %712 = vmatpush.msra.mxu0 0.0
        %713 = vmatpush.msra.mxu0 0.0
        %714 = vmatpush.msra.mxu0 0.0
        %715 = vmatpush.msra.mxu0 0.0
        %716 = vmatpush.msra.mxu0 0.0
        %717 = vmatpush.msra.mxu0 %v662
        %718 = vmatmul.f32.gmra.mxu0 %v700
        %v719 = vpop.f32.mrf.mxu0
        %v720 = vadd.f32 0.0, %v719
        %721 = vdwg.mxu0
        %v722 = vrcp.pop %v698
        %v723 = vmul.f32 %v720, %v722
        %724 = vst.msk [vmem:[#allocation4] sm:$0xff] %vm663, %v723
        %v725 = vld [vmem:[#allocation2] sm:$0xff]
        %v726 = vld [vmem:[#allocation3] sm:$0xff]
        %727 = vrot.lane.b32.xlu0 %v659, 120
        %v728 = vpop.permute.xlu0 %727
        %730 = vrot.lane.b32.xlu0 %v725, 120
        %v731 = vpop.permute.xlu0 %730
        %v732 = vsel %vm663, %v728, 0
        %v734 = vsel %vm663, %v731, 0
        %736 = vmatpush.xpose.msra.mxu0 0.0
        %737 = vmatpush.xpose.msra.mxu0 0.0
        %738 = vmatpush.xpose.msra.mxu0 0.0
        %739 = vmatpush.xpose.msra.mxu0 0.0
        %740 = vmatpush.xpose.msra.mxu0 0.0
        %741 = vmatpush.xpose.msra.mxu0 0.0
        %742 = vmatpush.xpose.msra.mxu0 0.0
        %743 = vmatpush.xpose.msra.mxu0 0.0
        %744 = vmatpush.xpose.msra.mxu0 0.0
        %745 = vmatpush.xpose.msra.mxu0 0.0
        %746 = vmatpush.xpose.msra.mxu0 0.0
        %747 = vmatpush.xpose.msra.mxu0 0.0
        %748 = vmatpush.xpose.msra.mxu0 0.0
        %749 = vmatpush.xpose.msra.mxu0 0.0
        %750 = vmatpush.xpose.msra.mxu0 0.0
        %751 = vmatpush.xpose.msra.mxu0 %v734
        %752 = vmatmul.f32.gmra.mxu0 %v732
        %v753 = vpop.f32.mrf.mxu0
        %v754 = vadd.f32 0.0, %v753
        %755 = vdwg.mxu0
        %v756 = vsel %vm663, %v754, -inf
        %757 = vmax.xlane.f32.xlu0 %v756
        %v758 = vpop.xlane.xlu0 %757
        %v759 = vsub.f32 %v754, %v758
        %v760 = vmul.f32 %v759, 1.442695
        %v761 = vpow.pop %v760
        %v762 = vsel %vm663, %v761, 0.0
        %763 = vadd.xlane.f32.xlu0 %v762
        %v764 = vpop.xlane.xlu0 %763
        %766 = vrot.lane.b32.xlu0 %v726, 120
        %v767 = vpop.permute.xlu0 %766
        %v770 = vsel %vm663, %v761, 0
        %772 = vmatpush.msra.mxu0 0.0
        %773 = vmatpush.msra.mxu0 0.0
        %774 = vmatpush.msra.mxu0 0.0
        %775 = vmatpush.msra.mxu0 0.0
        %776 = vmatpush.msra.mxu0 0.0
        %777 = vmatpush.msra.mxu0 0.0
        %778 = vmatpush.msra.mxu0 0.0
        %779 = vmatpush.msra.mxu0 0.0
        %780 = vmatpush.msra.mxu0 0.0
        %781 = vmatpush.msra.mxu0 0.0
        %782 = vmatpush.msra.mxu0 0.0
        %783 = vmatpush.msra.mxu0 0.0
        %784 = vmatpush.msra.mxu0 0.0
        %785 = vmatpush.msra.mxu0 0.0
        %786 = vmatpush.msra.mxu0 0.0
        %787 = vmatpush.msra.mxu0 %v767
        %788 = vmatmul.f32.gmra.mxu0 %v770
        %v789 = vpop.f32.mrf.mxu0
        %v790 = vadd.f32 0.0, %v789
        %791 = vdwg.mxu0
        %v792 = vrcp.pop %v764
        %v793 = vmul.f32 %v790, %v792
        %795 = vrot.lane.b32.xlu0 %v793, 8
        %v796 = vpop.permute.xlu0 %795
        %vm798 = vcmask 130112
        %799 = vst.msk [vmem:[#allocation4] sm:$0xff] %vm798, %v796
        %v800 = vld [vmem:[#allocation2] sm:$0xff]
        %v801 = vld [vmem:[#allocation3] sm:$0xff]
        %802 = vrot.lane.b32.xlu0 %v659, 112
        %v803 = vpop.permute.xlu0 %802
        %805 = vrot.lane.b32.xlu0 %v800, 112
        %v806 = vpop.permute.xlu0 %805
        %v807 = vsel %vm663, %v803, 0
        %v809 = vsel %vm663, %v806, 0
        %811 = vmatpush.xpose.msra.mxu0 0.0
        %812 = vmatpush.xpose.msra.mxu0 0.0
        %813 = vmatpush.xpose.msra.mxu0 0.0
        %814 = vmatpush.xpose.msra.mxu0 0.0
        %815 = vmatpush.xpose.msra.mxu0 0.0
        %816 = vmatpush.xpose.msra.mxu0 0.0
        %817 = vmatpush.xpose.msra.mxu0 0.0
        %818 = vmatpush.xpose.msra.mxu0 0.0
        %819 = vmatpush.xpose.msra.mxu0 0.0
        %820 = vmatpush.xpose.msra.mxu0 0.0
        %821 = vmatpush.xpose.msra.mxu0 0.0
        %822 = vmatpush.xpose.msra.mxu0 0.0
        %823 = vmatpush.xpose.msra.mxu0 0.0
        %824 = vmatpush.xpose.msra.mxu0 0.0
        %825 = vmatpush.xpose.msra.mxu0 0.0
        %826 = vmatpush.xpose.msra.mxu0 %v809
        %827 = vmatmul.f32.gmra.mxu0 %v807
        %v828 = vpop.f32.mrf.mxu0
        %v829 = vadd.f32 0.0, %v828
        %830 = vdwg.mxu0
        %v831 = vsel %vm663, %v829, -inf
        %832 = vmax.xlane.f32.xlu0 %v831
        %v833 = vpop.xlane.xlu0 %832
        %v834 = vsub.f32 %v829, %v833
        %v835 = vmul.f32 %v834, 1.442695
        %v836 = vpow.pop %v835
        %v837 = vsel %vm663, %v836, 0.0
        %838 = vadd.xlane.f32.xlu0 %v837
        %v839 = vpop.xlane.xlu0 %838
        %841 = vrot.lane.b32.xlu0 %v801, 112
        %v842 = vpop.permute.xlu0 %841
        %v845 = vsel %vm663, %v836, 0
        %847 = vmatpush.msra.mxu0 0.0
        %848 = vmatpush.msra.mxu0 0.0
        %849 = vmatpush.msra.mxu0 0.0
        %850 = vmatpush.msra.mxu0 0.0
        %851 = vmatpush.msra.mxu0 0.0
        %852 = vmatpush.msra.mxu0 0.0
        %853 = vmatpush.msra.mxu0 0.0
        %854 = vmatpush.msra.mxu0 0.0
        %855 = vmatpush.msra.mxu0 0.0
        %856 = vmatpush.msra.mxu0 0.0
        %857 = vmatpush.msra.mxu0 0.0
        %858 = vmatpush.msra.mxu0 0.0
        %859 = vmatpush.msra.mxu0 0.0
        %860 = vmatpush.msra.mxu0 0.0
        %861 = vmatpush.msra.mxu0 0.0
        %862 = vmatpush.msra.mxu0 %v842
        %863 = vmatmul.f32.gmra.mxu0 %v845
        %v864 = vpop.f32.mrf.mxu0
        %v865 = vadd.f32 0.0, %v864
        %866 = vdwg.mxu0
        %v867 = vrcp.pop %v839
        %v868 = vmul.f32 %v865, %v867
        %870 = vrot.lane.b32.xlu0 %v868, 16
        %v871 = vpop.permute.xlu0 %870
        %vm873 = vcmask 195712
        %874 = vst.msk [vmem:[#allocation4] sm:$0xff] %vm873, %v871
        %v875 = vld [vmem:[#allocation2] sm:$0xff]
        %v876 = vld [vmem:[#allocation3] sm:$0xff]
        %877 = vrot.lane.b32.xlu0 %v659, 104
        %v878 = vpop.permute.xlu0 %877
        %880 = vrot.lane.b32.xlu0 %v875, 104
        %v881 = vpop.permute.xlu0 %880
        %v882 = vsel %vm663, %v878, 0
        %v884 = vsel %vm663, %v881, 0
        %886 = vmatpush.xpose.msra.mxu0 0.0
        %887 = vmatpush.xpose.msra.mxu0 0.0
        %888 = vmatpush.xpose.msra.mxu0 0.0
        %889 = vmatpush.xpose.msra.mxu0 0.0
        %890 = vmatpush.xpose.msra.mxu0 0.0
        %891 = vmatpush.xpose.msra.mxu0 0.0
        %892 = vmatpush.xpose.msra.mxu0 0.0
        %893 = vmatpush.xpose.msra.mxu0 0.0
        %894 = vmatpush.xpose.msra.mxu0 0.0
        %895 = vmatpush.xpose.msra.mxu0 0.0
        %896 = vmatpush.xpose.msra.mxu0 0.0
        %897 = vmatpush.xpose.msra.mxu0 0.0
        %898 = vmatpush.xpose.msra.mxu0 0.0
        %899 = vmatpush.xpose.msra.mxu0 0.0
        %900 = vmatpush.xpose.msra.mxu0 0.0
        %901 = vmatpush.xpose.msra.mxu0 %v884
        %902 = vmatmul.f32.gmra.mxu0 %v882
        %v903 = vpop.f32.mrf.mxu0
        %v904 = vadd.f32 0.0, %v903
        %905 = vdwg.mxu0
        %v906 = vsel %vm663, %v904, -inf
        %907 = vmax.xlane.f32.xlu0 %v906
        %v908 = vpop.xlane.xlu0 %907
        %v909 = vsub.f32 %v904, %v908
        %v910 = vmul.f32 %v909, 1.442695
        %v911 = vpow.pop %v910
        %v912 = vsel %vm663, %v911, 0.0
        %913 = vadd.xlane.f32.xlu0 %v912
        %v914 = vpop.xlane.xlu0 %913
        %916 = vrot.lane.b32.xlu0 %v876, 104
        %v917 = vpop.permute.xlu0 %916
        %v920 = vsel %vm663, %v911, 0
        %922 = vmatpush.msra.mxu0 0.0
        %923 = vmatpush.msra.mxu0 0.0
        %924 = vmatpush.msra.mxu0 0.0
        %925 = vmatpush.msra.mxu0 0.0
        %926 = vmatpush.msra.mxu0 0.0
        %927 = vmatpush.msra.mxu0 0.0
        %928 = vmatpush.msra.mxu0 0.0
        %929 = vmatpush.msra.mxu0 0.0
        %930 = vmatpush.msra.mxu0 0.0
        %931 = vmatpush.msra.mxu0 0.0
        %932 = vmatpush.msra.mxu0 0.0
        %933 = vmatpush.msra.mxu0 0.0
        %934 = vmatpush.msra.mxu0 0.0
        %935 = vmatpush.msra.mxu0 0.0
        %936 = vmatpush.msra.mxu0 0.0
        %937 = vmatpush.msra.mxu0 %v917
        %938 = vmatmul.f32.gmra.mxu0 %v920
        %v939 = vpop.f32.mrf.mxu0
        %v940 = vadd.f32 0.0, %v939
        %941 = vdwg.mxu0
        %v942 = vrcp.pop %v914
        %v943 = vmul.f32 %v940, %v942
        %945 = vrot.lane.b32.xlu0 %v943, 24
        %v946 = vpop.permute.xlu0 %945
        %vm948 = vcmask 261312
        %949 = vst.msk [vmem:[#allocation4] sm:$0xff] %vm948, %v946
        %v950 = vld [vmem:[#allocation4] sm:$0xff]
        %v951 = vld [vmem:[#allocation8] sm:$0xff]
        %v952 = vld [vmem:[#allocation8 + $0x8] sm:$0xff]
        %v953 = vld [vmem:[#allocation8 + $0x10] sm:$0xff]
        %v954 = vld [vmem:[#allocation8 + $0x18] sm:$0xff]
        %v955 = vld [vmem:[%s8] sm:$0x1]
        %v957 = vperm.slane %v955, 0
        %v960 = vsel %vm637, %v950, 0
        %962 = vmatpush.msra.mxu0 0.0
        %963 = vmatpush.msra.mxu0 0.0
        %964 = vmatpush.msra.mxu0 0.0
        %965 = vmatpush.msra.mxu0 0.0
        %966 = vmatpush.msra.mxu0 0.0
        %967 = vmatpush.msra.mxu0 0.0
        %968 = vmatpush.msra.mxu0 0.0
        %969 = vmatpush.msra.mxu0 0.0
        %970 = vmatpush.msra.mxu0 0.0
        %971 = vmatpush.msra.mxu0 0.0
        %972 = vmatpush.msra.mxu0 0.0
        %973 = vmatpush.msra.mxu0 0.0
        %974 = vmatpush.msra.mxu0 %v954
        %975 = vmatpush.msra.mxu0 %v953
        %976 = vmatpush.msra.mxu0 %v952
        %977 = vmatpush.msra.mxu0 %v951
        %978 = vmatmul.f32.gmra.mxu0 %v960
        %v979 = vpop.f32.mrf.mxu0
        %v980 = vadd.f32 %v957, %v979
        %981 = vdwg.mxu0
        %v982 = vadd.f32 %v628, %v980
        %v983 = vld [vmem:[%s9] sm:$0x1]
        %v984 = vmul.f32 %v982, %v982
        %v985 = vsel %vm637, %v984, 0.0
        %986 = vadd.xlane.f32.xlu0 %v985
        %v987 = vpop.xlane.xlu0 %986
        %v988 = vrcp.pop 32.0
        %v989 = vmul.f32 32.0, %v988
        %v990 = vsub.f32 1.0, %v989
        %v991 = vmul.f32 %v988, %v990
        %v992 = vadd.f32 %v988, %v991
        %vm993 = vweird.f32 %v988
        %v994 = vsel %vm993, %v988, %v992
        %v995 = vmul.f32 %v987, %v994
        %v996 = vadd.f32 %v995, 1.1920929e-07
        %v997 = vrsqrt.pop %v996
        %v998 = vmul.f32 %v997, %v996
        %v999 = vmul.f32 %v998, %v997
        %v1000 = vmul.f32 0.5, %v999
        %v1001 = vsub.f32 1.5, %v1000
        %v1002 = vmul.f32 %v997, %v1001
        %vm1003 = vweird.f32 %v996
        %vm1004 = vweird.f32 %v997
        %vm1005 = vmor %vm1003, %vm1004
        %v1006 = vsel %vm1005, %v997, %v1002
        %v1007 = vmul.f32 %v982, %v1006
        %v1009 = vperm.slane %v983, 0
        %v1011 = vmul.f32 %v1007, %v1009
        %v1012 = vld [vmem:[#allocation10] sm:$0xff]
        %v1013 = vld [vmem:[#allocation10 + $0x8] sm:$0xff]
        %v1014 = vld [vmem:[#allocation10 + $0x10] sm:$0xff]
        %v1015 = vld [vmem:[#allocation10 + $0x18] sm:$0xff]
        %v1016 = vld [vmem:[%s12] sm:$0x1]
        %v1018 = vperm.slane %v1016, 0
        %v1021 = vsel %vm637, %v1011, 0
        %1023 = vmatpush.msra.mxu0 0.0
        %1024 = vmatpush.msra.mxu0 0.0
        %1025 = vmatpush.msra.mxu0 0.0
        %1026 = vmatpush.msra.mxu0 0.0
        %1027 = vmatpush.msra.mxu0 0.0
        %1028 = vmatpush.msra.mxu0 0.0
        %1029 = vmatpush.msra.mxu0 0.0
        %1030 = vmatpush.msra.mxu0 0.0
        %1031 = vmatpush.msra.mxu0 0.0
        %1032 = vmatpush.msra.mxu0 0.0
        %1033 = vmatpush.msra.mxu0 0.0
        %1034 = vmatpush.msra.mxu0 0.0
        %1035 = vmatpush.msra.mxu0 %v1015
        %1036 = vmatpush.msra.mxu0 %v1014
        %1037 = vmatpush.msra.mxu0 %v1013
        %1038 = vmatpush.msra.mxu0 %v1012
        %1039 = vmatmul.f32.gmra.mxu0 %v1021
        %v1040 = vpop.f32.mrf.mxu0
        %v1041 = vadd.f32 %v1018, %v1040
        %1042 = vdwg.mxu0
        %v1043 = vxor.u32 %v1041, 2147483648
        %v1044 = vmul.f32 %v1043, 1.442695
        %v1045 = vpow.pop %v1044
        %v1046 = vadd.f32 %v1045, 1.0
        %v1047 = vrcp.pop %v1046
        %v1048 = vmul.f32 %v1046, %v1047
        %v1049 = vsub.f32 1.0, %v1048
        %v1050 = vmul.f32 %v1047, %v1049
        %v1051 = vadd.f32 %v1047, %v1050
        %vm1052 = vweird.f32 %v1046
        %vm1053 = vweird.f32 %v1047
        %vm1054 = vmor %vm1052, %vm1053
        %v1055 = vsel %vm1054, %v1047, %v1051
        %v1056 = vand.u32 2147483647, %v1046
        %vm1057 = vcmp.eq.f32.partialorder %v1056, 8.507059e+37
        %v1058 = vand.u32 %v1046, 2147483648
        %v1059 = vor.u32 1.1754944e-38, %v1058
        %v1060 = vsel %vm1057, %v1059, %v1055
        %v1061 = vmul.f32 1.0, %v1060
        %v1062 = vmul.f32 %v1041, %v1061
        %v1063 = vld [vmem:[%s13] sm:$0xff]
        %v1064 = vld [vmem:[%s13 + $0x8] sm:$0xff]
        %v1065 = vld [vmem:[%s13 + $0x10] sm:$0xff]
        %v1066 = vld [vmem:[%s13 + $0x18] sm:$0xff]
        %v1067 = vld [vmem:[%s13 + $0x20] sm:$0xff]
        %v1068 = vld [vmem:[%s13 + $0x28] sm:$0xff]
        %v1069 = vld [vmem:[%s13 + $0x30] sm:$0xff]
        %v1070 = vld [vmem:[%s13 + $0x38] sm:$0xff]
        %v1071 = vld [vmem:[%s14] sm:$0x1]
        %v1073 = vperm.slane %v1071, 0
        %vm1075 = vcmask 523264
        %v1077 = vsel %vm1075, %v1062, 0
        %1079 = vmatpush.msra.mxu0 0.0
        %1080 = vmatpush.msra.mxu0 0.0
        %1081 = vmatpush.msra.mxu0 0.0
        %1082 = vmatpush.msra.mxu0 0.0
        %1083 = vmatpush.msra.mxu0 0.0
        %1084 = vmatpush.msra.mxu0 0.0
        %1085 = vmatpush.msra.mxu0 0.0
        %1086 = vmatpush.msra.mxu0 0.0
        %1087 = vmatpush.msra.mxu0 %v1070
        %1088 = vmatpush.msra.mxu0 %v1069
        %1089 = vmatpush.msra.mxu0 %v1068
        %1090 = vmatpush.msra.mxu0 %v1067
        %1091 = vmatpush.msra.mxu0 %v1066
        %1092 = vmatpush.msra.mxu0 %v1065
        %1093 = vmatpush.msra.mxu0 %v1064
        %1094 = vmatpush.msra.mxu0 %v1063
        %1095 = vmatmul.f32.gmra.mxu0 %v1077
        %v1096 = vpop.f32.mrf.mxu0
        %v1097 = vadd.f32 %v1073, %v1096
        %1098 = vdwg.mxu0
        %v1099 = vadd.f32 %v1011, %v1097
        %v1100 = vld [vmem:[%s10] sm:$0x1]
        %v1101 = vmul.f32 %v1099, %v1099
        %v1102 = vsel %vm637, %v1101, 0.0
        %1103 = vadd.xlane.f32.xlu0 %v1102
        %v1104 = vpop.xlane.xlu0 %1103
        %v1105 = vmul.f32 %v1104, %v994
        %v1106 = vadd.f32 %v1105, 1.1920929e-07
        %v1107 = vrsqrt.pop %v1106
        %v1108 = vmul.f32 %v1107, %v1106
        %v1109 = vmul.f32 %v1108, %v1107
        %v1110 = vmul.f32 0.5, %v1109
        %v1111 = vsub.f32 1.5, %v1110
        %v1112 = vmul.f32 %v1107, %v1111
        %vm1113 = vweird.f32 %v1106
        %vm1114 = vweird.f32 %v1107
        %vm1115 = vmor %vm1113, %vm1114
        %v1116 = vsel %vm1115, %v1107, %v1112
        %v1117 = vmul.f32 %v1099, %v1116
        %v1119 = vperm.slane %v1100, 0
        %v1121 = vmul.f32 %v1117, %v1119
        %1122 = vst.msk [vmem:[%s558] sm:$0xff] %vm637, %v1121
        %s1123 = sand.u32 %s375, 1
        %s1124 = scalar_lea.sflag [#allocation7], %s1123
        %s1125 = sand.u32 %s375, 1
        %s1126 = smul.addr %s1125, 8
        %s1127 = scalar_lea.vmem [#allocation11], %s1126
        // Predicated region
        $region97: #{tpu_custom_call.1} parent=79 // pred_check
          %p1128 = pneg %p385
        $region98: #{tpu_custom_call.1} parent=79 // pred_check_branch
          %1130 = sbr.rel (%p1128) target = $region100
        $region99: #{tpu_custom_call.1} parent=79 // pred_region
          %1132 = vsyncadd %s1124, 0
          %s1133 = sadd.s32 %s38, %s37
          %s1134 = smul.addr %s1133, 8
          %s1135 = scalar_lea.hbm %s15, %s1134
          %s1137 = sshll.u32 %s1127, 4
          %s1138 = int_to_ptr.vmem [resolvable:$true] %s1137
          %s1139 = sshll.u32 %s1135, 4
          %s1140 = int_to_ptr.hbm [resolvable:$true] %s1139
          %1142 = dma.vmem_to_hbm [thread:$0]  %s1138, 128, %s1140, %s1124
        $region100: #{tpu_custom_call.1} parent=79 // pred_fallthru
          _
      $region80: #{tpu_custom_call.1} parent=5 // pred_fallthru
        _
      %p1143 = scmp.le.s32.totalorder 2, %s28
      // Predicated region
      $region101: #{tpu_custom_call.1} parent=5 // pred_check
        %p1144 = pneg %p1143
      $region102: #{tpu_custom_call.1} parent=5 // pred_check_branch
        %1146 = sbr.rel (%p1144) target = $region104
      $region103: #{tpu_custom_call.1} parent=5 // pred_region
        %s1147 = ssub.s32 %s28, 2
        // Predicated region
        $region105: #{tpu_custom_call.1} parent=103 // pred_check
          %p1148 = pneg %p391
        $region106: #{tpu_custom_call.1} parent=103 // pred_check_branch
          %1150 = sbr.rel (%p1148) target = $region108
        $region107: #{tpu_custom_call.1} parent=103 // pred_region
          %s1151 = sand.u32 %s376, 1
          %s1152 = scalar_lea.sflag [#allocation7], %s1151
          %s1153 = sand.u32 %s376, 1
          %s1154 = smul.addr %s1153, 8
          %s1155 = scalar_lea.vmem [#allocation11], %s1154
          %1157 = dma.done %s1152, 128
        $region108: #{tpu_custom_call.1} parent=103 // pred_fallthru
          _
      $region104: #{tpu_custom_call.1} parent=5 // pred_fallthru
        _
    $region6: #{tpu_custom_call.1} parent=1 // loop_footer
      %s32 = sadd.s32 1, %s28
    $region7: #{tpu_custom_call.1} parent=1 // loop_footer_branch
      %27 = sbr.rel target = $region3
    $region8: #{tpu_custom_call.1} parent=1 // loop_exit
      _
    %1158 = vsyncpa [#allocation6], 1
    %s1159 = scalar_lea.sflag [#allocation6], 1
    %1160 = vsyncpa %s1159, 1
    %1161 = vsyncpa [#allocation9], 1
    %1162 = vsyncpa [#allocation7], 1
    %s1163 = scalar_lea.sflag [#allocation7], 1
    %1164 = vsyncpa %s1163, 1

</llo_original>
